<compile_context>
chip_gen: v7x
topology: tpu7x:2x2x1
jax: 0.10.0
libtpu: 0.0.40
codegen_flags: <defaults>
</compile_context>

<pallas_src>
import functools
import jax
import jax.numpy as jnp
from jax.experimental import pallas as pl
from jax.experimental.pallas import tpu as pltpu


_INV_SQRT2 = 0.7071067811865476
_GAMMA_PAD = 128   # lane-aligned tail carrying the 2 gamma columns


def _round_up(x, m):
    return (x + m - 1) // m * m


def _gelu_exact(x):
    # exact (erf-based) GELU, matching torch.nn.GELU() default
    return 0.5 * x * (1.0 + jax.lax.erf(x * _INV_SQRT2))


def _layernorm(x, g, b, eps=1e-5):
    mu = jnp.mean(x, axis=-1, keepdims=True)
    var = jnp.mean((x - mu) ** 2, axis=-1, keepdims=True)
    return (x - mu) * jax.lax.rsqrt(var + eps) * g + b


def _softmax_last(x):
    m = jnp.max(x, axis=-1, keepdims=True)
    e = jnp.exp(x - m)
    # divide -> EUP reciprocal + VPU multiply (frees VALU slots)
    return e * pl.reciprocal(jnp.sum(e, axis=-1, keepdims=True), approx=True)


def _pick_bt(B, S, target_rows=256):
    """Largest divisor of B with bt*S <= target_rows, keeping >=2 grid steps when B>=2."""
    best = 1
    for bt in range(1, B + 1):
        if B % bt != 0:
            continue
        if bt * S > max(target_rows, S):
            continue
        if B >= 2 and bt != 1 and (B // bt) < 2:
            continue          # keep both v7x TensorCores busy
        best = bt
    return best


# ----------------------------------------------------------------------------
# fused embedding kernel: (node Linear+ReLU+Linear) + (pos Linear), summed.
# ----------------------------------------------------------------------------
def _embed_kernel(feat_ref, lapl_ref, nw1, nb1, nw2, nb2, pw, pb, o_ref):
    bf16 = jnp.bfloat16
    h = jnp.maximum(
        jnp.dot(feat_ref[...].astype(bf16), nw1[...],
                preferred_element_type=jnp.float32) + nb1[...], 0.0)
    node = jnp.dot(h.astype(bf16), nw2[...],
                   preferred_element_type=jnp.float32) + nb2[...]
    pos = jnp.dot(lapl_ref[...].astype(bf16), pw[...],
                  preferred_element_type=jnp.float32) + pb[...]
    o_ref[...] = (node + pos).astype(o_ref.dtype)


def embed_op(node_feat2d, lapl2d, p):
    M, F = node_feat2d.shape
    P = lapl2d.shape[1]
    D = p["node_w2"].shape[1]
    bf16 = jnp.bfloat16
    tm = M if M <= 1024 else 1024      # M-tiled; large B*N still pipelines
    weights = [p["node_w1"].astype(bf16), p["node_b1"],
               p["node_w2"].astype(bf16), p["node_b2"],
               p["pos_w"].astype(bf16), p["pos_b"]]
    w_specs = [pl.BlockSpec(w.shape, lambda i: (0, 0)) for w in weights]
    return pl.pallas_call(
        _embed_kernel,
        out_shape=jax.ShapeDtypeStruct((M, D), jnp.float32),
        grid=(pl.cdiv(M, tm),),
        in_specs=[pl.BlockSpec((tm, F), lambda i: (i, 0)),
                  pl.BlockSpec((tm, P), lambda i: (i, 0))] + w_specs,
        out_specs=pl.BlockSpec((tm, D), lambda i: (i, 0)),
        compiler_params=pltpu.CompilerParams(
            dimension_semantics=("parallel",)),
    )(node_feat2d, lapl2d, *weights)


# ----------------------------------------------------------------------------
# fused AttentionBlock kernel (one grid step = Bt batch elements)
#   LN1 -> fused bf16 (scaled-q|k|v|gamma) matmul -> gamma-gated graph attention
#   -> single wide head projection -> LN2 -> MLP -> adapter
# ----------------------------------------------------------------------------
def _make_block_kernel(Bt, S, D, H, qkvp):
    HD = H * D
    R = Bt * S
    bf16 = jnp.bfloat16

    def kernel(x_ref, adj_ref,
               ln1g, ln1b, wf, bg, wproj, bproj,
               ln2g, ln2b, w1, b1, w2, b2,
               adw, adb, auw, aub,
               o_ref):
        x = x_ref[...].reshape(R, D)      # raw block input (adapter operand), f32
        adj = adj_ref[...]                # (Bt, S, S) bf16 (0/1 values)

        # ---- norm1 ---------------------------------------------------------
        h = _layernorm(x, ln1g[...], ln1b[...])

        # ---- fused (scaled-q | k | v | gamma) projection, one bf16 matmul ---
        qkvg = jnp.dot(h.astype(bf16), wf[...],
                       preferred_element_type=jnp.float32)      # (R, qkvp+128)

        gamma = jnp.exp(qkvg[:, qkvp:qkvp + 2] + bg[...])       # (R, 2), use_exp=True
        g0 = gamma[:, 0:1].reshape(Bt, S, 1)                    # global-attn gate
        gadj = gamma[:, 1:2].reshape(Bt, S, 1) * adj            # (Bt,S,S) f32, shared

        # ---- graph attention (per-head; attn scale already folded into wf) --
        # TODO(synk): for head_dim >= 128 restructure to a fully lane-aligned
        # stacked-head layout to avoid the sub-128 lane slices below.
        heads = []
        for hh in range(H):
            q = qkvg[:, hh * D:(hh + 1) * D].astype(bf16).reshape(Bt, S, D)
            k = qkvg[:, (H + hh) * D:(H + hh + 1) * D].astype(bf16).reshape(Bt, S, D)
            v = qkvg[:, (2 * H + hh) * D:(2 * H + hh + 1) * D].astype(bf16).reshape(Bt, S, D)
            a = jnp.einsum('bqd,bkd->bqk', q, k,
                           preferred_element_type=jnp.float32)
            a = _softmax_last(g0 * a + gadj)
            pv = jnp.einsum('bqk,bkd->bqd', a.astype(bf16), v,
                            preferred_element_type=jnp.float32)
            heads.append(pv.astype(bf16))
        hcat = jnp.concatenate(heads, axis=-1).reshape(R, HD)    # (R, H*D) bf16
        attn = jnp.dot(hcat, wproj[...],
                       preferred_element_type=jnp.float32) + bproj[...]
        x1 = attn + h                     # residual with norm1(x), as in the reference

        # ---- norm2 + MLP -----------------------------------------------------
        h2 = _layernorm(x1, ln2g[...], ln2b[...])
        hid = _gelu_exact(
            jnp.dot(h2.astype(bf16), w1[...],
                    preferred_element_type=jnp.float32) + b1[...])
        x2 = jnp.dot(hid.astype(bf16), w2[...],
                     preferred_element_type=jnp.float32) + b2[...] + h2

        # ---- adapter on the raw block input (dropout p=0 -> identity) -------
        down = jnp.maximum(
            jnp.dot(x.astype(bf16), adw[...],
                    preferred_element_type=jnp.float32) + adb[...], 0.0)
        up = jnp.dot(down.astype(bf16), auw[...],
                     preferred_element_type=jnp.float32) + aub[...]

        o_ref[...] = (x2 + up).reshape(Bt, S, D).astype(o_ref.dtype)
    return kernel


def attention_block_op(x, adj_cls, bp, num_heads):
    B, S, D = x.shape
    H = num_heads
    HD = H * D
    scale = float(D) ** (-0.5)            # head dim == dim in this parameterization
    qkvp = _round_up(3 * HD, 128)
    bf16 = jnp.bfloat16
    bt = _pick_bt(B, S)

    # Host-side (jit-folded) weight prep:
    #  * attention scale folded into the q columns of wqkv
    #  * qkv columns zero-padded to a multiple of 128, gamma projection appended on a
    #    lane-aligned 128-wide tail -> one lane-dense fused matmul, no zero-bias add
    #  * adapter scale folded into the up-projection weights/bias
    #  * all matmul weights cast to bf16 (MXU-native); biases / LN params stay f32
    wqkv = jnp.concatenate([bp["wqkv"][:, :HD] * scale, bp["wqkv"][:, HD:]], axis=1)
    wqkv = jnp.pad(wqkv, ((0, 0), (0, qkvp - 3 * HD)))
    wg = jnp.pad(bp["wg"], ((0, 0), (0, _GAMMA_PAD - bp["wg"].shape[1])))
    wf = jnp.concatenate([wqkv, wg], axis=1).astype(bf16)        # (D, qkvp+128)
    auw = (bp["au_w"] * bp["a_scale"]).astype(bf16)
    aub = bp["au_b"] * bp["a_scale"]

    weights = [bp["ln1_g"], bp["ln1_b"], wf, bp["bg"],
               bp["wproj"].astype(bf16), bp["bproj"],
               bp["ln2_g"], bp["ln2_b"],
               bp["w1"].astype(bf16), bp["b1"],
               bp["w2"].astype(bf16), bp["b2"],
               bp["ad_w"].astype(bf16), bp["ad_b"], auw, aub]
    w_specs = [pl.BlockSpec(w.shape, lambda b: (0, 0)) for w in weights]

    # TODO(synk): for production dims, mark the constant-index weight specs
    # pipeline_mode=pl.Buffered(1) (no double-buffer) and/or add a K/N grid axis with
    # a VMEM accumulator so the resident weight set fits v7x's 64 MiB VMEM; a
    # cross-pallas_call semaphore/VMEM prefetch would hide per-block weight DMA.
    return pl.pallas_call(
        _make_block_kernel(bt, S, D, H, qkvp),
        out_shape=jax.ShapeDtypeStruct((B, S, D), jnp.float32),
        grid=(B // bt,),
        in_specs=[pl.BlockSpec((bt, S, D), lambda b: (b, 0, 0)),
                  pl.BlockSpec((bt, S, S), lambda b: (b, 0, 0))] + w_specs,
        out_specs=pl.BlockSpec((bt, S, D), lambda b: (b, 0, 0)),
        compiler_params=pltpu.CompilerParams(
            dimension_semantics=("parallel",),      # shards batch tiles over v7x cores
            vmem_limit_bytes=64 * 1024 * 1024),
    )(x, adj_cls, *weights)


# ----------------------------------------------------------------------------
# fused mlp_head + projector kernel (two outputs)
# ----------------------------------------------------------------------------
def _head_proj_kernel(x_ref, hlng, hlnb, hw, hb,
                      p1w, p1b, p2w, p2b, p3w, p3b, plng, plnb, p4w, p4b,
                      head_ref, logit_ref):
    bf16 = jnp.bfloat16
    x = _layernorm(x_ref[...], hlng[...], hlnb[...])
    x = jnp.dot(x.astype(bf16), hw[...],
                preferred_element_type=jnp.float32) + hb[...]
    head_ref[...] = x.astype(head_ref.dtype)

    z = _gelu_exact(jnp.dot(x.astype(bf16), p1w[...],
                            preferred_element_type=jnp.float32) + p1b[...])
    z = _gelu_exact(jnp.dot(z.astype(bf16), p2w[...],
                            preferred_element_type=jnp.float32) + p2b[...])
    z = _gelu_exact(jnp.dot(z.astype(bf16), p3w[...],
                            preferred_element_type=jnp.float32) + p3b[...])
    z = _layernorm(z, plng[...], plnb[...])
    logit_ref[...] = (jnp.dot(z.astype(bf16), p4w[...],
                              preferred_element_type=jnp.float32)
                      + p4b[...]).astype(logit_ref.dtype)


def head_projector_op(x0, p):
    B, D = x0.shape
    C = p["proj_w4"].shape[1]
    bf16 = jnp.bfloat16
    weights = [p["head_ln_g"], p["head_ln_b"],
               p["head_w"].astype(bf16), p["head_b"],
               p["proj_w1"].astype(bf16), p["proj_b1"],
               p["proj_w2"].astype(bf16), p["proj_b2"],
               p["proj_w3"].astype(bf16), p["proj_b3"],
               p["proj_ln_g"], p["proj_ln_b"],
               p["proj_w4"].astype(bf16), p["proj_b4"]]
    w_specs = [pl.BlockSpec(w.shape, lambda i: (0, 0)) for w in weights]
    return pl.pallas_call(
        _head_proj_kernel,
        out_shape=(jax.ShapeDtypeStruct((B, D), jnp.float32),
                   jax.ShapeDtypeStruct((B, C), jnp.float32)),
        grid=(1,),
        in_specs=[pl.BlockSpec((B, D), lambda i: (0, 0))] + w_specs,
        out_specs=(pl.BlockSpec((B, D), lambda i: (0, 0)),
                   pl.BlockSpec((B, C), lambda i: (0, 0))),
        compiler_params=pltpu.CompilerParams(
            dimension_semantics=("arbitrary",)),
    )(x0, *weights)


# ----------------------------------------------------------------------------
# parameter construction (deterministic, synthetic)
# ----------------------------------------------------------------------------
def init_params(key, *, dim, depth, num_heads, mlp_ratio, feat_dim,
                num_classes, pos_dim, proj_dim):
    keys = jax.random.split(key, 256)
    it = iter(keys)

    def w(shape, scale=0.05):
        return (scale * jax.random.normal(next(it), shape)).astype(jnp.float32)

    ones = lambda n: jnp.ones((1, n), jnp.float32)
    zeros = lambda n: jnp.zeros((1, n), jnp.float32)

    p = {
        "cls_token": w((1, 1, dim), 1.0),
        "cls_pos": w((1, 1, dim), 1.0),
        "node_w1": w((feat_dim, dim * 2)), "node_b1": w((1, dim * 2)),
        "node_w2": w((dim * 2, dim)), "node_b2": w((1, dim)),
        "pos_w": w((pos_dim, dim)), "pos_b": w((1, dim)),
        "head_ln_g": ones(dim), "head_ln_b": zeros(dim),
        "head_w": w((dim, dim)), "head_b": w((1, dim)),
        "proj_w1": w((dim, proj_dim)), "proj_b1": w((1, proj_dim)),
        "proj_w2": w((proj_dim, proj_dim)), "proj_b2": w((1, proj_dim)),
        "proj_w3": w((proj_dim, proj_dim)), "proj_b3": w((1, proj_dim)),
        "proj_ln_g": ones(proj_dim), "proj_ln_b": zeros(proj_dim),
        "proj_w4": w((proj_dim, num_classes)), "proj_b4": w((1, num_classes)),
    }

    blocks = []
    for _ in range(depth):
        bk = {
            "ln1_g": ones(dim), "ln1_b": zeros(dim),
            "wqkv": w((dim, dim * num_heads * 3)),            # bias=False
            "wg": w((dim, 2), 0.01), "bg": zeros(2),
            "wproj": w((dim * num_heads, dim)), "bproj": w((1, dim)),
            "ln2_g": ones(dim), "ln2_b": zeros(dim),
            "w1": w((dim, dim * mlp_ratio)), "b1": w((1, dim * mlp_ratio)),
            "w2": w((dim * mlp_ratio, dim)), "b2": w((1, dim)),
            "ad_w": w((dim, 64)), "ad_b": zeros(64),          # adapter down (64 fixed)
            "au_w": w((64, dim)), "au_b": zeros(dim),         # adapter up
            "a_scale": jnp.ones((1, 1), jnp.float32),
        }
        blocks.append(bk)
    p["blocks"] = blocks
    return p


# ----------------------------------------------------------------------------
# full forward pass
# ----------------------------------------------------------------------------
@functools.partial(jax.jit, static_argnames=("num_heads",))
def graph_transformer_forward(params, node_feat, adj, lapl, *, num_heads):
    B, N, F = node_feat.shape
    dim = params["node_w2"].shape[1]
    pos_dim = params["pos_w"].shape[0]

    # fused node-embedding + positional embedding (already summed per token)
    tok = embed_op(node_feat.reshape(B * N, F),
                   lapl.reshape(B * N, pos_dim), params).reshape(B, N, dim)

    # cls token + cls positional embedding
    cls = params["cls_token"] + params["cls_pos"]             # (1, 1, dim)
    x = jnp.concatenate([jnp.broadcast_to(cls, (B, 1, dim)), tok], axis=1)

    # adjacency with cls row/col; 0/1 values stored bf16 to halve per-step DMA
    adj_cls = jnp.pad(adj, ((0, 0), (1, 0), (1, 0)))
    adj_cls = adj_cls.at[:, 0, 0].set(1.0).astype(jnp.bfloat16)

    for bp in params["blocks"]:
        x = attention_block_op(x, adj_cls, bp, num_heads)

    x0 = x[:, 0]                                              # cls token (B, dim)

    # fused mlp_head (LN + Linear) and projector (3x Linear+GELU, LN, Linear)
    head_out, logits = head_projector_op(x0, params)
    return head_out, logits


# ----------------------------------------------------------------------------
if __name__ == "__main__":
    # small shapes consistent with the module's forward
    B, N = 2, 8
    dim, depth, num_heads, mlp_ratio = 32, 2, 4, 2
    feat_dim, pos_dim, proj_dim, num_classes = 8, 32, 128, 16

    key = jax.random.PRNGKey(0)
    kp, kf, ka, kl = jax.random.split(key, 4)

    params = init_params(kp, dim=dim, depth=depth, num_heads=num_heads,
                         mlp_ratio=mlp_ratio, feat_dim=feat_dim,
                         num_classes=num_classes, pos_dim=pos_dim,
                         proj_dim=proj_dim)

    node_feat = jax.random.normal(kf, (B, N, feat_dim), jnp.float32)
    adj = (jax.random.uniform(ka, (B, N, N)) < 0.5).astype(jnp.float32)
    adj = jnp.maximum(adj, jnp.swapaxes(adj, 1, 2))           # symmetric 0/1 adjacency
    lapl = jax.random.normal(kl, (B, N, pos_dim), jnp.float32)

    head_out, proj_out = graph_transformer_forward(
        params, node_feat, adj, lapl, num_heads=num_heads)

    jax.block_until_ready(head_out)
    jax.block_until_ready(proj_out)

    assert head_out.shape == (B, dim)
    assert proj_out.shape == (B, num_classes)
    assert jnp.all(jnp.isfinite(head_out)) and jnp.all(jnp.isfinite(proj_out))
    print("KERNEL_OK")
</pallas_src>

<mosaic_0001>
module attributes {stable_mosaic.version = 11 : i64} {
  func.func @_embed_kernel(%arg0: i32, %arg1: memref<16x8xf32, #tpu.memory_space<vmem>>, %arg2: memref<16x32xf32, #tpu.memory_space<vmem>>, %arg3: memref<8x64xbf16, #tpu.memory_space<vmem>>, %arg4: memref<1x64xf32, #tpu.memory_space<vmem>>, %arg5: memref<64x32xbf16, #tpu.memory_space<vmem>>, %arg6: memref<1x32xf32, #tpu.memory_space<vmem>>, %arg7: memref<32x32xbf16, #tpu.memory_space<vmem>>, %arg8: memref<1x32xf32, #tpu.memory_space<vmem>>, %arg9: memref<16x32xf32, #tpu.memory_space<vmem>>) attributes {dimension_semantics = [#tpu.dimension_semantics<parallel>], iteration_bounds = array<i64: 1>, scalar_prefetch = 0 : i64, scratch_operands = 0 : i64, tpu.core_type = #tpu.core_type<tc>, window_params = [{transform_indices = @transform_0, window_bounds = array<i64: 16, 8>}, {transform_indices = @transform_1, window_bounds = array<i64: 16, 32>}, {pipeline_mode = #tpu.pipeline_mode<synchronous>, transform_indices = @transform_2, window_bounds = array<i64: 8, 64>}, {pipeline_mode = #tpu.pipeline_mode<synchronous>, transform_indices = @transform_3, window_bounds = array<i64: 1, 64>}, {pipeline_mode = #tpu.pipeline_mode<synchronous>, transform_indices = @transform_4, window_bounds = array<i64: 64, 32>}, {pipeline_mode = #tpu.pipeline_mode<synchronous>, transform_indices = @transform_5, window_bounds = array<i64: 1, 32>}, {pipeline_mode = #tpu.pipeline_mode<synchronous>, transform_indices = @transform_6, window_bounds = array<i64: 32, 32>}, {pipeline_mode = #tpu.pipeline_mode<synchronous>, transform_indices = @transform_7, window_bounds = array<i64: 1, 32>}, {transform_indices = @transform_8, window_bounds = array<i64: 16, 32>}]} {
    %c0 = arith.constant 0 : index
    %c0_0 = arith.constant 0 : index
    %0 = vector.load %arg1[%c0, %c0_0] : memref<16x8xf32, #tpu.memory_space<vmem>>, vector<16x8xf32>
    %1 = arith.truncf %0 : vector<16x8xf32> to vector<16x8xbf16>
    %c0_1 = arith.constant 0 : index
    %c0_2 = arith.constant 0 : index
    %2 = vector.load %arg3[%c0_1, %c0_2] : memref<8x64xbf16, #tpu.memory_space<vmem>>, vector<8x64xbf16>
    %cst = arith.constant dense<0.000000e+00> : vector<16x64xf32>
    %3 = tpu.matmul %1, %2, %cst {dimension_numbers = #tpu.dot_dimension_numbers<[1], [0], [0], [1], [0, 0, 1, 1], [], []>} : vector<16x8xbf16>, vector<8x64xbf16>, vector<16x64xf32> -> vector<16x64xf32>
    %c0_3 = arith.constant 0 : index
    %c0_4 = arith.constant 0 : index
    %4 = vector.load %arg4[%c0_3, %c0_4] : memref<1x64xf32, #tpu.memory_space<vmem>>, vector<1x64xf32>
    %5 = vector.broadcast %4 : vector<1x64xf32> to vector<16x64xf32>
    %6 = arith.addf %3, %5 : vector<16x64xf32>
    %cst_5 = arith.constant 0.000000e+00 : f32
    %7 = vector.broadcast %cst_5 : f32 to vector<16x64xf32>
    %8 = arith.maximumf %6, %7 : vector<16x64xf32>
    %9 = arith.truncf %8 : vector<16x64xf32> to vector<16x64xbf16>
    %c0_6 = arith.constant 0 : index
    %c0_7 = arith.constant 0 : index
    %10 = vector.load %arg5[%c0_6, %c0_7] : memref<64x32xbf16, #tpu.memory_space<vmem>>, vector<64x32xbf16>
    %cst_8 = arith.constant dense<0.000000e+00> : vector<16x32xf32>
    %11 = tpu.matmul %9, %10, %cst_8 {dimension_numbers = #tpu.dot_dimension_numbers<[1], [0], [0], [1], [0, 0, 1, 1], [], []>} : vector<16x64xbf16>, vector<64x32xbf16>, vector<16x32xf32> -> vector<16x32xf32>
    %c0_9 = arith.constant 0 : index
    %c0_10 = arith.constant 0 : index
    %12 = vector.load %arg6[%c0_9, %c0_10] : memref<1x32xf32, #tpu.memory_space<vmem>>, vector<1x32xf32>
    %13 = vector.broadcast %12 : vector<1x32xf32> to vector<16x32xf32>
    %14 = arith.addf %11, %13 : vector<16x32xf32>
    %c0_11 = arith.constant 0 : index
    %c0_12 = arith.constant 0 : index
    %15 = vector.load %arg2[%c0_11, %c0_12] : memref<16x32xf32, #tpu.memory_space<vmem>>, vector<16x32xf32>
    %16 = arith.truncf %15 : vector<16x32xf32> to vector<16x32xbf16>
    %c0_13 = arith.constant 0 : index
    %c0_14 = arith.constant 0 : index
    %17 = vector.load %arg7[%c0_13, %c0_14] : memref<32x32xbf16, #tpu.memory_space<vmem>>, vector<32x32xbf16>
    %cst_15 = arith.constant dense<0.000000e+00> : vector<16x32xf32>
    %18 = tpu.matmul %16, %17, %cst_15 {dimension_numbers = #tpu.dot_dimension_numbers<[1], [0], [0], [1], [0, 0, 1, 1], [], []>} : vector<16x32xbf16>, vector<32x32xbf16>, vector<16x32xf32> -> vector<16x32xf32>
    %c0_16 = arith.constant 0 : index
    %c0_17 = arith.constant 0 : index
    %19 = vector.load %arg8[%c0_16, %c0_17] : memref<1x32xf32, #tpu.memory_space<vmem>>, vector<1x32xf32>
    %20 = vector.broadcast %19 : vector<1x32xf32> to vector<16x32xf32>
    %21 = arith.addf %18, %20 : vector<16x32xf32>
    %22 = arith.addf %14, %21 : vector<16x32xf32>
    %c0_18 = arith.constant 0 : index
    %c0_19 = arith.constant 0 : index
    %23 = vector.load %arg9[%c0_18, %c0_19] : memref<16x32xf32, #tpu.memory_space<vmem>>, vector<16x32xf32>
    tpu.vector_store %arg9[%c0_18, %c0_19], %22 {strides = array<i32>} : memref<16x32xf32, #tpu.memory_space<vmem>>, vector<16x32xf32>,
    return
  }
  func.func @transform_0(%arg0: i32) -> (i32, i32) {
    %c0_i32 = arith.constant 0 : i32
    %c0_i32_0 = arith.constant 0 : i32
    return %arg0, %c0_i32 : i32, i32
  }
  func.func @transform_1(%arg0: i32) -> (i32, i32) {
    %c0_i32 = arith.constant 0 : i32
    %c0_i32_0 = arith.constant 0 : i32
    return %arg0, %c0_i32 : i32, i32
  }
  func.func @transform_2(%arg0: i32) -> (i32, i32) {
    %c0_i32 = arith.constant 0 : i32
    %c0_i32_0 = arith.constant 0 : i32
    %c0_i32_1 = arith.constant 0 : i32
    return %c0_i32, %c0_i32_0 : i32, i32
  }
  func.func @transform_3(%arg0: i32) -> (i32, i32) {
    %c0_i32 = arith.constant 0 : i32
    %c0_i32_0 = arith.constant 0 : i32
    %c0_i32_1 = arith.constant 0 : i32
    return %c0_i32, %c0_i32_0 : i32, i32
  }
  func.func @transform_4(%arg0: i32) -> (i32, i32) {
    %c0_i32 = arith.constant 0 : i32
    %c0_i32_0 = arith.constant 0 : i32
    %c0_i32_1 = arith.constant 0 : i32
    return %c0_i32, %c0_i32_0 : i32, i32
  }
  func.func @transform_5(%arg0: i32) -> (i32, i32) {
    %c0_i32 = arith.constant 0 : i32
    %c0_i32_0 = arith.constant 0 : i32
    %c0_i32_1 = arith.constant 0 : i32
    return %c0_i32, %c0_i32_0 : i32, i32
  }
  func.func @transform_6(%arg0: i32) -> (i32, i32) {
    %c0_i32 = arith.constant 0 : i32
    %c0_i32_0 = arith.constant 0 : i32
    %c0_i32_1 = arith.constant 0 : i32
    return %c0_i32, %c0_i32_0 : i32, i32
  }
  func.func @transform_7(%arg0: i32) -> (i32, i32) {
    %c0_i32 = arith.constant 0 : i32
    %c0_i32_0 = arith.constant 0 : i32
    %c0_i32_1 = arith.constant 0 : i32
    return %c0_i32, %c0_i32_0 : i32, i32
  }
  func.func @transform_8(%arg0: i32) -> (i32, i32) {
    %c0_i32 = arith.constant 0 : i32
    %c0_i32_0 = arith.constant 0 : i32
    return %arg0, %c0_i32 : i32, i32
  }
}

module attributes {stable_mosaic.version = 11 : i64} {
  func.func @kernel(%arg0: i32, %arg1: memref<1x9x32xf32, #tpu.memory_space<vmem>>, %arg2: memref<1x9x9xbf16, #tpu.memory_space<vmem>>, %arg3: memref<1x32xf32, #tpu.memory_space<vmem>>, %arg4: memref<1x32xf32, #tpu.memory_space<vmem>>, %arg5: memref<32x512xbf16, #tpu.memory_space<vmem>>, %arg6: memref<1x2xf32, #tpu.memory_space<vmem>>, %arg7: memref<128x32xbf16, #tpu.memory_space<vmem>>, %arg8: memref<1x32xf32, #tpu.memory_space<vmem>>, %arg9: memref<1x32xf32, #tpu.memory_space<vmem>>, %arg10: memref<1x32xf32, #tpu.memory_space<vmem>>, %arg11: memref<32x64xbf16, #tpu.memory_space<vmem>>, %arg12: memref<1x64xf32, #tpu.memory_space<vmem>>, %arg13: memref<64x32xbf16, #tpu.memory_space<vmem>>, %arg14: memref<1x32xf32, #tpu.memory_space<vmem>>, %arg15: memref<32x64xbf16, #tpu.memory_space<vmem>>, %arg16: memref<1x64xf32, #tpu.memory_space<vmem>>, %arg17: memref<64x32xbf16, #tpu.memory_space<vmem>>, %arg18: memref<1x32xf32, #tpu.memory_space<vmem>>, %arg19: memref<1x9x32xf32, #tpu.memory_space<vmem>>) attributes {dimension_semantics = [#tpu.dimension_semantics<parallel>], iteration_bounds = array<i64: 2>, scalar_prefetch = 0 : i64, scratch_operands = 0 : i64, tpu.core_type = #tpu.core_type<tc>, window_params = [{transform_indices = @transform_0, window_bounds = array<i64: 1, 9, 32>}, {transform_indices = @transform_1, window_bounds = array<i64: 1, 9, 9>}, {pipeline_mode = #tpu.pipeline_mode<synchronous>, transform_indices = @transform_2, window_bounds = array<i64: 1, 32>}, {pipeline_mode = #tpu.pipeline_mode<synchronous>, transform_indices = @transform_3, window_bounds = array<i64: 1, 32>}, {pipeline_mode = #tpu.pipeline_mode<synchronous>, transform_indices = @transform_4, window_bounds = array<i64: 32, 512>}, {pipeline_mode = #tpu.pipeline_mode<synchronous>, transform_indices = @transform_5, window_bounds = array<i64: 1, 2>}, {pipeline_mode = #tpu.pipeline_mode<synchronous>, transform_indices = @transform_6, window_bounds = array<i64: 128, 32>}, {pipeline_mode = #tpu.pipeline_mode<synchronous>, transform_indices = @transform_7, window_bounds = array<i64: 1, 32>}, {pipeline_mode = #tpu.pipeline_mode<synchronous>, transform_indices = @transform_8, window_bounds = array<i64: 1, 32>}, {pipeline_mode = #tpu.pipeline_mode<synchronous>, transform_indices = @transform_9, window_bounds = array<i64: 1, 32>}, {pipeline_mode = #tpu.pipeline_mode<synchronous>, transform_indices = @transform_10, window_bounds = array<i64: 32, 64>}, {pipeline_mode = #tpu.pipeline_mode<synchronous>, transform_indices = @transform_11, window_bounds = array<i64: 1, 64>}, {pipeline_mode = #tpu.pipeline_mode<synchronous>, transform_indices = @transform_12, window_bounds = array<i64: 64, 32>}, {pipeline_mode = #tpu.pipeline_mode<synchronous>, transform_indices = @transform_13, window_bounds = array<i64: 1, 32>}, {pipeline_mode = #tpu.pipeline_mode<synchronous>, transform_indices = @transform_14, window_bounds = array<i64: 32, 64>}, {pipeline_mode = #tpu.pipeline_mode<synchronous>, transform_indices = @transform_15, window_bounds = array<i64: 1, 64>}, {pipeline_mode = #tpu.pipeline_mode<synchronous>, transform_indices = @transform_16, window_bounds = array<i64: 64, 32>}, {pipeline_mode = #tpu.pipeline_mode<synchronous>, transform_indices = @transform_17, window_bounds = array<i64: 1, 32>}, {transform_indices = @transform_18, window_bounds = array<i64: 1, 9, 32>}]} {
    %c0 = arith.constant 0 : index
    %c0_0 = arith.constant 0 : index
    %c0_1 = arith.constant 0 : index
    %0 = vector.load %arg1[%c0, %c0_0, %c0_1] : memref<1x9x32xf32, #tpu.memory_space<vmem>>, vector<1x9x32xf32>
    %1 = vector.shape_cast %0 : vector<1x9x32xf32> to vector<9x32xf32>
    %c0_2 = arith.constant 0 : index
    %c0_3 = arith.constant 0 : index
    %c0_4 = arith.constant 0 : index
    %2 = vector.load %arg2[%c0_2, %c0_3, %c0_4] : memref<1x9x9xbf16, #tpu.memory_space<vmem>>, vector<1x9x9xbf16>
    %c0_5 = arith.constant 0 : index
    %c0_6 = arith.constant 0 : index
    %3 = vector.load %arg3[%c0_5, %c0_6] : memref<1x32xf32, #tpu.memory_space<vmem>>, vector<1x32xf32>
    %c0_7 = arith.constant 0 : index
    %c0_8 = arith.constant 0 : index
    %4 = vector.load %arg4[%c0_7, %c0_8] : memref<1x32xf32, #tpu.memory_space<vmem>>, vector<1x32xf32>
    %cst = arith.constant dense<0.000000e+00> : vector<9xf32>
    %5 = vector.multi_reduction <add>, %1, %cst [1] : vector<9x32xf32> to vector<9xf32>
    %6 = vector.shape_cast %5 : vector<9xf32> to vector<9x1xf32>
    %cst_9 = arith.constant 3.200000e+01 : f32
    %7 = vector.broadcast %cst_9 : f32 to vector<9x1xf32>
    %8 = arith.divf %6, %7 : vector<9x1xf32>
    %9 = vector.broadcast %8 : vector<9x1xf32> to vector<9x32xf32>
    %10 = arith.subf %1, %9 : vector<9x32xf32>
    %11 = arith.mulf %10, %10 : vector<9x32xf32>
    %cst_10 = arith.constant dense<0.000000e+00> : vector<9xf32>
    %12 = vector.multi_reduction <add>, %11, %cst_10 [1] : vector<9x32xf32> to vector<9xf32>
    %13 = vector.shape_cast %12 : vector<9xf32> to vector<9x1xf32>
    %cst_11 = arith.constant 3.200000e+01 : f32
    %14 = vector.broadcast %cst_11 : f32 to vector<9x1xf32>
    %15 = arith.divf %13, %14 : vector<9x1xf32>
    %16 = vector.broadcast %8 : vector<9x1xf32> to vector<9x32xf32>
    %17 = arith.subf %1, %16 : vector<9x32xf32>
    %cst_12 = arith.constant 9.99999974E-6 : f32
    %18 = vector.broadcast %cst_12 : f32 to vector<9x1xf32>
    %19 = arith.addf %15, %18 : vector<9x1xf32>
    %20 = math.rsqrt %19 : vector<9x1xf32>
    %21 = vector.broadcast %20 : vector<9x1xf32> to vector<9x32xf32>
    %22 = arith.mulf %17, %21 : vector<9x32xf32>
    %23 = vector.broadcast %3 : vector<1x32xf32> to vector<9x32xf32>
    %24 = arith.mulf %22, %23 : vector<9x32xf32>
    %25 = vector.broadcast %4 : vector<1x32xf32> to vector<9x32xf32>
    %26 = arith.addf %24, %25 : vector<9x32xf32>
    %27 = arith.truncf %26 : vector<9x32xf32> to vector<9x32xbf16>
    %c0_13 = arith.constant 0 : index
    %c0_14 = arith.constant 0 : index
    %28 = vector.load %arg5[%c0_13, %c0_14] : memref<32x512xbf16, #tpu.memory_space<vmem>>, vector<32x512xbf16>
    %cst_15 = arith.constant dense<0.000000e+00> : vector<9x512xf32>
    %29 = tpu.matmul %27, %28, %cst_15 {dimension_numbers = #tpu.dot_dimension_numbers<[1], [0], [0], [1], [0, 0, 1, 1], [], []>} : vector<9x32xbf16>, vector<32x512xbf16>, vector<9x512xf32> -> vector<9x512xf32>
    %30 = vector.extract_strided_slice %29 {offsets = [0, 384], sizes = [9, 2], strides = [1, 1]} : vector<9x512xf32> to vector<9x2xf32>
    %c0_16 = arith.constant 0 : index
    %c0_17 = arith.constant 0 : index
    %31 = vector.load %arg6[%c0_16, %c0_17] : memref<1x2xf32, #tpu.memory_space<vmem>>, vector<1x2xf32>
    %32 = vector.broadcast %31 : vector<1x2xf32> to vector<9x2xf32>
    %33 = arith.addf %30, %32 : vector<9x2xf32>
    %34 = math.exp %33 : vector<9x2xf32>
    %35 = vector.extract_strided_slice %34 {offsets = [0, 0], sizes = [9, 1], strides = [1, 1]} : vector<9x2xf32> to vector<9x1xf32>
    %36 = vector.shape_cast %35 : vector<9x1xf32> to vector<1x9x1xf32>
    %37 = vector.extract_strided_slice %34 {offsets = [0, 1], sizes = [9, 1], strides = [1, 1]} : vector<9x2xf32> to vector<9x1xf32>
    %38 = vector.shape_cast %37 : vector<9x1xf32> to vector<1x9x1xf32>
    %39 = arith.extf %2 : vector<1x9x9xbf16> to vector<1x9x9xf32>
    %40 = vector.broadcast %38 : vector<1x9x1xf32> to vector<1x9x9xf32>
    %41 = arith.mulf %40, %39 : vector<1x9x9xf32>
    %42 = vector.extract_strided_slice %29 {offsets = [0, 0], sizes = [9, 32], strides = [1, 1]} : vector<9x512xf32> to vector<9x32xf32>
    %43 = arith.truncf %42 : vector<9x32xf32> to vector<9x32xbf16>
    %44 = vector.shape_cast %43 : vector<9x32xbf16> to vector<1x9x32xbf16>
    %45 = vector.extract_strided_slice %29 {offsets = [0, 128], sizes = [9, 32], strides = [1, 1]} : vector<9x512xf32> to vector<9x32xf32>
    %46 = arith.truncf %45 : vector<9x32xf32> to vector<9x32xbf16>
    %47 = vector.shape_cast %46 : vector<9x32xbf16> to vector<1x9x32xbf16>
    %48 = vector.extract_strided_slice %29 {offsets = [0, 256], sizes = [9, 32], strides = [1, 1]} : vector<9x512xf32> to vector<9x32xf32>
    %49 = arith.truncf %48 : vector<9x32xf32> to vector<9x32xbf16>
    %50 = vector.shape_cast %49 : vector<9x32xbf16> to vector<1x9x32xbf16>
    "tpu.trace_start"() <{level = 10 : i32, message = "bqd,bkd->bqk"}> : () -> ()
    %cst_18 = arith.constant dense<0.000000e+00> : vector<1x9x9xf32>
    %51 = tpu.matmul %44, %47, %cst_18 {dimension_numbers = #tpu.dot_dimension_numbers<[2], [2], [1], [1], [0, 0, 0, 1, 1, 1], [0], [0]>} : vector<1x9x32xbf16>, vector<1x9x32xbf16>, vector<1x9x9xf32> -> vector<1x9x9xf32>
    "tpu.trace_stop"() : () -> ()
    %52 = vector.broadcast %36 : vector<1x9x1xf32> to vector<1x9x9xf32>
    %53 = arith.mulf %52, %51 : vector<1x9x9xf32>
    %54 = arith.addf %53, %41 : vector<1x9x9xf32>
    %cst_19 = arith.constant dense<0xFF800000> : vector<1x9xf32>
    %55 = vector.multi_reduction <maximumf>, %54, %cst_19 [2] : vector<1x9x9xf32> to vector<1x9xf32>
    %56 = vector.shape_cast %55 : vector<1x9xf32> to vector<1x9x1xf32>
    %57 = vector.broadcast %56 : vector<1x9x1xf32> to vector<1x9x9xf32>
    %58 = arith.subf %54, %57 : vector<1x9x9xf32>
    %59 = math.exp %58 : vector<1x9x9xf32>
    %cst_20 = arith.constant dense<0.000000e+00> : vector<1x9xf32>
    %60 = vector.multi_reduction <add>, %59, %cst_20 [2] : vector<1x9x9xf32> to vector<1x9xf32>
    %61 = vector.shape_cast %60 : vector<1x9xf32> to vector<1x9x1xf32>
    %62 = tpu.reciprocal %61 {approx = true} : vector<1x9x1xf32> -> vector<1x9x1xf32>
    %63 = vector.broadcast %62 : vector<1x9x1xf32> to vector<1x9x9xf32>
    %64 = arith.mulf %59, %63 : vector<1x9x9xf32>
    %65 = arith.truncf %64 : vector<1x9x9xf32> to vector<1x9x9xbf16>
    "tpu.trace_start"() <{level = 10 : i32, message = "bqk,bkd->bqd"}> : () -> ()
    %cst_21 = arith.constant dense<0.000000e+00> : vector<1x9x32xf32>
    %66 = tpu.matmul %65, %50, %cst_21 {dimension_numbers = #tpu.dot_dimension_numbers<[2], [1], [1], [2], [0, 0, 0, 1, 1, 2], [0], [0]>} : vector<1x9x9xbf16>, vector<1x9x32xbf16>, vector<1x9x32xf32> -> vector<1x9x32xf32>
    "tpu.trace_stop"() : () -> ()
    %67 = arith.truncf %66 : vector<1x9x32xf32> to vector<1x9x32xbf16>
    %68 = vector.extract_strided_slice %29 {offsets = [0, 32], sizes = [9, 32], strides = [1, 1]} : vector<9x512xf32> to vector<9x32xf32>
    %69 = arith.truncf %68 : vector<9x32xf32> to vector<9x32xbf16>
    %70 = vector.shape_cast %69 : vector<9x32xbf16> to vector<1x9x32xbf16>
    %71 = vector.extract_strided_slice %29 {offsets = [0, 160], sizes = [9, 32], strides = [1, 1]} : vector<9x512xf32> to vector<9x32xf32>
    %72 = arith.truncf %71 : vector<9x32xf32> to vector<9x32xbf16>
    %73 = vector.shape_cast %72 : vector<9x32xbf16> to vector<1x9x32xbf16>
    %74 = vector.extract_strided_slice %29 {offsets = [0, 288], sizes = [9, 32], strides = [1, 1]} : vector<9x512xf32> to vector<9x32xf32>
    %75 = arith.truncf %74 : vector<9x32xf32> to vector<9x32xbf16>
    %76 = vector.shape_cast %75 : vector<9x32xbf16> to vector<1x9x32xbf16>
    "tpu.trace_start"() <{level = 10 : i32, message = "bqd,bkd->bqk"}> : () -> ()
    %cst_22 = arith.constant dense<0.000000e+00> : vector<1x9x9xf32>
    %77 = tpu.matmul %70, %73, %cst_22 {dimension_numbers = #tpu.dot_dimension_numbers<[2], [2], [1], [1], [0, 0, 0, 1, 1, 1], [0], [0]>} : vector<1x9x32xbf16>, vector<1x9x32xbf16>, vector<1x9x9xf32> -> vector<1x9x9xf32>
    "tpu.trace_stop"() : () -> ()
    %78 = vector.broadcast %36 : vector<1x9x1xf32> to vector<1x9x9xf32>
    %79 = arith.mulf %78, %77 : vector<1x9x9xf32>
    %80 = arith.addf %79, %41 : vector<1x9x9xf32>
    %cst_23 = arith.constant dense<0xFF800000> : vector<1x9xf32>
    %81 = vector.multi_reduction <maximumf>, %80, %cst_23 [2] : vector<1x9x9xf32> to vector<1x9xf32>
    %82 = vector.shape_cast %81 : vector<1x9xf32> to vector<1x9x1xf32>
    %83 = vector.broadcast %82 : vector<1x9x1xf32> to vector<1x9x9xf32>
    %84 = arith.subf %80, %83 : vector<1x9x9xf32>
    %85 = math.exp %84 : vector<1x9x9xf32>
    %cst_24 = arith.constant dense<0.000000e+00> : vector<1x9xf32>
    %86 = vector.multi_reduction <add>, %85, %cst_24 [2] : vector<1x9x9xf32> to vector<1x9xf32>
    %87 = vector.shape_cast %86 : vector<1x9xf32> to vector<1x9x1xf32>
    %88 = tpu.reciprocal %87 {approx = true} : vector<1x9x1xf32> -> vector<1x9x1xf32>
    %89 = vector.broadcast %88 : vector<1x9x1xf32> to vector<1x9x9xf32>
    %90 = arith.mulf %85, %89 : vector<1x9x9xf32>
    %91 = arith.truncf %90 : vector<1x9x9xf32> to vector<1x9x9xbf16>
    "tpu.trace_start"() <{level = 10 : i32, message = "bqk,bkd->bqd"}> : () -> ()
    %cst_25 = arith.constant dense<0.000000e+00> : vector<1x9x32xf32>
    %92 = tpu.matmul %91, %76, %cst_25 {dimension_numbers = #tpu.dot_dimension_numbers<[2], [1], [1], [2], [0, 0, 0, 1, 1, 2], [0], [0]>} : vector<1x9x9xbf16>, vector<1x9x32xbf16>, vector<1x9x32xf32> -> vector<1x9x32xf32>
    "tpu.trace_stop"() : () -> ()
    %93 = arith.truncf %92 : vector<1x9x32xf32> to vector<1x9x32xbf16>
    %94 = vector.extract_strided_slice %29 {offsets = [0, 64], sizes = [9, 32], strides = [1, 1]} : vector<9x512xf32> to vector<9x32xf32>
    %95 = arith.truncf %94 : vector<9x32xf32> to vector<9x32xbf16>
    %96 = vector.shape_cast %95 : vector<9x32xbf16> to vector<1x9x32xbf16>
    %97 = vector.extract_strided_slice %29 {offsets = [0, 192], sizes = [9, 32], strides = [1, 1]} : vector<9x512xf32> to vector<9x32xf32>
    %98 = arith.truncf %97 : vector<9x32xf32> to vector<9x32xbf16>
    %99 = vector.shape_cast %98 : vector<9x32xbf16> to vector<1x9x32xbf16>
    %100 = vector.extract_strided_slice %29 {offsets = [0, 320], sizes = [9, 32], strides = [1, 1]} : vector<9x512xf32> to vector<9x32xf32>
    %101 = arith.truncf %100 : vector<9x32xf32> to vector<9x32xbf16>
    %102 = vector.shape_cast %101 : vector<9x32xbf16> to vector<1x9x32xbf16>
    "tpu.trace_start"() <{level = 10 : i32, message = "bqd,bkd->bqk"}> : () -> ()
    %cst_26 = arith.constant dense<0.000000e+00> : vector<1x9x9xf32>
    %103 = tpu.matmul %96, %99, %cst_26 {dimension_numbers = #tpu.dot_dimension_numbers<[2], [2], [1], [1], [0, 0, 0, 1, 1, 1], [0], [0]>} : vector<1x9x32xbf16>, vector<1x9x32xbf16>, vector<1x9x9xf32> -> vector<1x9x9xf32>
    "tpu.trace_stop"() : () -> ()
    %104 = vector.broadcast %36 : vector<1x9x1xf32> to vector<1x9x9xf32>
    %105 = arith.mulf %104, %103 : vector<1x9x9xf32>
    %106 = arith.addf %105, %41 : vector<1x9x9xf32>
    %cst_27 = arith.constant dense<0xFF800000> : vector<1x9xf32>
    %107 = vector.multi_reduction <maximumf>, %106, %cst_27 [2] : vector<1x9x9xf32> to vector<1x9xf32>
    %108 = vector.shape_cast %107 : vector<1x9xf32> to vector<1x9x1xf32>
    %109 = vector.broadcast %108 : vector<1x9x1xf32> to vector<1x9x9xf32>
    %110 = arith.subf %106, %109 : vector<1x9x9xf32>
    %111 = math.exp %110 : vector<1x9x9xf32>
    %cst_28 = arith.constant dense<0.000000e+00> : vector<1x9xf32>
    %112 = vector.multi_reduction <add>, %111, %cst_28 [2] : vector<1x9x9xf32> to vector<1x9xf32>
    %113 = vector.shape_cast %112 : vector<1x9xf32> to vector<1x9x1xf32>
    %114 = tpu.reciprocal %113 {approx = true} : vector<1x9x1xf32> -> vector<1x9x1xf32>
    %115 = vector.broadcast %114 : vector<1x9x1xf32> to vector<1x9x9xf32>
    %116 = arith.mulf %111, %115 : vector<1x9x9xf32>
    %117 = arith.truncf %116 : vector<1x9x9xf32> to vector<1x9x9xbf16>
    "tpu.trace_start"() <{level = 10 : i32, message = "bqk,bkd->bqd"}> : () -> ()
    %cst_29 = arith.constant dense<0.000000e+00> : vector<1x9x32xf32>
    %118 = tpu.matmul %117, %102, %cst_29 {dimension_numbers = #tpu.dot_dimension_numbers<[2], [1], [1], [2], [0, 0, 0, 1, 1, 2], [0], [0]>} : vector<1x9x9xbf16>, vector<1x9x32xbf16>, vector<1x9x32xf32> -> vector<1x9x32xf32>
    "tpu.trace_stop"() : () -> ()
    %119 = arith.truncf %118 : vector<1x9x32xf32> to vector<1x9x32xbf16>
    %120 = vector.extract_strided_slice %29 {offsets = [0, 96], sizes = [9, 32], strides = [1, 1]} : vector<9x512xf32> to vector<9x32xf32>
    %121 = arith.truncf %120 : vector<9x32xf32> to vector<9x32xbf16>
    %122 = vector.shape_cast %121 : vector<9x32xbf16> to vector<1x9x32xbf16>
    %123 = vector.extract_strided_slice %29 {offsets = [0, 224], sizes = [9, 32], strides = [1, 1]} : vector<9x512xf32> to vector<9x32xf32>
    %124 = arith.truncf %123 : vector<9x32xf32> to vector<9x32xbf16>
    %125 = vector.shape_cast %124 : vector<9x32xbf16> to vector<1x9x32xbf16>
    %126 = vector.extract_strided_slice %29 {offsets = [0, 352], sizes = [9, 32], strides = [1, 1]} : vector<9x512xf32> to vector<9x32xf32>
    %127 = arith.truncf %126 : vector<9x32xf32> to vector<9x32xbf16>
    %128 = vector.shape_cast %127 : vector<9x32xbf16> to vector<1x9x32xbf16>
    "tpu.trace_start"() <{level = 10 : i32, message = "bqd,bkd->bqk"}> : () -> ()
    %cst_30 = arith.constant dense<0.000000e+00> : vector<1x9x9xf32>
    %129 = tpu.matmul %122, %125, %cst_30 {dimension_numbers = #tpu.dot_dimension_numbers<[2], [2], [1], [1], [0, 0, 0, 1, 1, 1], [0], [0]>} : vector<1x9x32xbf16>, vector<1x9x32xbf16>, vector<1x9x9xf32> -> vector<1x9x9xf32>
    "tpu.trace_stop"() : () -> ()
    %130 = vector.broadcast %36 : vector<1x9x1xf32> to vector<1x9x9xf32>
    %131 = arith.mulf %130, %129 : vector<1x9x9xf32>
    %132 = arith.addf %131, %41 : vector<1x9x9xf32>
    %cst_31 = arith.constant dense<0xFF800000> : vector<1x9xf32>
    %133 = vector.multi_reduction <maximumf>, %132, %cst_31 [2] : vector<1x9x9xf32> to vector<1x9xf32>
    %134 = vector.shape_cast %133 : vector<1x9xf32> to vector<1x9x1xf32>
    %135 = vector.broadcast %134 : vector<1x9x1xf32> to vector<1x9x9xf32>
    %136 = arith.subf %132, %135 : vector<1x9x9xf32>
    %137 = math.exp %136 : vector<1x9x9xf32>
    %cst_32 = arith.constant dense<0.000000e+00> : vector<1x9xf32>
    %138 = vector.multi_reduction <add>, %137, %cst_32 [2] : vector<1x9x9xf32> to vector<1x9xf32>
    %139 = vector.shape_cast %138 : vector<1x9xf32> to vector<1x9x1xf32>
    %140 = tpu.reciprocal %139 {approx = true} : vector<1x9x1xf32> -> vector<1x9x1xf32>
    %141 = vector.broadcast %140 : vector<1x9x1xf32> to vector<1x9x9xf32>
    %142 = arith.mulf %137, %141 : vector<1x9x9xf32>
    %143 = arith.truncf %142 : vector<1x9x9xf32> to vector<1x9x9xbf16>
    "tpu.trace_start"() <{level = 10 : i32, message = "bqk,bkd->bqd"}> : () -> ()
    %cst_33 = arith.constant dense<0.000000e+00> : vector<1x9x32xf32>
    %144 = tpu.matmul %143, %128, %cst_33 {dimension_numbers = #tpu.dot_dimension_numbers<[2], [1], [1], [2], [0, 0, 0, 1, 1, 2], [0], [0]>} : vector<1x9x9xbf16>, vector<1x9x32xbf16>, vector<1x9x32xf32> -> vector<1x9x32xf32>
    "tpu.trace_stop"() : () -> ()
    %145 = arith.truncf %144 : vector<1x9x32xf32> to vector<1x9x32xbf16>
    %146 = tpu.concatenate %67, %93, %119, %145 in 2 : vector<1x9x32xbf16>, vector<1x9x32xbf16>, vector<1x9x32xbf16>, vector<1x9x32xbf16> -> vector<1x9x128xbf16>
    %147 = vector.shape_cast %146 : vector<1x9x128xbf16> to vector<9x128xbf16>
    %c0_34 = arith.constant 0 : index
    %c0_35 = arith.constant 0 : index
    %148 = vector.load %arg7[%c0_34, %c0_35] : memref<128x32xbf16, #tpu.memory_space<vmem>>, vector<128x32xbf16>
    %cst_36 = arith.constant dense<0.000000e+00> : vector<9x32xf32>
    %149 = tpu.matmul %147, %148, %cst_36 {dimension_numbers = #tpu.dot_dimension_numbers<[1], [0], [0], [1], [0, 0, 1, 1], [], []>} : vector<9x128xbf16>, vector<128x32xbf16>, vector<9x32xf32> -> vector<9x32xf32>
    %c0_37 = arith.constant 0 : index
    %c0_38 = arith.constant 0 : index
    %150 = vector.load %arg8[%c0_37, %c0_38] : memref<1x32xf32, #tpu.memory_space<vmem>>, vector<1x32xf32>
    %151 = vector.broadcast %150 : vector<1x32xf32> to vector<9x32xf32>
    %152 = arith.addf %149, %151 : vector<9x32xf32>
    %153 = arith.addf %152, %26 : vector<9x32xf32>
    %c0_39 = arith.constant 0 : index
    %c0_40 = arith.constant 0 : index
    %154 = vector.load %arg9[%c0_39, %c0_40] : memref<1x32xf32, #tpu.memory_space<vmem>>, vector<1x32xf32>
    %c0_41 = arith.constant 0 : index
    %c0_42 = arith.constant 0 : index
    %155 = vector.load %arg10[%c0_41, %c0_42] : memref<1x32xf32, #tpu.memory_space<vmem>>, vector<1x32xf32>
    %cst_43 = arith.constant dense<0.000000e+00> : vector<9xf32>
    %156 = vector.multi_reduction <add>, %153, %cst_43 [1] : vector<9x32xf32> to vector<9xf32>
    %157 = vector.shape_cast %156 : vector<9xf32> to vector<9x1xf32>
    %cst_44 = arith.constant 3.200000e+01 : f32
    %158 = vector.broadcast %cst_44 : f32 to vector<9x1xf32>
    %159 = arith.divf %157, %158 : vector<9x1xf32>
    %160 = vector.broadcast %159 : vector<9x1xf32> to vector<9x32xf32>
    %161 = arith.subf %153, %160 : vector<9x32xf32>
    %162 = arith.mulf %161, %161 : vector<9x32xf32>
    %cst_45 = arith.constant dense<0.000000e+00> : vector<9xf32>
    %163 = vector.multi_reduction <add>, %162, %cst_45 [1] : vector<9x32xf32> to vector<9xf32>
    %164 = vector.shape_cast %163 : vector<9xf32> to vector<9x1xf32>
    %cst_46 = arith.constant 3.200000e+01 : f32
    %165 = vector.broadcast %cst_46 : f32 to vector<9x1xf32>
    %166 = arith.divf %164, %165 : vector<9x1xf32>
    %167 = vector.broadcast %159 : vector<9x1xf32> to vector<9x32xf32>
    %168 = arith.subf %153, %167 : vector<9x32xf32>
    %cst_47 = arith.constant 9.99999974E-6 : f32
    %169 = vector.broadcast %cst_47 : f32 to vector<9x1xf32>
    %170 = arith.addf %166, %169 : vector<9x1xf32>
    %171 = math.rsqrt %170 : vector<9x1xf32>
    %172 = vector.broadcast %171 : vector<9x1xf32> to vector<9x32xf32>
    %173 = arith.mulf %168, %172 : vector<9x32xf32>
    %174 = vector.broadcast %154 : vector<1x32xf32> to vector<9x32xf32>
    %175 = arith.mulf %173, %174 : vector<9x32xf32>
    %176 = vector.broadcast %155 : vector<1x32xf32> to vector<9x32xf32>
    %177 = arith.addf %175, %176 : vector<9x32xf32>
    %178 = arith.truncf %177 : vector<9x32xf32> to vector<9x32xbf16>
    %c0_48 = arith.constant 0 : index
    %c0_49 = arith.constant 0 : index
    %179 = vector.load %arg11[%c0_48, %c0_49] : memref<32x64xbf16, #tpu.memory_space<vmem>>, vector<32x64xbf16>
    %cst_50 = arith.constant dense<0.000000e+00> : vector<9x64xf32>
    %180 = tpu.matmul %178, %179, %cst_50 {dimension_numbers = #tpu.dot_dimension_numbers<[1], [0], [0], [1], [0, 0, 1, 1], [], []>} : vector<9x32xbf16>, vector<32x64xbf16>, vector<9x64xf32> -> vector<9x64xf32>
    %c0_51 = arith.constant 0 : index
    %c0_52 = arith.constant 0 : index
    %181 = vector.load %arg12[%c0_51, %c0_52] : memref<1x64xf32, #tpu.memory_space<vmem>>, vector<1x64xf32>
    %182 = vector.broadcast %181 : vector<1x64xf32> to vector<9x64xf32>
    %183 = arith.addf %180, %182 : vector<9x64xf32>
    %cst_53 = arith.constant 5.000000e-01 : f32
    %184 = vector.broadcast %cst_53 : f32 to vector<9x64xf32>
    %185 = arith.mulf %184, %183 : vector<9x64xf32>
    %cst_54 = arith.constant 0.707106769 : f32
    %186 = vector.broadcast %cst_54 : f32 to vector<9x64xf32>
    %187 = arith.mulf %183, %186 : vector<9x64xf32>
    %188 = math.erf %187 : vector<9x64xf32>
    %cst_55 = arith.constant 1.000000e+00 : f32
    %189 = vector.broadcast %cst_55 : f32 to vector<9x64xf32>
    %190 = arith.addf %189, %188 : vector<9x64xf32>
    %191 = arith.mulf %185, %190 : vector<9x64xf32>
    %192 = arith.truncf %191 : vector<9x64xf32> to vector<9x64xbf16>
    %c0_56 = arith.constant 0 : index
    %c0_57 = arith.constant 0 : index
    %193 = vector.load %arg13[%c0_56, %c0_57] : memref<64x32xbf16, #tpu.memory_space<vmem>>, vector<64x32xbf16>
    %cst_58 = arith.constant dense<0.000000e+00> : vector<9x32xf32>
    %194 = tpu.matmul %192, %193, %cst_58 {dimension_numbers = #tpu.dot_dimension_numbers<[1], [0], [0], [1], [0, 0, 1, 1], [], []>} : vector<9x64xbf16>, vector<64x32xbf16>, vector<9x32xf32> -> vector<9x32xf32>
    %c0_59 = arith.constant 0 : index
    %c0_60 = arith.constant 0 : index
    %195 = vector.load %arg14[%c0_59, %c0_60] : memref<1x32xf32, #tpu.memory_space<vmem>>, vector<1x32xf32>
    %196 = vector.broadcast %195 : vector<1x32xf32> to vector<9x32xf32>
    %197 = arith.addf %194, %196 : vector<9x32xf32>
    %198 = arith.addf %197, %177 : vector<9x32xf32>
    %199 = arith.truncf %1 : vector<9x32xf32> to vector<9x32xbf16>
    %c0_61 = arith.constant 0 : index
    %c0_62 = arith.constant 0 : index
    %200 = vector.load %arg15[%c0_61, %c0_62] : memref<32x64xbf16, #tpu.memory_space<vmem>>, vector<32x64xbf16>
    %cst_63 = arith.constant dense<0.000000e+00> : vector<9x64xf32>
    %201 = tpu.matmul %199, %200, %cst_63 {dimension_numbers = #tpu.dot_dimension_numbers<[1], [0], [0], [1], [0, 0, 1, 1], [], []>} : vector<9x32xbf16>, vector<32x64xbf16>, vector<9x64xf32> -> vector<9x64xf32>
    %c0_64 = arith.constant 0 : index
    %c0_65 = arith.constant 0 : index
    %202 = vector.load %arg16[%c0_64, %c0_65] : memref<1x64xf32, #tpu.memory_space<vmem>>, vector<1x64xf32>
    %203 = vector.broadcast %202 : vector<1x64xf32> to vector<9x64xf32>
    %204 = arith.addf %201, %203 : vector<9x64xf32>
    %cst_66 = arith.constant 0.000000e+00 : f32
    %205 = vector.broadcast %cst_66 : f32 to vector<9x64xf32>
    %206 = arith.maximumf %204, %205 : vector<9x64xf32>
    %207 = arith.truncf %206 : vector<9x64xf32> to vector<9x64xbf16>
    %c0_67 = arith.constant 0 : index
    %c0_68 = arith.constant 0 : index
    %208 = vector.load %arg17[%c0_67, %c0_68] : memref<64x32xbf16, #tpu.memory_space<vmem>>, vector<64x32xbf16>
    %cst_69 = arith.constant dense<0.000000e+00> : vector<9x32xf32>
    %209 = tpu.matmul %207, %208, %cst_69 {dimension_numbers = #tpu.dot_dimension_numbers<[1], [0], [0], [1], [0, 0, 1, 1], [], []>} : vector<9x64xbf16>, vector<64x32xbf16>, vector<9x32xf32> -> vector<9x32xf32>
    %c0_70 = arith.constant 0 : index
    %c0_71 = arith.constant 0 : index
    %210 = vector.load %arg18[%c0_70, %c0_71] : memref<1x32xf32, #tpu.memory_space<vmem>>, vector<1x32xf32>
    %211 = vector.broadcast %210 : vector<1x32xf32> to vector<9x32xf32>
    %212 = arith.addf %209, %211 : vector<9x32xf32>
    %213 = arith.addf %198, %212 : vector<9x32xf32>
    %214 = vector.shape_cast %213 : vector<9x32xf32> to vector<1x9x32xf32>
    %c0_72 = arith.constant 0 : index
    %c0_73 = arith.constant 0 : index
    %c0_74 = arith.constant 0 : index
    %215 = vector.load %arg19[%c0_72, %c0_73, %c0_74] : memref<1x9x32xf32, #tpu.memory_space<vmem>>, vector<1x9x32xf32>
    tpu.vector_store %arg19[%c0_72, %c0_73, %c0_74], %214 {strides = array<i32>} : memref<1x9x32xf32, #tpu.memory_space<vmem>>, vector<1x9x32xf32>,
    return
  }
  func.func @transform_0(%arg0: i32) -> (i32, i32, i32) {
    %c0_i32 = arith.constant 0 : i32
    %c0_i32_0 = arith.constant 0 : i32
    %c0_i32_1 = arith.constant 0 : i32
    return %arg0, %c0_i32, %c0_i32_0 : i32, i32, i32
  }
  func.func @transform_1(%arg0: i32) -> (i32, i32, i32) {
    %c0_i32 = arith.constant 0 : i32
    %c0_i32_0 = arith.constant 0 : i32
    %c0_i32_1 = arith.constant 0 : i32
    return %arg0, %c0_i32, %c0_i32_0 : i32, i32, i32
  }
  func.func @transform_2(%arg0: i32) -> (i32, i32) {
    %c0_i32 = arith.constant 0 : i32
    %c0_i32_0 = arith.constant 0 : i32
    %c0_i32_1 = arith.constant 0 : i32
    return %c0_i32, %c0_i32_0 : i32, i32
  }
  func.func @transform_3(%arg0: i32) -> (i32, i32) {
    %c0_i32 = arith.constant 0 : i32
    %c0_i32_0 = arith.constant 0 : i32
    %c0_i32_1 = arith.constant 0 : i32
    return %c0_i32, %c0_i32_0 : i32, i32
  }
  func.func @transform_4(%arg0: i32) -> (i32, i32) {
    %c0_i32 = arith.constant 0 : i32
    %c0_i32_0 = arith.constant 0 : i32
    %c0_i32_1 = arith.constant 0 : i32
    return %c0_i32, %c0_i32_0 : i32, i32
  }
  func.func @transform_5(%arg0: i32) -> (i32, i32) {
    %c0_i32 = arith.constant 0 : i32
    %c0_i32_0 = arith.constant 0 : i32
    %c0_i32_1 = arith.constant 0 : i32
    return %c0_i32, %c0_i32_0 : i32, i32
  }
  func.func @transform_6(%arg0: i32) -> (i32, i32) {
    %c0_i32 = arith.constant 0 : i32
    %c0_i32_0 = arith.constant 0 : i32
    %c0_i32_1 = arith.constant 0 : i32
    return %c0_i32, %c0_i32_0 : i32, i32
  }
  func.func @transform_7(%arg0: i32) -> (i32, i32) {
    %c0_i32 = arith.constant 0 : i32
    %c0_i32_0 = arith.constant 0 : i32
    %c0_i32_1 = arith.constant 0 : i32
    return %c0_i32, %c0_i32_0 : i32, i32
  }
  func.func @transform_8(%arg0: i32) -> (i32, i32) {
    %c0_i32 = arith.constant 0 : i32
    %c0_i32_0 = arith.constant 0 : i32
    %c0_i32_1 = arith.constant 0 : i32
    return %c0_i32, %c0_i32_0 : i32, i32
  }
  func.func @transform_9(%arg0: i32) -> (i32, i32) {
    %c0_i32 = arith.constant 0 : i32
    %c0_i32_0 = arith.constant 0 : i32
    %c0_i32_1 = arith.constant 0 : i32
    return %c0_i32, %c0_i32_0 : i32, i32
  }
  func.func @transform_10(%arg0: i32) -> (i32, i32) {
    %c0_i32 = arith.constant 0 : i32
    %c0_i32_0 = arith.constant 0 : i32
    %c0_i32_1 = arith.constant 0 : i32
    return %c0_i32, %c0_i32_0 : i32, i32
  }
  func.func @transform_11(%arg0: i32) -> (i32, i32) {
    %c0_i32 = arith.constant 0 : i32
    %c0_i32_0 = arith.constant 0 : i32
    %c0_i32_1 = arith.constant 0 : i32
    return %c0_i32, %c0_i32_0 : i32, i32
  }
  func.func @transform_12(%arg0: i32) -> (i32, i32) {
    %c0_i32 = arith.constant 0 : i32
    %c0_i32_0 = arith.constant 0 : i32
    %c0_i32_1 = arith.constant 0 : i32
    return %c0_i32, %c0_i32_0 : i32, i32
  }
  func.func @transform_13(%arg0: i32) -> (i32, i32) {
    %c0_i32 = arith.constant 0 : i32
    %c0_i32_0 = arith.constant 0 : i32
    %c0_i32_1 = arith.constant 0 : i32
    return %c0_i32, %c0_i32_0 : i32, i32
  }
  func.func @transform_14(%arg0: i32) -> (i32, i32) {
    %c0_i32 = arith.constant 0 : i32
    %c0_i32_0 = arith.constant 0 : i32
    %c0_i32_1 = arith.constant 0 : i32
    return %c0_i32, %c0_i32_0 : i32, i32
  }
  func.func @transform_15(%arg0: i32) -> (i32, i32) {
    %c0_i32 = arith.constant 0 : i32
    %c0_i32_0 = arith.constant 0 : i32
    %c0_i32_1 = arith.constant 0 : i32
    return %c0_i32, %c0_i32_0 : i32, i32
  }
  func.func @transform_16(%arg0: i32) -> (i32, i32) {
    %c0_i32 = arith.constant 0 : i32
    %c0_i32_0 = arith.constant 0 : i32
    %c0_i32_1 = arith.constant 0 : i32
    return %c0_i32, %c0_i32_0 : i32, i32
  }
  func.func @transform_17(%arg0: i32) -> (i32, i32) {
    %c0_i32 = arith.constant 0 : i32
    %c0_i32_0 = arith.constant 0 : i32
    %c0_i32_1 = arith.constant 0 : i32
    return %c0_i32, %c0_i32_0 : i32, i32
  }
  func.func @transform_18(%arg0: i32) -> (i32, i32, i32) {
    %c0_i32 = arith.constant 0 : i32
    %c0_i32_0 = arith.constant 0 : i32
    %c0_i32_1 = arith.constant 0 : i32
    return %arg0, %c0_i32, %c0_i32_0 : i32, i32, i32
  }
}

module attributes {stable_mosaic.version = 11 : i64} {
  func.func @_head_proj_kernel(%arg0: i32, %arg1: memref<2x32xf32, #tpu.memory_space<vmem>>, %arg2: memref<1x32xf32, #tpu.memory_space<vmem>>, %arg3: memref<1x32xf32, #tpu.memory_space<vmem>>, %arg4: memref<32x32xbf16, #tpu.memory_space<vmem>>, %arg5: memref<1x32xf32, #tpu.memory_space<vmem>>, %arg6: memref<32x128xbf16, #tpu.memory_space<vmem>>, %arg7: memref<1x128xf32, #tpu.memory_space<vmem>>, %arg8: memref<128x128xbf16, #tpu.memory_space<vmem>>, %arg9: memref<1x128xf32, #tpu.memory_space<vmem>>, %arg10: memref<128x128xbf16, #tpu.memory_space<vmem>>, %arg11: memref<1x128xf32, #tpu.memory_space<vmem>>, %arg12: memref<1x128xf32, #tpu.memory_space<vmem>>, %arg13: memref<1x128xf32, #tpu.memory_space<vmem>>, %arg14: memref<128x16xbf16, #tpu.memory_space<vmem>>, %arg15: memref<1x16xf32, #tpu.memory_space<vmem>>, %arg16: memref<2x32xf32, #tpu.memory_space<vmem>>, %arg17: memref<2x16xf32, #tpu.memory_space<vmem>>) attributes {dimension_semantics = [#tpu.dimension_semantics<arbitrary>], iteration_bounds = array<i64: 1>, scalar_prefetch = 0 : i64, scratch_operands = 0 : i64, tpu.core_type = #tpu.core_type<tc>, window_params = [{pipeline_mode = #tpu.pipeline_mode<synchronous>, transform_indices = @transform_0, window_bounds = array<i64: 2, 32>}, {pipeline_mode = #tpu.pipeline_mode<synchronous>, transform_indices = @transform_1, window_bounds = array<i64: 1, 32>}, {pipeline_mode = #tpu.pipeline_mode<synchronous>, transform_indices = @transform_2, window_bounds = array<i64: 1, 32>}, {pipeline_mode = #tpu.pipeline_mode<synchronous>, transform_indices = @transform_3, window_bounds = array<i64: 32, 32>}, {pipeline_mode = #tpu.pipeline_mode<synchronous>, transform_indices = @transform_4, window_bounds = array<i64: 1, 32>}, {pipeline_mode = #tpu.pipeline_mode<synchronous>, transform_indices = @transform_5, window_bounds = array<i64: 32, 128>}, {pipeline_mode = #tpu.pipeline_mode<synchronous>, transform_indices = @transform_6, window_bounds = array<i64: 1, 128>}, {pipeline_mode = #tpu.pipeline_mode<synchronous>, transform_indices = @transform_7, window_bounds = array<i64: 128, 128>}, {pipeline_mode = #tpu.pipeline_mode<synchronous>, transform_indices = @transform_8, window_bounds = array<i64: 1, 128>}, {pipeline_mode = #tpu.pipeline_mode<synchronous>, transform_indices = @transform_9, window_bounds = array<i64: 128, 128>}, {pipeline_mode = #tpu.pipeline_mode<synchronous>, transform_indices = @transform_10, window_bounds = array<i64: 1, 128>}, {pipeline_mode = #tpu.pipeline_mode<synchronous>, transform_indices = @transform_11, window_bounds = array<i64: 1, 128>}, {pipeline_mode = #tpu.pipeline_mode<synchronous>, transform_indices = @transform_12, window_bounds = array<i64: 1, 128>}, {pipeline_mode = #tpu.pipeline_mode<synchronous>, transform_indices = @transform_13, window_bounds = array<i64: 128, 16>}, {pipeline_mode = #tpu.pipeline_mode<synchronous>, transform_indices = @transform_14, window_bounds = array<i64: 1, 16>}, {pipeline_mode = #tpu.pipeline_mode<synchronous>, transform_indices = @transform_15, window_bounds = array<i64: 2, 32>}, {pipeline_mode = #tpu.pipeline_mode<synchronous>, transform_indices = @transform_16, window_bounds = array<i64: 2, 16>}]} {
    %c0 = arith.constant 0 : index
    %c0_0 = arith.constant 0 : index
    %0 = vector.load %arg1[%c0, %c0_0] : memref<2x32xf32, #tpu.memory_space<vmem>>, vector<2x32xf32>
    %c0_1 = arith.constant 0 : index
    %c0_2 = arith.constant 0 : index
    %1 = vector.load %arg2[%c0_1, %c0_2] : memref<1x32xf32, #tpu.memory_space<vmem>>, vector<1x32xf32>
    %c0_3 = arith.constant 0 : index
    %c0_4 = arith.constant 0 : index
    %2 = vector.load %arg3[%c0_3, %c0_4] : memref<1x32xf32, #tpu.memory_space<vmem>>, vector<1x32xf32>
    %cst = arith.constant dense<0.000000e+00> : vector<2xf32>
    %3 = vector.multi_reduction <add>, %0, %cst [1] : vector<2x32xf32> to vector<2xf32>
    %4 = vector.shape_cast %3 : vector<2xf32> to vector<2x1xf32>
    %cst_5 = arith.constant 3.200000e+01 : f32
    %5 = vector.broadcast %cst_5 : f32 to vector<2x1xf32>
    %6 = arith.divf %4, %5 : vector<2x1xf32>
    %7 = vector.broadcast %6 : vector<2x1xf32> to vector<2x32xf32>
    %8 = arith.subf %0, %7 : vector<2x32xf32>
    %9 = arith.mulf %8, %8 : vector<2x32xf32>
    %cst_6 = arith.constant dense<0.000000e+00> : vector<2xf32>
    %10 = vector.multi_reduction <add>, %9, %cst_6 [1] : vector<2x32xf32> to vector<2xf32>
    %11 = vector.shape_cast %10 : vector<2xf32> to vector<2x1xf32>
    %cst_7 = arith.constant 3.200000e+01 : f32
    %12 = vector.broadcast %cst_7 : f32 to vector<2x1xf32>
    %13 = arith.divf %11, %12 : vector<2x1xf32>
    %14 = vector.broadcast %6 : vector<2x1xf32> to vector<2x32xf32>
    %15 = arith.subf %0, %14 : vector<2x32xf32>
    %cst_8 = arith.constant 9.99999974E-6 : f32
    %16 = vector.broadcast %cst_8 : f32 to vector<2x1xf32>
    %17 = arith.addf %13, %16 : vector<2x1xf32>
    %18 = math.rsqrt %17 : vector<2x1xf32>
    %19 = vector.broadcast %18 : vector<2x1xf32> to vector<2x32xf32>
    %20 = arith.mulf %15, %19 : vector<2x32xf32>
    %21 = vector.broadcast %1 : vector<1x32xf32> to vector<2x32xf32>
    %22 = arith.mulf %20, %21 : vector<2x32xf32>
    %23 = vector.broadcast %2 : vector<1x32xf32> to vector<2x32xf32>
    %24 = arith.addf %22, %23 : vector<2x32xf32>
    %25 = arith.truncf %24 : vector<2x32xf32> to vector<2x32xbf16>
    %c0_9 = arith.constant 0 : index
    %c0_10 = arith.constant 0 : index
    %26 = vector.load %arg4[%c0_9, %c0_10] : memref<32x32xbf16, #tpu.memory_space<vmem>>, vector<32x32xbf16>
    %cst_11 = arith.constant dense<0.000000e+00> : vector<2x32xf32>
    %27 = tpu.matmul %25, %26, %cst_11 {dimension_numbers = #tpu.dot_dimension_numbers<[1], [0], [0], [1], [0, 0, 1, 1], [], []>} : vector<2x32xbf16>, vector<32x32xbf16>, vector<2x32xf32> -> vector<2x32xf32>
    %c0_12 = arith.constant 0 : index
    %c0_13 = arith.constant 0 : index
    %28 = vector.load %arg5[%c0_12, %c0_13] : memref<1x32xf32, #tpu.memory_space<vmem>>, vector<1x32xf32>
    %29 = vector.broadcast %28 : vector<1x32xf32> to vector<2x32xf32>
    %30 = arith.addf %27, %29 : vector<2x32xf32>
    %c0_14 = arith.constant 0 : index
    %c0_15 = arith.constant 0 : index
    %31 = vector.load %arg16[%c0_14, %c0_15] : memref<2x32xf32, #tpu.memory_space<vmem>>, vector<2x32xf32>
    tpu.vector_store %arg16[%c0_14, %c0_15], %30 {strides = array<i32>} : memref<2x32xf32, #tpu.memory_space<vmem>>, vector<2x32xf32>,
    %32 = arith.truncf %30 : vector<2x32xf32> to vector<2x32xbf16>
    %c0_16 = arith.constant 0 : index
    %c0_17 = arith.constant 0 : index
    %33 = vector.load %arg6[%c0_16, %c0_17] : memref<32x128xbf16, #tpu.memory_space<vmem>>, vector<32x128xbf16>
    %cst_18 = arith.constant dense<0.000000e+00> : vector<2x128xf32>
    %34 = tpu.matmul %32, %33, %cst_18 {dimension_numbers = #tpu.dot_dimension_numbers<[1], [0], [0], [1], [0, 0, 1, 1], [], []>} : vector<2x32xbf16>, vector<32x128xbf16>, vector<2x128xf32> -> vector<2x128xf32>
    %c0_19 = arith.constant 0 : index
    %c0_20 = arith.constant 0 : index
    %35 = vector.load %arg7[%c0_19, %c0_20] : memref<1x128xf32, #tpu.memory_space<vmem>>, vector<1x128xf32>
    %36 = vector.broadcast %35 : vector<1x128xf32> to vector<2x128xf32>
    %37 = arith.addf %34, %36 : vector<2x128xf32>
    %cst_21 = arith.constant 5.000000e-01 : f32
    %38 = vector.broadcast %cst_21 : f32 to vector<2x128xf32>
    %39 = arith.mulf %38, %37 : vector<2x128xf32>
    %cst_22 = arith.constant 0.707106769 : f32
    %40 = vector.broadcast %cst_22 : f32 to vector<2x128xf32>
    %41 = arith.mulf %37, %40 : vector<2x128xf32>
    %42 = math.erf %41 : vector<2x128xf32>
    %cst_23 = arith.constant 1.000000e+00 : f32
    %43 = vector.broadcast %cst_23 : f32 to vector<2x128xf32>
    %44 = arith.addf %43, %42 : vector<2x128xf32>
    %45 = arith.mulf %39, %44 : vector<2x128xf32>
    %46 = arith.truncf %45 : vector<2x128xf32> to vector<2x128xbf16>
    %c0_24 = arith.constant 0 : index
    %c0_25 = arith.constant 0 : index
    %47 = vector.load %arg8[%c0_24, %c0_25] : memref<128x128xbf16, #tpu.memory_space<vmem>>, vector<128x128xbf16>
    %cst_26 = arith.constant dense<0.000000e+00> : vector<2x128xf32>
    %48 = tpu.matmul %46, %47, %cst_26 {dimension_numbers = #tpu.dot_dimension_numbers<[1], [0], [0], [1], [0, 0, 1, 1], [], []>} : vector<2x128xbf16>, vector<128x128xbf16>, vector<2x128xf32> -> vector<2x128xf32>
    %c0_27 = arith.constant 0 : index
    %c0_28 = arith.constant 0 : index
    %49 = vector.load %arg9[%c0_27, %c0_28] : memref<1x128xf32, #tpu.memory_space<vmem>>, vector<1x128xf32>
    %50 = vector.broadcast %49 : vector<1x128xf32> to vector<2x128xf32>
    %51 = arith.addf %48, %50 : vector<2x128xf32>
    %cst_29 = arith.constant 5.000000e-01 : f32
    %52 = vector.broadcast %cst_29 : f32 to vector<2x128xf32>
    %53 = arith.mulf %52, %51 : vector<2x128xf32>
    %cst_30 = arith.constant 0.707106769 : f32
    %54 = vector.broadcast %cst_30 : f32 to vector<2x128xf32>
    %55 = arith.mulf %51, %54 : vector<2x128xf32>
    %56 = math.erf %55 : vector<2x128xf32>
    %cst_31 = arith.constant 1.000000e+00 : f32
    %57 = vector.broadcast %cst_31 : f32 to vector<2x128xf32>
    %58 = arith.addf %57, %56 : vector<2x128xf32>
    %59 = arith.mulf %53, %58 : vector<2x128xf32>
    %60 = arith.truncf %59 : vector<2x128xf32> to vector<2x128xbf16>
    %c0_32 = arith.constant 0 : index
    %c0_33 = arith.constant 0 : index
    %61 = vector.load %arg10[%c0_32, %c0_33] : memref<128x128xbf16, #tpu.memory_space<vmem>>, vector<128x128xbf16>
    %cst_34 = arith.constant dense<0.000000e+00> : vector<2x128xf32>
    %62 = tpu.matmul %60, %61, %cst_34 {dimension_numbers = #tpu.dot_dimension_numbers<[1], [0], [0], [1], [0, 0, 1, 1], [], []>} : vector<2x128xbf16>, vector<128x128xbf16>, vector<2x128xf32> -> vector<2x128xf32>
    %c0_35 = arith.constant 0 : index
    %c0_36 = arith.constant 0 : index
    %63 = vector.load %arg11[%c0_35, %c0_36] : memref<1x128xf32, #tpu.memory_space<vmem>>, vector<1x128xf32>
    %64 = vector.broadcast %63 : vector<1x128xf32> to vector<2x128xf32>
    %65 = arith.addf %62, %64 : vector<2x128xf32>
    %cst_37 = arith.constant 5.000000e-01 : f32
    %66 = vector.broadcast %cst_37 : f32 to vector<2x128xf32>
    %67 = arith.mulf %66, %65 : vector<2x128xf32>
    %cst_38 = arith.constant 0.707106769 : f32
    %68 = vector.broadcast %cst_38 : f32 to vector<2x128xf32>
    %69 = arith.mulf %65, %68 : vector<2x128xf32>
    %70 = math.erf %69 : vector<2x128xf32>
    %cst_39 = arith.constant 1.000000e+00 : f32
    %71 = vector.broadcast %cst_39 : f32 to vector<2x128xf32>
    %72 = arith.addf %71, %70 : vector<2x128xf32>
    %73 = arith.mulf %67, %72 : vector<2x128xf32>
    %c0_40 = arith.constant 0 : index
    %c0_41 = arith.constant 0 : index
    %74 = vector.load %arg12[%c0_40, %c0_41] : memref<1x128xf32, #tpu.memory_space<vmem>>, vector<1x128xf32>
    %c0_42 = arith.constant 0 : index
    %c0_43 = arith.constant 0 : index
    %75 = vector.load %arg13[%c0_42, %c0_43] : memref<1x128xf32, #tpu.memory_space<vmem>>, vector<1x128xf32>
    %cst_44 = arith.constant dense<0.000000e+00> : vector<2xf32>
    %76 = vector.multi_reduction <add>, %73, %cst_44 [1] : vector<2x128xf32> to vector<2xf32>
    %77 = vector.shape_cast %76 : vector<2xf32> to vector<2x1xf32>
    %cst_45 = arith.constant 1.280000e+02 : f32
    %78 = vector.broadcast %cst_45 : f32 to vector<2x1xf32>
    %79 = arith.divf %77, %78 : vector<2x1xf32>
    %80 = vector.broadcast %79 : vector<2x1xf32> to vector<2x128xf32>
    %81 = arith.subf %73, %80 : vector<2x128xf32>
    %82 = arith.mulf %81, %81 : vector<2x128xf32>
    %cst_46 = arith.constant dense<0.000000e+00> : vector<2xf32>
    %83 = vector.multi_reduction <add>, %82, %cst_46 [1] : vector<2x128xf32> to vector<2xf32>
    %84 = vector.shape_cast %83 : vector<2xf32> to vector<2x1xf32>
    %cst_47 = arith.constant 1.280000e+02 : f32
    %85 = vector.broadcast %cst_47 : f32 to vector<2x1xf32>
    %86 = arith.divf %84, %85 : vector<2x1xf32>
    %87 = vector.broadcast %79 : vector<2x1xf32> to vector<2x128xf32>
    %88 = arith.subf %73, %87 : vector<2x128xf32>
    %cst_48 = arith.constant 9.99999974E-6 : f32
    %89 = vector.broadcast %cst_48 : f32 to vector<2x1xf32>
    %90 = arith.addf %86, %89 : vector<2x1xf32>
    %91 = math.rsqrt %90 : vector<2x1xf32>
    %92 = vector.broadcast %91 : vector<2x1xf32> to vector<2x128xf32>
    %93 = arith.mulf %88, %92 : vector<2x128xf32>
    %94 = vector.broadcast %74 : vector<1x128xf32> to vector<2x128xf32>
    %95 = arith.mulf %93, %94 : vector<2x128xf32>
    %96 = vector.broadcast %75 : vector<1x128xf32> to vector<2x128xf32>
    %97 = arith.addf %95, %96 : vector<2x128xf32>
    %98 = arith.truncf %97 : vector<2x128xf32> to vector<2x128xbf16>
    %c0_49 = arith.constant 0 : index
    %c0_50 = arith.constant 0 : index
    %99 = vector.load %arg14[%c0_49, %c0_50] : memref<128x16xbf16, #tpu.memory_space<vmem>>, vector<128x16xbf16>
    %cst_51 = arith.constant dense<0.000000e+00> : vector<2x16xf32>
    %100 = tpu.matmul %98, %99, %cst_51 {dimension_numbers = #tpu.dot_dimension_numbers<[1], [0], [0], [1], [0, 0, 1, 1], [], []>} : vector<2x128xbf16>, vector<128x16xbf16>, vector<2x16xf32> -> vector<2x16xf32>
    %c0_52 = arith.constant 0 : index
    %c0_53 = arith.constant 0 : index
    %101 = vector.load %arg15[%c0_52, %c0_53] : memref<1x16xf32, #tpu.memory_space<vmem>>, vector<1x16xf32>
    %102 = vector.broadcast %101 : vector<1x16xf32> to vector<2x16xf32>
    %103 = arith.addf %100, %102 : vector<2x16xf32>
    %c0_54 = arith.constant 0 : index
    %c0_55 = arith.constant 0 : index
    %104 = vector.load %arg17[%c0_54, %c0_55] : memref<2x16xf32, #tpu.memory_space<vmem>>, vector<2x16xf32>
    tpu.vector_store %arg17[%c0_54, %c0_55], %103 {strides = array<i32>} : memref<2x16xf32, #tpu.memory_space<vmem>>, vector<2x16xf32>,
    return
  }
  func.func @transform_0(%arg0: i32) -> (i32, i32) {
    %c0_i32 = arith.constant 0 : i32
    %c0_i32_0 = arith.constant 0 : i32
    %c0_i32_1 = arith.constant 0 : i32
    return %c0_i32, %c0_i32_0 : i32, i32
  }
  func.func @transform_1(%arg0: i32) -> (i32, i32) {
    %c0_i32 = arith.constant 0 : i32
    %c0_i32_0 = arith.constant 0 : i32
    %c0_i32_1 = arith.constant 0 : i32
    return %c0_i32, %c0_i32_0 : i32, i32
  }
  func.func @transform_2(%arg0: i32) -> (i32, i32) {
    %c0_i32 = arith.constant 0 : i32
    %c0_i32_0 = arith.constant 0 : i32
    %c0_i32_1 = arith.constant 0 : i32
    return %c0_i32, %c0_i32_0 : i32, i32
  }
  func.func @transform_3(%arg0: i32) -> (i32, i32) {
    %c0_i32 = arith.constant 0 : i32
    %c0_i32_0 = arith.constant 0 : i32
    %c0_i32_1 = arith.constant 0 : i32
    return %c0_i32, %c0_i32_0 : i32, i32
  }
  func.func @transform_4(%arg0: i32) -> (i32, i32) {
    %c0_i32 = arith.constant 0 : i32
    %c0_i32_0 = arith.constant 0 : i32
    %c0_i32_1 = arith.constant 0 : i32
    return %c0_i32, %c0_i32_0 : i32, i32
  }
  func.func @transform_5(%arg0: i32) -> (i32, i32) {
    %c0_i32 = arith.constant 0 : i32
    %c0_i32_0 = arith.constant 0 : i32
    %c0_i32_1 = arith.constant 0 : i32
    return %c0_i32, %c0_i32_0 : i32, i32
  }
  func.func @transform_6(%arg0: i32) -> (i32, i32) {
    %c0_i32 = arith.constant 0 : i32
    %c0_i32_0 = arith.constant 0 : i32
    %c0_i32_1 = arith.constant 0 : i32
    return %c0_i32, %c0_i32_0 : i32, i32
  }
  func.func @transform_7(%arg0: i32) -> (i32, i32) {
    %c0_i32 = arith.constant 0 : i32
    %c0_i32_0 = arith.constant 0 : i32
    %c0_i32_1 = arith.constant 0 : i32
    return %c0_i32, %c0_i32_0 : i32, i32
  }
  func.func @transform_8(%arg0: i32) -> (i32, i32) {
    %c0_i32 = arith.constant 0 : i32
    %c0_i32_0 = arith.constant 0 : i32
    %c0_i32_1 = arith.constant 0 : i32
    return %c0_i32, %c0_i32_0 : i32, i32
  }
  func.func @transform_9(%arg0: i32) -> (i32, i32) {
    %c0_i32 = arith.constant 0 : i32
    %c0_i32_0 = arith.constant 0 : i32
    %c0_i32_1 = arith.constant 0 : i32
    return %c0_i32, %c0_i32_0 : i32, i32
  }
  func.func @transform_10(%arg0: i32) -> (i32, i32) {
    %c0_i32 = arith.constant 0 : i32
    %c0_i32_0 = arith.constant 0 : i32
    %c0_i32_1 = arith.constant 0 : i32
    return %c0_i32, %c0_i32_0 : i32, i32
  }
  func.func @transform_11(%arg0: i32) -> (i32, i32) {
    %c0_i32 = arith.constant 0 : i32
    %c0_i32_0 = arith.constant 0 : i32
    %c0_i32_1 = arith.constant 0 : i32
    return %c0_i32, %c0_i32_0 : i32, i32
  }
  func.func @transform_12(%arg0: i32) -> (i32, i32) {
    %c0_i32 = arith.constant 0 : i32
    %c0_i32_0 = arith.constant 0 : i32
    %c0_i32_1 = arith.constant 0 : i32
    return %c0_i32, %c0_i32_0 : i32, i32
  }
  func.func @transform_13(%arg0: i32) -> (i32, i32) {
    %c0_i32 = arith.constant 0 : i32
    %c0_i32_0 = arith.constant 0 : i32
    %c0_i32_1 = arith.constant 0 : i32
    return %c0_i32, %c0_i32_0 : i32, i32
  }
  func.func @transform_14(%arg0: i32) -> (i32, i32) {
    %c0_i32 = arith.constant 0 : i32
    %c0_i32_0 = arith.constant 0 : i32
    %c0_i32_1 = arith.constant 0 : i32
    return %c0_i32, %c0_i32_0 : i32, i32
  }
  func.func @transform_15(%arg0: i32) -> (i32, i32) {
    %c0_i32 = arith.constant 0 : i32
    %c0_i32_0 = arith.constant 0 : i32
    %c0_i32_1 = arith.constant 0 : i32
    return %c0_i32, %c0_i32_0 : i32, i32
  }
  func.func @transform_16(%arg0: i32) -> (i32, i32) {
    %c0_i32 = arith.constant 0 : i32
    %c0_i32_0 = arith.constant 0 : i32
    %c0_i32_1 = arith.constant 0 : i32
    return %c0_i32, %c0_i32_0 : i32, i32
  }
}

</mosaic_0001>

<llo_original>
// kernel: graph_transformer_forward.4
$region0: #{graph_transformer_forward.4}
  #allocation0 [shape = 'u32[]', space=smem, size = 0x4, offset = 0x4, fixed_abs, tag = 'smem constant byte address 0x4 - core index']
  #allocation1 [shape = 'u32[144,128]{1,0:T(1,128)}', space=vmem, size = 0x12000, scoped, tag = 'internal scratch']
  %s0 = inlined_call_operand.vmem [shape: f32[16,8], index: 0, kind: input, shape index: {}]
  %s1 = inlined_call_operand.vmem [shape: f32[16,32], index: 1, kind: input, shape index: {}]
  %s2 = inlined_call_operand.vmem [shape: bf16[8,64], index: 2, kind: input, shape index: {}]
  %s3 = inlined_call_operand.vmem [shape: f32[1,64], index: 3, kind: input, shape index: {}]
  %s4 = inlined_call_operand.vmem [shape: bf16[64,32], index: 4, kind: input, shape index: {}]
  %s5 = inlined_call_operand.vmem [shape: f32[1,32], index: 5, kind: input, shape index: {}]
  %s6 = inlined_call_operand.vmem [shape: bf16[32,32], index: 6, kind: input, shape index: {}]
  %s7 = inlined_call_operand.vmem [shape: f32[1,32], index: 7, kind: input, shape index: {}]
  %s8 = inlined_call_operand.vmem [shape: f32[16,32], index: 8, kind: output, shape index: {}]
  %s9 = sld [smem:[#allocation0]]
  $region42: #{graph_transformer_forward.4} parent=0
    _
  %s11 = ssub.s32 1, %s9
  %s12 = scalar_select 0, %s11, %s9
  // Predicated region
  $region2: #{graph_transformer_forward.4} parent=0 // pred_check
    _
  $region3: #{graph_transformer_forward.4} parent=0 // pred_check_branch
    %14 = sbr.rel (0) target = $region5
  $region4: #{graph_transformer_forward.4} parent=0 // pred_region
    _
  $region5: #{graph_transformer_forward.4} parent=0 // pred_fallthru
    _
  // Predicated region
  $region6: #{graph_transformer_forward.4} parent=0 // pred_check
    _
  $region7: #{graph_transformer_forward.4} parent=0 // pred_check_branch
    %16 = sbr.rel (0) target = $region9
  $region8: #{graph_transformer_forward.4} parent=0 // pred_region
    _
  $region9: #{graph_transformer_forward.4} parent=0 // pred_fallthru
    _
  // Predicated region
  $region10: #{graph_transformer_forward.4} parent=0 // pred_check
    _
  $region11: #{graph_transformer_forward.4} parent=0 // pred_check_branch
    %18 = sbr.rel (0) target = $region13
  $region12: #{graph_transformer_forward.4} parent=0 // pred_region
    _
  $region13: #{graph_transformer_forward.4} parent=0 // pred_fallthru
    _
  // Predicated region
  $region14: #{graph_transformer_forward.4} parent=0 // pred_check
    _
  $region15: #{graph_transformer_forward.4} parent=0 // pred_check_branch
    %20 = sbr.rel (0) target = $region17
  $region16: #{graph_transformer_forward.4} parent=0 // pred_region
    _
  $region17: #{graph_transformer_forward.4} parent=0 // pred_fallthru
    _
  // Predicated region
  $region18: #{graph_transformer_forward.4} parent=0 // pred_check
    _
  $region19: #{graph_transformer_forward.4} parent=0 // pred_check_branch
    %22 = sbr.rel (0) target = $region21
  $region20: #{graph_transformer_forward.4} parent=0 // pred_region
    _
  $region21: #{graph_transformer_forward.4} parent=0 // pred_fallthru
    _
  // Predicated region
  $region22: #{graph_transformer_forward.4} parent=0 // pred_check
    _
  $region23: #{graph_transformer_forward.4} parent=0 // pred_check_branch
    %24 = sbr.rel (0) target = $region25
  $region24: #{graph_transformer_forward.4} parent=0 // pred_region
    _
  $region25: #{graph_transformer_forward.4} parent=0 // pred_fallthru
    _
  // Predicated region
  $region26: #{graph_transformer_forward.4} parent=0 // pred_check
    _
  $region27: #{graph_transformer_forward.4} parent=0 // pred_check_branch
    %26 = sbr.rel (0) target = $region29
  $region28: #{graph_transformer_forward.4} parent=0 // pred_region
    _
  $region29: #{graph_transformer_forward.4} parent=0 // pred_fallthru
    _
  // Predicated region
  $region30: #{graph_transformer_forward.4} parent=0 // pred_check
    _
  $region31: #{graph_transformer_forward.4} parent=0 // pred_check_branch
    %28 = sbr.rel (0) target = $region33
  $region32: #{graph_transformer_forward.4} parent=0 // pred_region
    _
  $region33: #{graph_transformer_forward.4} parent=0 // pred_fallthru
    _
  %v30 = vld [vmem:[%s0] sm:$0xff]
  %v31 = vld [vmem:[%s0 + $0x8] sm:$0xff]
  %v32 = vpack.c.bf16 %v31, %v30
  %v33 = vld [vmem:[%s2] sm:$0xf]
  %v34 = vld [vmem:[%s3] sm:$0x1]
  %v36 = vlaneseq
  %v37 = vshrl.u32 %v36, 7
  %v38 = vsub.s32 0, %v37
  %v39 = vrot.slane %v34, %v38
  %vm41 = vcmask 64512
  %v43 = vsel %vm41, %v32, 0
  %vm45 = vcmask 1043456
  %v47 = vsel %vm45, %v33, 0
  %49 = vmatprep.subr.bf16.mxu0 0
  %50 = vmatpush1.bf16.msra.mxu0 %v47
  %51 = vmatprep.subr.bf16.mxu0 0
  %52 = vmatpush1.bf16.msra.mxu0 0
  %53 = vmatprep.subr.bf16.mxu0 0
  %54 = vmatpush1.bf16.msra.mxu0 0
  %55 = vmatprep.subr.bf16.mxu0 0
  %56 = vmatpush1.bf16.msra.mxu0 0
  %57 = vmatprep.subr.bf16.mxu0 0
  %58 = vmatpush1.bf16.msra.mxu0 0
  %59 = vmatprep.subr.bf16.mxu0 0
  %60 = vmatpush1.bf16.msra.mxu0 0
  %61 = vmatprep.subr.bf16.mxu0 0
  %62 = vmatpush1.bf16.msra.mxu0 0
  %63 = vmatprep.subr.bf16.mxu0 0
  %64 = vmatpush1.bf16.msra.mxu0 0
  %65 = vmatprep.subr.bf16.mxu0 0
  %66 = vmatpush1.bf16.msra.mxu0 0
  %67 = vmatprep.subr.bf16.mxu0 0
  %68 = vmatpush1.bf16.msra.mxu0 0
  %69 = vmatprep.subr.bf16.mxu0 0
  %70 = vmatpush1.bf16.msra.mxu0 0
  %71 = vmatprep.subr.bf16.mxu0 0
  %72 = vmatpush1.bf16.msra.mxu0 0
  %73 = vmatprep.subr.bf16.mxu0 0
  %74 = vmatpush1.bf16.msra.mxu0 0
  %75 = vmatprep.subr.bf16.mxu0 0
  %76 = vmatpush1.bf16.msra.mxu0 0
  %77 = vmatprep.subr.bf16.mxu0 0
  %78 = vmatpush1.bf16.msra.mxu0 0
  %79 = vmatprep.subr.bf16.mxu0 0
  %80 = vmatpush1.bf16.msra.mxu0 0
  %81 = vmatprep.mubr.bf16.mxu0 0
  %82 = vmatmul.mubr.bf16.gmra.mrb[0].mxu0 %v43
  %v83 = vpop.f32.mrb[0].mxu0
  %v84 = vadd.f32 %v39, %v83
  %v85 = vpop.f32.mrb[0].mxu0
  %v86 = vpop.f32.mrb[0].mxu0
  %v87 = vadd.f32 %v39, %v86
  %v88 = vpop.f32.mrb[0].mxu0
  %89 = vdwg.mxu0
  %v90 = vmax.f32 %v84, 0.0
  %v91 = vmax.f32 %v87, 0.0
  %v92 = vpack.c.bf16 %v91, %v90
  %v93 = vld [vmem:[%s4] sm:$0xf]
  %v94 = vld [vmem:[%s4 + $0x4] sm:$0xf]
  %v95 = vld [vmem:[%s4 + $0x8] sm:$0xf]
  %v96 = vld [vmem:[%s4 + $0xc] sm:$0xf]
  %v97 = vld [vmem:[%s4 + $0x10] sm:$0xf]
  %v98 = vld [vmem:[%s4 + $0x14] sm:$0xf]
  %v99 = vld [vmem:[%s4 + $0x18] sm:$0xf]
  %v100 = vld [vmem:[%s4 + $0x1c] sm:$0xf]
  %v101 = vld [vmem:[%s5] sm:$0x1]
  %v103 = vlaneseq
  %v104 = vshrl.u32 %v103, 7
  %v105 = vsub.s32 0, %v104
  %v106 = vrot.slane %v101, %v105
  %v116 = vunpack.c.l.b16 %v93
  %v117 = vunpack.c.l.b16 %v94
  %v118 = vunpack.c.l.b16 %v95
  %v119 = vunpack.c.l.b16 %v96
  %v120 = vunpack.c.l.b16 %v97
  %v121 = vunpack.c.l.b16 %v98
  %v122 = vunpack.c.l.b16 %v99
  %v123 = vunpack.c.l.b16 %v100
  %v124 = vpack.c.b16 %v117, %v116
  %v125 = vpack.c.b16 %v119, %v118
  %v126 = vpack.c.b16 %v121, %v120
  %v127 = vpack.c.b16 %v123, %v122
  %vm132 = vcmask 523264
  %v134 = vsel %vm132, %v92, 0
  %136 = vmatprep.subr.bf16.mxu0 0
  %137 = vmatpush1.bf16.msra.mxu0 %v124
  %138 = vmatprep.subr.bf16.mxu0 0
  %139 = vmatpush1.bf16.msra.mxu0 %v125
  %140 = vmatprep.subr.bf16.mxu0 0
  %141 = vmatpush1.bf16.msra.mxu0 %v126
  %142 = vmatprep.subr.bf16.mxu0 0
  %143 = vmatpush1.bf16.msra.mxu0 %v127
  %144 = vmatprep.subr.bf16.mxu0 0
  %145 = vmatpush1.bf16.msra.mxu0 0
  %146 = vmatprep.subr.bf16.mxu0 0
  %147 = vmatpush1.bf16.msra.mxu0 0
  %148 = vmatprep.subr.bf16.mxu0 0
  %149 = vmatpush1.bf16.msra.mxu0 0
  %150 = vmatprep.subr.bf16.mxu0 0
  %151 = vmatpush1.bf16.msra.mxu0 0
  %152 = vmatprep.subr.bf16.mxu0 0
  %153 = vmatpush1.bf16.msra.mxu0 0
  %154 = vmatprep.subr.bf16.mxu0 0
  %155 = vmatpush1.bf16.msra.mxu0 0
  %156 = vmatprep.subr.bf16.mxu0 0
  %157 = vmatpush1.bf16.msra.mxu0 0
  %158 = vmatprep.subr.bf16.mxu0 0
  %159 = vmatpush1.bf16.msra.mxu0 0
  %160 = vmatprep.subr.bf16.mxu0 0
  %161 = vmatpush1.bf16.msra.mxu0 0
  %162 = vmatprep.subr.bf16.mxu0 0
  %163 = vmatpush1.bf16.msra.mxu0 0
  %164 = vmatprep.subr.bf16.mxu0 0
  %165 = vmatpush1.bf16.msra.mxu0 0
  %166 = vmatprep.subr.bf16.mxu0 0
  %167 = vmatpush1.bf16.msra.mxu0 0
  %168 = vmatprep.mubr.bf16.mxu0 0
  %169 = vmatmul.mubr.bf16.gmra.mrb[0].mxu0 %v134
  %v170 = vpop.f32.mrb[0].mxu0
  %v171 = vadd.f32 %v106, %v170
  %v172 = vpop.f32.mrb[0].mxu0
  %v173 = vpop.f32.mrb[0].mxu0
  %v174 = vadd.f32 %v106, %v173
  %v175 = vpop.f32.mrb[0].mxu0
  %176 = vdwg.mxu0
  %v177 = vld [vmem:[%s1] sm:$0xff]
  %v178 = vld [vmem:[%s1 + $0x8] sm:$0xff]
  %v179 = vpack.c.bf16 %v178, %v177
  %v180 = vld [vmem:[%s6] sm:$0xf]
  %v181 = vld [vmem:[%s6 + $0x4] sm:$0xf]
  %v182 = vld [vmem:[%s6 + $0x8] sm:$0xf]
  %v183 = vld [vmem:[%s6 + $0xc] sm:$0xf]
  %v184 = vld [vmem:[%s7] sm:$0x1]
  %v186 = vlaneseq
  %v187 = vshrl.u32 %v186, 7
  %v188 = vsub.s32 0, %v187
  %v189 = vrot.slane %v184, %v188
  %v195 = vunpack.c.l.b16 %v180
  %v196 = vunpack.c.l.b16 %v181
  %v197 = vunpack.c.l.b16 %v182
  %v198 = vunpack.c.l.b16 %v183
  %v199 = vpack.c.b16 %v196, %v195
  %v200 = vpack.c.b16 %v198, %v197
  %vm203 = vcmask 261120
  %v205 = vsel %vm203, %v179, 0
  %207 = vmatprep.subr.bf16.mxu0 0
  %208 = vmatpush1.bf16.msra.mxu0 %v199
  %209 = vmatprep.subr.bf16.mxu0 0
  %210 = vmatpush1.bf16.msra.mxu0 %v200
  %211 = vmatprep.subr.bf16.mxu0 0
  %212 = vmatpush1.bf16.msra.mxu0 0
  %213 = vmatprep.subr.bf16.mxu0 0
  %214 = vmatpush1.bf16.msra.mxu0 0
  %215 = vmatprep.subr.bf16.mxu0 0
  %216 = vmatpush1.bf16.msra.mxu0 0
  %217 = vmatprep.subr.bf16.mxu0 0
  %218 = vmatpush1.bf16.msra.mxu0 0
  %219 = vmatprep.subr.bf16.mxu0 0
  %220 = vmatpush1.bf16.msra.mxu0 0
  %221 = vmatprep.subr.bf16.mxu0 0
  %222 = vmatpush1.bf16.msra.mxu0 0
  %223 = vmatprep.subr.bf16.mxu0 0
  %224 = vmatpush1.bf16.msra.mxu0 0
  %225 = vmatprep.subr.bf16.mxu0 0
  %226 = vmatpush1.bf16.msra.mxu0 0
  %227 = vmatprep.subr.bf16.mxu0 0
  %228 = vmatpush1.bf16.msra.mxu0 0
  %229 = vmatprep.subr.bf16.mxu0 0
  %230 = vmatpush1.bf16.msra.mxu0 0
  %231 = vmatprep.subr.bf16.mxu0 0
  %232 = vmatpush1.bf16.msra.mxu0 0
  %233 = vmatprep.subr.bf16.mxu0 0
  %234 = vmatpush1.bf16.msra.mxu0 0
  %235 = vmatprep.subr.bf16.mxu0 0
  %236 = vmatpush1.bf16.msra.mxu0 0
  %237 = vmatprep.subr.bf16.mxu0 0
  %238 = vmatpush1.bf16.msra.mxu0 0
  %239 = vmatprep.mubr.bf16.mxu0 0
  %240 = vmatmul.mubr.bf16.gmra.mrb[0].mxu0 %v205
  %v241 = vpop.f32.mrb[0].mxu0
  %v242 = vadd.f32 %v189, %v241
  %v243 = vpop.f32.mrb[0].mxu0
  %v244 = vpop.f32.mrb[0].mxu0
  %v245 = vadd.f32 %v189, %v244
  %v246 = vpop.f32.mrb[0].mxu0
  %247 = vdwg.mxu0
  %v248 = vadd.f32 %v171, %v242
  %v249 = vadd.f32 %v174, %v245
  %250 = vst.msk [vmem:[%s8] sm:$0xff] %vm203, %v248
  %251 = vst.msk [vmem:[%s8 + $0x8] sm:$0xff] %vm203, %v249
  // Predicated region
  $region34: #{graph_transformer_forward.4} parent=0 // pred_check
    _
  $region35: #{graph_transformer_forward.4} parent=0 // pred_check_branch
    %253 = sbr.rel (0) target = $region37
  $region36: #{graph_transformer_forward.4} parent=0 // pred_region
    _
  $region37: #{graph_transformer_forward.4} parent=0 // pred_fallthru
    _
  // Predicated region
  $region38: #{graph_transformer_forward.4} parent=0 // pred_check
    _
  $region39: #{graph_transformer_forward.4} parent=0 // pred_check_branch
    %255 = sbr.rel (0) target = $region41
  $region40: #{graph_transformer_forward.4} parent=0 // pred_region
    _
  $region41: #{graph_transformer_forward.4} parent=0 // pred_fallthru
    _

// kernel: graph_transformer_forward.5
$region0: #{graph_transformer_forward.5}
  #allocation0 [shape = 'u32[]', space=smem, size = 0x4, offset = 0x4, fixed_abs, tag = 'smem constant byte address 0x4 - core index']
  #allocation1 [shape = 'u32[144,128]{1,0:T(1,128)}', space=vmem, size = 0x12000, scoped, tag = 'internal scratch']
  %s0 = inlined_call_operand.hbm [shape: f32[2,9,32], index: 0, kind: input, shape index: {}]
  %s1 = inlined_call_operand.hbm [shape: bf16[2,9,9], index: 1, kind: input, shape index: {}]
  %s2 = inlined_call_operand.hbm [shape: f32[1,32], index: 2, kind: input, shape index: {}]
  %s3 = inlined_call_operand.hbm [shape: f32[1,32], index: 3, kind: input, shape index: {}]
  %s4 = inlined_call_operand.hbm [shape: bf16[32,512], index: 4, kind: input, shape index: {}]
  %s5 = inlined_call_operand.hbm [shape: f32[1,2], index: 5, kind: input, shape index: {}]
  %s6 = inlined_call_operand.hbm [shape: bf16[128,32], index: 6, kind: input, shape index: {}]
  %s7 = inlined_call_operand.hbm [shape: f32[1,32], index: 7, kind: input, shape index: {}]
  %s8 = inlined_call_operand.hbm [shape: f32[1,32], index: 8, kind: input, shape index: {}]
  %s9 = inlined_call_operand.hbm [shape: f32[1,32], index: 9, kind: input, shape index: {}]
  %s10 = inlined_call_operand.hbm [shape: bf16[32,64], index: 10, kind: input, shape index: {}]
  %s11 = inlined_call_operand.hbm [shape: f32[1,64], index: 11, kind: input, shape index: {}]
  %s12 = inlined_call_operand.hbm [shape: bf16[64,32], index: 12, kind: input, shape index: {}]
  %s13 = inlined_call_operand.hbm [shape: f32[1,32], index: 13, kind: input, shape index: {}]
  %s14 = inlined_call_operand.hbm [shape: bf16[32,64], index: 14, kind: input, shape index: {}]
  %s15 = inlined_call_operand.hbm [shape: f32[1,64], index: 15, kind: input, shape index: {}]
  %s16 = inlined_call_operand.hbm [shape: bf16[64,32], index: 16, kind: input, shape index: {}]
  %s17 = inlined_call_operand.hbm [shape: f32[1,32], index: 17, kind: input, shape index: {}]
  %s18 = inlined_call_operand.hbm [shape: f32[2,9,32], index: 18, kind: output, shape index: {}]
  %s19 = sld [smem:[#allocation0]]
  $region177: #{graph_transformer_forward.5} parent=0
    _
  %s21 = ssub.s32 1, %s19
  %s22 = scalar_select 0, %s21, %s19
  $region1: #{graph_transformer_forward.5} parent=0
    #allocation2 [shape = 'u8[16384]{0}', space=vmem, size = 0x4000, scoped, tag = 'input window, operand 0']
    #allocation3 [shape = 's32[2]{0}', space=sflag, size = 0x8, scoped, tag = 'scoped memory for graph_transformer_forward.5']
    #allocation4 [shape = 's32[2]{0}', space=sflag, size = 0x8, scoped, tag = 'scoped memory for graph_transformer_forward.5']
    #allocation5 [shape = 'u8[8192]{0}', space=vmem, size = 0x2000, scoped, tag = 'input window, operand 1']
    #allocation6 [shape = 's32[2]{0}', space=sflag, size = 0x8, scoped, tag = 'scoped memory for graph_transformer_forward.5']
    #allocation7 [shape = 'u8[512]{0}', space=vmem, size = 0x400, scoped, tag = 'input window, operand 2, single buffered']
    #allocation8 [shape = 'u8[512]{0}', space=vmem, size = 0x400, scoped, tag = 'input window, operand 3, single buffered']
    #allocation9 [shape = 's32[1]{0}', space=sflag, size = 0x4, scoped, tag = 'scoped memory for graph_transformer_forward.5']
    #allocation10 [shape = 'u8[32768]{0}', space=vmem, size = 0x8000, scoped, tag = 'input window, operand 4, single buffered']
    #allocation11 [shape = 'u8[512]{0}', space=vmem, size = 0x400, scoped, tag = 'input window, operand 5, single buffered']
    #allocation12 [shape = 's32[1]{0}', space=sflag, size = 0x4, scoped, tag = 'scoped memory for graph_transformer_forward.5']
    #allocation13 [shape = 'u8[32768]{0}', space=vmem, size = 0x8000, scoped, tag = 'input window, operand 6, single buffered']
    #allocation14 [shape = 'u8[512]{0}', space=vmem, size = 0x400, scoped, tag = 'input window, operand 7, single buffered']
    #allocation15 [shape = 's32[1]{0}', space=sflag, size = 0x4, scoped, tag = 'scoped memory for graph_transformer_forward.5']
    #allocation16 [shape = 'u8[512]{0}', space=vmem, size = 0x400, scoped, tag = 'input window, operand 8, single buffered']
    #allocation17 [shape = 'u8[512]{0}', space=vmem, size = 0x400, scoped, tag = 'input window, operand 9, single buffered']
    #allocation18 [shape = 's32[1]{0}', space=sflag, size = 0x4, scoped, tag = 'scoped memory for graph_transformer_forward.5']
    #allocation19 [shape = 'u8[8192]{0}', space=vmem, size = 0x2000, scoped, tag = 'input window, operand 10, single buffered']
    #allocation20 [shape = 'u8[512]{0}', space=vmem, size = 0x400, scoped, tag = 'input window, operand 11, single buffered']
    #allocation21 [shape = 's32[1]{0}', space=sflag, size = 0x4, scoped, tag = 'scoped memory for graph_transformer_forward.5']
    #allocation22 [shape = 'u8[16384]{0}', space=vmem, size = 0x4000, scoped, tag = 'input window, operand 12, single buffered']
    #allocation23 [shape = 'u8[512]{0}', space=vmem, size = 0x400, scoped, tag = 'input window, operand 13, single buffered']
    #allocation24 [shape = 's32[1]{0}', space=sflag, size = 0x4, scoped, tag = 'scoped memory for graph_transformer_forward.5']
    #allocation25 [shape = 'u8[8192]{0}', space=vmem, size = 0x2000, scoped, tag = 'input window, operand 14, single buffered']
    #allocation26 [shape = 'u8[512]{0}', space=vmem, size = 0x400, scoped, tag = 'input window, operand 15, single buffered']
    #allocation27 [shape = 's32[1]{0}', space=sflag, size = 0x4, scoped, tag = 'scoped memory for graph_transformer_forward.5']
    #allocation28 [shape = 'u8[16384]{0}', space=vmem, size = 0x4000, scoped, tag = 'input window, operand 16, single buffered']
    #allocation29 [shape = 'u8[512]{0}', space=vmem, size = 0x400, scoped, tag = 'input window, operand 17, single buffered']
    #allocation30 [shape = 's32[1]{0}', space=sflag, size = 0x4, scoped, tag = 'scoped memory for graph_transformer_forward.5']
    #allocation31 [shape = 'u8[16384]{0}', space=vmem, size = 0x4000, scoped, tag = 'output window, operand 0']
    %23 = vsyncpa [#allocation3], 0
    %s24 = scalar_lea.sflag [#allocation3], 1
    %25 = vsyncpa %s24, 0
    %26 = vsyncpa [#allocation6], 0
    %s27 = scalar_lea.sflag [#allocation6], 1
    %28 = vsyncpa %s27, 0
    %29 = vsyncpa [#allocation9], 0
    %30 = vsyncpa [#allocation12], 0
    %31 = vsyncpa [#allocation15], 0
    %32 = vsyncpa [#allocation18], 0
    %33 = vsyncpa [#allocation21], 0
    %34 = vsyncpa [#allocation24], 0
    %35 = vsyncpa [#allocation27], 0
    %36 = vsyncpa [#allocation30], 0
    %37 = vsyncpa [#allocation4], 0
    %s38 = scalar_lea.sflag [#allocation4], 1
    %39 = vsyncpa %s38, 0
    loop: start=0, step=1, limit=4
    $region2: #{graph_transformer_forward.5} parent=1 // loop_pre_header
      _
    $region3: #{graph_transformer_forward.5} parent=1 // loop_header
      %s41 = sphi 0, %s45
      %p42 = scmp.ge.s32.totalorder %s41, 4
      %s51 = sphi 0, %s53
      %s54 = sphi 0, %s51
      %s55 = sphi 0, %s54
      %s71 = sphi 0, %s55
      %s77 = sphi 0, %s79
      %s80 = sphi 0, %s77
      %s81 = sphi 0, %s80
      %s97 = sphi 0, %s81
      %s101 = sphi 0, %s101
      %s103 = sphi 0, %s101
      %s104 = sphi 0, %s103
      %s118 = sphi 0, %s104
      %s122 = sphi 0, %s122
      %s124 = sphi 0, %s122
      %s125 = sphi 0, %s124
      %s139 = sphi 0, %s125
      %s143 = sphi 0, %s143
      %s145 = sphi 0, %s143
      %s146 = sphi 0, %s145
      %s160 = sphi 0, %s146
      %s164 = sphi 0, %s164
      %s166 = sphi 0, %s164
      %s167 = sphi 0, %s166
      %s181 = sphi 0, %s167
      %s185 = sphi 0, %s185
      %s187 = sphi 0, %s185
      %s188 = sphi 0, %s187
      %s202 = sphi 0, %s188
      %s206 = sphi 0, %s206
      %s208 = sphi 0, %s206
      %s209 = sphi 0, %s208
      %s223 = sphi 0, %s209
      %s227 = sphi 0, %s227
      %s229 = sphi 0, %s227
      %s230 = sphi 0, %s229
      %s244 = sphi 0, %s230
      %s248 = sphi 0, %s248
      %s250 = sphi 0, %s248
      %s251 = sphi 0, %s250
      %s265 = sphi 0, %s251
      %s269 = sphi 0, %s269
      %s271 = sphi 0, %s269
      %s272 = sphi 0, %s271
      %s286 = sphi 0, %s272
      %s290 = sphi 0, %s290
      %s292 = sphi 0, %s290
      %s293 = sphi 0, %s292
      %s307 = sphi 0, %s293
      %s311 = sphi 0, %s311
      %s313 = sphi 0, %s311
      %s314 = sphi 0, %s313
      %s328 = sphi 0, %s314
      %s332 = sphi 0, %s332
      %s334 = sphi 0, %s332
      %s335 = sphi 0, %s334
      %s349 = sphi 0, %s335
      %s353 = sphi 0, %s353
      %s355 = sphi 0, %s353
      %s356 = sphi 0, %s355
      %s370 = sphi 0, %s356
      %s374 = sphi 0, %s374
      %s376 = sphi 0, %s374
      %s377 = sphi 0, %s376
      %s391 = sphi 0, %s377
      %s395 = sphi 0, %s395
      %s397 = sphi 0, %s395
      %s398 = sphi 0, %s397
      %s412 = sphi 0, %s398
      %s416 = sphi 0, %s416
      %s418 = sphi 0, %s416
      %s419 = sphi 0, %s418
      %s433 = sphi 0, %s419
      %s439 = sphi 0, %s441
      %s442 = sphi 0, %s439
      %s443 = sphi 0, %s442
      %s459 = sphi 0, %s443
    $region4: #{graph_transformer_forward.5} parent=1 // loop_header_branch
      %44 = sbr.rel (%p42) target = $region8
    $region5: #{graph_transformer_forward.5} parent=1 // loop_body
      %s46 = ssub.s32 %s41, 1
      %s47 = ssub.s32 %s41, 2
      %s48 = sadd.s32 %s41, 1
      %s49 = ssub.s32 %s41, %s48
      %p50 = scmp.eq.s32.totalorder %s49, 0
      %s52 = sadd.s32 %s51, 1
      %s53 = scalar_select %p50, %s51, %s52
      %p56 = pneg %p50
      %p57 = scmp.eq.s32.totalorder %s41, 1
      %p58 = por %p56, %p57
      %p59 = scmp.ne.s32.totalorder %s51, %s54
      %p60 = scmp.eq.s32.totalorder %s41, 0
      %p61 = por %p59, %p60
      %p62 = scmp.ne.s32.totalorder %s51, %s54
      %p63 = scmp.eq.s32.totalorder %s46, 1
      %p64 = por %p62, %p63
      %p65 = scmp.ne.s32.totalorder %s54, %s55
      %p66 = scmp.eq.s32.totalorder %s46, 0
      %p67 = por %p65, %p66
      %p68 = scmp.ne.s32.totalorder %s54, %s55
      %p69 = scmp.eq.s32.totalorder %s47, 1
      %p70 = por %p68, %p69
      %p72 = scmp.ne.s32.totalorder %s55, %s71
      %p73 = scmp.eq.s32.totalorder %s47, 0
      %p74 = por %p72, %p73
      %s75 = ssub.s32 %s41, %s48
      %p76 = scmp.eq.s32.totalorder %s75, 0
      %s78 = sadd.s32 %s77, 1
      %s79 = scalar_select %p76, %s77, %s78
      %p82 = pneg %p76
      %p83 = scmp.eq.s32.totalorder %s41, 1
      %p84 = por %p82, %p83
      %p85 = scmp.ne.s32.totalorder %s77, %s80
      %p86 = scmp.eq.s32.totalorder %s41, 0
      %p87 = por %p85, %p86
      %p88 = scmp.ne.s32.totalorder %s77, %s80
      %p89 = scmp.eq.s32.totalorder %s46, 1
      %p90 = por %p88, %p89
      %p91 = scmp.ne.s32.totalorder %s80, %s81
      %p92 = scmp.eq.s32.totalorder %s46, 0
      %p93 = por %p91, %p92
      %p94 = scmp.ne.s32.totalorder %s80, %s81
      %p95 = scmp.eq.s32.totalorder %s47, 1
      %p96 = por %p94, %p95
      %p98 = scmp.ne.s32.totalorder %s81, %s97
      %p99 = scmp.eq.s32.totalorder %s47, 0
      %p100 = por %p98, %p99
      %s102 = sadd.s32 %s101, 1
      %p105 = scmp.eq.s32.totalorder %s41, 1
      %p106 = scmp.ne.s32.totalorder %s101, %s103
      %p107 = scmp.eq.s32.totalorder %s41, 0
      %p108 = por %p106, %p107
      %p109 = scmp.ne.s32.totalorder %s101, %s103
      %p110 = scmp.eq.s32.totalorder %s46, 1
      %p111 = por %p109, %p110
      %p112 = scmp.ne.s32.totalorder %s103, %s104
      %p113 = scmp.eq.s32.totalorder %s46, 0
      %p114 = por %p112, %p113
      %p115 = scmp.ne.s32.totalorder %s103, %s104
      %p116 = scmp.eq.s32.totalorder %s47, 1
      %p117 = por %p115, %p116
      %p119 = scmp.ne.s32.totalorder %s104, %s118
      %p120 = scmp.eq.s32.totalorder %s47, 0
      %p121 = por %p119, %p120
      %s123 = sadd.s32 %s122, 1
      %p126 = scmp.eq.s32.totalorder %s41, 1
      %p127 = scmp.ne.s32.totalorder %s122, %s124
      %p128 = scmp.eq.s32.totalorder %s41, 0
      %p129 = por %p127, %p128
      %p130 = scmp.ne.s32.totalorder %s122, %s124
      %p131 = scmp.eq.s32.totalorder %s46, 1
      %p132 = por %p130, %p131
      %p133 = scmp.ne.s32.totalorder %s124, %s125
      %p134 = scmp.eq.s32.totalorder %s46, 0
      %p135 = por %p133, %p134
      %p136 = scmp.ne.s32.totalorder %s124, %s125
      %p137 = scmp.eq.s32.totalorder %s47, 1
      %p138 = por %p136, %p137
      %p140 = scmp.ne.s32.totalorder %s125, %s139
      %p141 = scmp.eq.s32.totalorder %s47, 0
      %p142 = por %p140, %p141
      %s144 = sadd.s32 %s143, 1
      %p147 = scmp.eq.s32.totalorder %s41, 1
      %p148 = scmp.ne.s32.totalorder %s143, %s145
      %p149 = scmp.eq.s32.totalorder %s41, 0
      %p150 = por %p148, %p149
      %p151 = scmp.ne.s32.totalorder %s143, %s145
      %p152 = scmp.eq.s32.totalorder %s46, 1
      %p153 = por %p151, %p152
      %p154 = scmp.ne.s32.totalorder %s145, %s146
      %p155 = scmp.eq.s32.totalorder %s46, 0
      %p156 = por %p154, %p155
      %p157 = scmp.ne.s32.totalorder %s145, %s146
      %p158 = scmp.eq.s32.totalorder %s47, 1
      %p159 = por %p157, %p158
      %p161 = scmp.ne.s32.totalorder %s146, %s160
      %p162 = scmp.eq.s32.totalorder %s47, 0
      %p163 = por %p161, %p162
      %s165 = sadd.s32 %s164, 1
      %p168 = scmp.eq.s32.totalorder %s41, 1
      %p169 = scmp.ne.s32.totalorder %s164, %s166
      %p170 = scmp.eq.s32.totalorder %s41, 0
      %p171 = por %p169, %p170
      %p172 = scmp.ne.s32.totalorder %s164, %s166
      %p173 = scmp.eq.s32.totalorder %s46, 1
      %p174 = por %p172, %p173
      %p175 = scmp.ne.s32.totalorder %s166, %s167
      %p176 = scmp.eq.s32.totalorder %s46, 0
      %p177 = por %p175, %p176
      %p178 = scmp.ne.s32.totalorder %s166, %s167
      %p179 = scmp.eq.s32.totalorder %s47, 1
      %p180 = por %p178, %p179
      %p182 = scmp.ne.s32.totalorder %s167, %s181
      %p183 = scmp.eq.s32.totalorder %s47, 0
      %p184 = por %p182, %p183
      %s186 = sadd.s32 %s185, 1
      %p189 = scmp.eq.s32.totalorder %s41, 1
      %p190 = scmp.ne.s32.totalorder %s185, %s187
      %p191 = scmp.eq.s32.totalorder %s41, 0
      %p192 = por %p190, %p191
      %p193 = scmp.ne.s32.totalorder %s185, %s187
      %p194 = scmp.eq.s32.totalorder %s46, 1
      %p195 = por %p193, %p194
      %p196 = scmp.ne.s32.totalorder %s187, %s188
      %p197 = scmp.eq.s32.totalorder %s46, 0
      %p198 = por %p196, %p197
      %p199 = scmp.ne.s32.totalorder %s187, %s188
      %p200 = scmp.eq.s32.totalorder %s47, 1
      %p201 = por %p199, %p200
      %p203 = scmp.ne.s32.totalorder %s188, %s202
      %p204 = scmp.eq.s32.totalorder %s47, 0
      %p205 = por %p203, %p204
      %s207 = sadd.s32 %s206, 1
      %p210 = scmp.eq.s32.totalorder %s41, 1
      %p211 = scmp.ne.s32.totalorder %s206, %s208
      %p212 = scmp.eq.s32.totalorder %s41, 0
      %p213 = por %p211, %p212
      %p214 = scmp.ne.s32.totalorder %s206, %s208
      %p215 = scmp.eq.s32.totalorder %s46, 1
      %p216 = por %p214, %p215
      %p217 = scmp.ne.s32.totalorder %s208, %s209
      %p218 = scmp.eq.s32.totalorder %s46, 0
      %p219 = por %p217, %p218
      %p220 = scmp.ne.s32.totalorder %s208, %s209
      %p221 = scmp.eq.s32.totalorder %s47, 1
      %p222 = por %p220, %p221
      %p224 = scmp.ne.s32.totalorder %s209, %s223
      %p225 = scmp.eq.s32.totalorder %s47, 0
      %p226 = por %p224, %p225
      %s228 = sadd.s32 %s227, 1
      %p231 = scmp.eq.s32.totalorder %s41, 1
      %p232 = scmp.ne.s32.totalorder %s227, %s229
      %p233 = scmp.eq.s32.totalorder %s41, 0
      %p234 = por %p232, %p233
      %p235 = scmp.ne.s32.totalorder %s227, %s229
      %p236 = scmp.eq.s32.totalorder %s46, 1
      %p237 = por %p235, %p236
      %p238 = scmp.ne.s32.totalorder %s229, %s230
      %p239 = scmp.eq.s32.totalorder %s46, 0
      %p240 = por %p238, %p239
      %p241 = scmp.ne.s32.totalorder %s229, %s230
      %p242 = scmp.eq.s32.totalorder %s47, 1
      %p243 = por %p241, %p242
      %p245 = scmp.ne.s32.totalorder %s230, %s244
      %p246 = scmp.eq.s32.totalorder %s47, 0
      %p247 = por %p245, %p246
      %s249 = sadd.s32 %s248, 1
      %p252 = scmp.eq.s32.totalorder %s41, 1
      %p253 = scmp.ne.s32.totalorder %s248, %s250
      %p254 = scmp.eq.s32.totalorder %s41, 0
      %p255 = por %p253, %p254
      %p256 = scmp.ne.s32.totalorder %s248, %s250
      %p257 = scmp.eq.s32.totalorder %s46, 1
      %p258 = por %p256, %p257
      %p259 = scmp.ne.s32.totalorder %s250, %s251
      %p260 = scmp.eq.s32.totalorder %s46, 0
      %p261 = por %p259, %p260
      %p262 = scmp.ne.s32.totalorder %s250, %s251
      %p263 = scmp.eq.s32.totalorder %s47, 1
      %p264 = por %p262, %p263
      %p266 = scmp.ne.s32.totalorder %s251, %s265
      %p267 = scmp.eq.s32.totalorder %s47, 0
      %p268 = por %p266, %p267
      %s270 = sadd.s32 %s269, 1
      %p273 = scmp.eq.s32.totalorder %s41, 1
      %p274 = scmp.ne.s32.totalorder %s269, %s271
      %p275 = scmp.eq.s32.totalorder %s41, 0
      %p276 = por %p274, %p275
      %p277 = scmp.ne.s32.totalorder %s269, %s271
      %p278 = scmp.eq.s32.totalorder %s46, 1
      %p279 = por %p277, %p278
      %p280 = scmp.ne.s32.totalorder %s271, %s272
      %p281 = scmp.eq.s32.totalorder %s46, 0
      %p282 = por %p280, %p281
      %p283 = scmp.ne.s32.totalorder %s271, %s272
      %p284 = scmp.eq.s32.totalorder %s47, 1
      %p285 = por %p283, %p284
      %p287 = scmp.ne.s32.totalorder %s272, %s286
      %p288 = scmp.eq.s32.totalorder %s47, 0
      %p289 = por %p287, %p288
      %s291 = sadd.s32 %s290, 1
      %p294 = scmp.eq.s32.totalorder %s41, 1
      %p295 = scmp.ne.s32.totalorder %s290, %s292
      %p296 = scmp.eq.s32.totalorder %s41, 0
      %p297 = por %p295, %p296
      %p298 = scmp.ne.s32.totalorder %s290, %s292
      %p299 = scmp.eq.s32.totalorder %s46, 1
      %p300 = por %p298, %p299
      %p301 = scmp.ne.s32.totalorder %s292, %s293
      %p302 = scmp.eq.s32.totalorder %s46, 0
      %p303 = por %p301, %p302
      %p304 = scmp.ne.s32.totalorder %s292, %s293
      %p305 = scmp.eq.s32.totalorder %s47, 1
      %p306 = por %p304, %p305
      %p308 = scmp.ne.s32.totalorder %s293, %s307
      %p309 = scmp.eq.s32.totalorder %s47, 0
      %p310 = por %p308, %p309
      %s312 = sadd.s32 %s311, 1
      %p315 = scmp.eq.s32.totalorder %s41, 1
      %p316 = scmp.ne.s32.totalorder %s311, %s313
      %p317 = scmp.eq.s32.totalorder %s41, 0
      %p318 = por %p316, %p317
      %p319 = scmp.ne.s32.totalorder %s311, %s313
      %p320 = scmp.eq.s32.totalorder %s46, 1
      %p321 = por %p319, %p320
      %p322 = scmp.ne.s32.totalorder %s313, %s314
      %p323 = scmp.eq.s32.totalorder %s46, 0
      %p324 = por %p322, %p323
      %p325 = scmp.ne.s32.totalorder %s313, %s314
      %p326 = scmp.eq.s32.totalorder %s47, 1
      %p327 = por %p325, %p326
      %p329 = scmp.ne.s32.totalorder %s314, %s328
      %p330 = scmp.eq.s32.totalorder %s47, 0
      %p331 = por %p329, %p330
      %s333 = sadd.s32 %s332, 1
      %p336 = scmp.eq.s32.totalorder %s41, 1
      %p337 = scmp.ne.s32.totalorder %s332, %s334
      %p338 = scmp.eq.s32.totalorder %s41, 0
      %p339 = por %p337, %p338
      %p340 = scmp.ne.s32.totalorder %s332, %s334
      %p341 = scmp.eq.s32.totalorder %s46, 1
      %p342 = por %p340, %p341
      %p343 = scmp.ne.s32.totalorder %s334, %s335
      %p344 = scmp.eq.s32.totalorder %s46, 0
      %p345 = por %p343, %p344
      %p346 = scmp.ne.s32.totalorder %s334, %s335
      %p347 = scmp.eq.s32.totalorder %s47, 1
      %p348 = por %p346, %p347
      %p350 = scmp.ne.s32.totalorder %s335, %s349
      %p351 = scmp.eq.s32.totalorder %s47, 0
      %p352 = por %p350, %p351
      %s354 = sadd.s32 %s353, 1
      %p357 = scmp.eq.s32.totalorder %s41, 1
      %p358 = scmp.ne.s32.totalorder %s353, %s355
      %p359 = scmp.eq.s32.totalorder %s41, 0
      %p360 = por %p358, %p359
      %p361 = scmp.ne.s32.totalorder %s353, %s355
      %p362 = scmp.eq.s32.totalorder %s46, 1
      %p363 = por %p361, %p362
      %p364 = scmp.ne.s32.totalorder %s355, %s356
      %p365 = scmp.eq.s32.totalorder %s46, 0
      %p366 = por %p364, %p365
      %p367 = scmp.ne.s32.totalorder %s355, %s356
      %p368 = scmp.eq.s32.totalorder %s47, 1
      %p369 = por %p367, %p368
      %p371 = scmp.ne.s32.totalorder %s356, %s370
      %p372 = scmp.eq.s32.totalorder %s47, 0
      %p373 = por %p371, %p372
      %s375 = sadd.s32 %s374, 1
      %p378 = scmp.eq.s32.totalorder %s41, 1
      %p379 = scmp.ne.s32.totalorder %s374, %s376
      %p380 = scmp.eq.s32.totalorder %s41, 0
      %p381 = por %p379, %p380
      %p382 = scmp.ne.s32.totalorder %s374, %s376
      %p383 = scmp.eq.s32.totalorder %s46, 1
      %p384 = por %p382, %p383
      %p385 = scmp.ne.s32.totalorder %s376, %s377
      %p386 = scmp.eq.s32.totalorder %s46, 0
      %p387 = por %p385, %p386
      %p388 = scmp.ne.s32.totalorder %s376, %s377
      %p389 = scmp.eq.s32.totalorder %s47, 1
      %p390 = por %p388, %p389
      %p392 = scmp.ne.s32.totalorder %s377, %s391
      %p393 = scmp.eq.s32.totalorder %s47, 0
      %p394 = por %p392, %p393
      %s396 = sadd.s32 %s395, 1
      %p399 = scmp.eq.s32.totalorder %s41, 1
      %p400 = scmp.ne.s32.totalorder %s395, %s397
      %p401 = scmp.eq.s32.totalorder %s41, 0
      %p402 = por %p400, %p401
      %p403 = scmp.ne.s32.totalorder %s395, %s397
      %p404 = scmp.eq.s32.totalorder %s46, 1
      %p405 = por %p403, %p404
      %p406 = scmp.ne.s32.totalorder %s397, %s398
      %p407 = scmp.eq.s32.totalorder %s46, 0
      %p408 = por %p406, %p407
      %p409 = scmp.ne.s32.totalorder %s397, %s398
      %p410 = scmp.eq.s32.totalorder %s47, 1
      %p411 = por %p409, %p410
      %p413 = scmp.ne.s32.totalorder %s398, %s412
      %p414 = scmp.eq.s32.totalorder %s47, 0
      %p415 = por %p413, %p414
      %s417 = sadd.s32 %s416, 1
      %p420 = scmp.eq.s32.totalorder %s41, 1
      %p421 = scmp.ne.s32.totalorder %s416, %s418
      %p422 = scmp.eq.s32.totalorder %s41, 0
      %p423 = por %p421, %p422
      %p424 = scmp.ne.s32.totalorder %s416, %s418
      %p425 = scmp.eq.s32.totalorder %s46, 1
      %p426 = por %p424, %p425
      %p427 = scmp.ne.s32.totalorder %s418, %s419
      %p428 = scmp.eq.s32.totalorder %s46, 0
      %p429 = por %p427, %p428
      %p430 = scmp.ne.s32.totalorder %s418, %s419
      %p431 = scmp.eq.s32.totalorder %s47, 1
      %p432 = por %p430, %p431
      %p434 = scmp.ne.s32.totalorder %s419, %s433
      %p435 = scmp.eq.s32.totalorder %s47, 0
      %p436 = por %p434, %p435
      %s437 = ssub.s32 %s41, %s48
      %p438 = scmp.eq.s32.totalorder %s437, 0
      %s440 = sadd.s32 %s439, 1
      %s441 = scalar_select %p438, %s439, %s440
      %p444 = pneg %p438
      %p445 = scmp.eq.s32.totalorder %s41, 1
      %p446 = por %p444, %p445
      %p447 = scmp.ne.s32.totalorder %s439, %s442
      %p448 = scmp.eq.s32.totalorder %s41, 0
      %p449 = por %p447, %p448
      %p450 = scmp.ne.s32.totalorder %s439, %s442
      %p451 = scmp.eq.s32.totalorder %s46, 1
      %p452 = por %p450, %p451
      %p453 = scmp.ne.s32.totalorder %s442, %s443
      %p454 = scmp.eq.s32.totalorder %s46, 0
      %p455 = por %p453, %p454
      %p456 = scmp.ne.s32.totalorder %s442, %s443
      %p457 = scmp.eq.s32.totalorder %s47, 1
      %p458 = por %p456, %p457
      %p460 = scmp.ne.s32.totalorder %s443, %s459
      %p461 = scmp.eq.s32.totalorder %s47, 0
      %p462 = por %p460, %p461
      %p463 = scmp.le.s32.totalorder 1, %s41
      %p464 = scmp.lt.s32.totalorder %s41, 3
      %p465 = pnand %p463, %p464
      %p466 = pneg %p465
      // Predicated region
      $region9: #{graph_transformer_forward.5} parent=5 // pred_check
        _
      $region10: #{graph_transformer_forward.5} parent=5 // pred_check_branch
        %468 = sbr.rel (%p465) target = $region12
      $region11: #{graph_transformer_forward.5} parent=5 // pred_region
        %s469 = ssub.s32 %s41, 1
        // Predicated region
        $region13: #{graph_transformer_forward.5} parent=11 // pred_check
          %p470 = pneg %p114
        $region14: #{graph_transformer_forward.5} parent=11 // pred_check_branch
          %472 = sbr.rel (%p470) target = $region16
        $region15: #{graph_transformer_forward.5} parent=11 // pred_region
          %s474 = ssub.s32 16, 16
          %475 = vsyncadd [#allocation6], %s474
          %s477 = sshll.u32 [#allocation7], 4
          %s478 = int_to_ptr.vmem [resolvable:$true] %s477
          %480 = dma.hbm_to_vmem [thread:$0]  %s2, 16, %s478, [#allocation6]
        $region16: #{graph_transformer_forward.5} parent=11 // pred_fallthru
          _
        // Predicated region
        $region17: #{graph_transformer_forward.5} parent=11 // pred_check
          %p481 = pneg %p135
        $region18: #{graph_transformer_forward.5} parent=11 // pred_check_branch
          %483 = sbr.rel (%p481) target = $region20
        $region19: #{graph_transformer_forward.5} parent=11 // pred_region
          %s485 = ssub.s32 16, 16
          %486 = vsyncadd [#allocation9], %s485
          %s488 = sshll.u32 [#allocation8], 4
          %s489 = int_to_ptr.vmem [resolvable:$true] %s488
          %491 = dma.hbm_to_vmem [thread:$0]  %s3, 16, %s489, [#allocation9]
        $region20: #{graph_transformer_forward.5} parent=11 // pred_fallthru
          _
        // Predicated region
        $region21: #{graph_transformer_forward.5} parent=11 // pred_check
          %p492 = pneg %p156
        $region22: #{graph_transformer_forward.5} parent=11 // pred_check_branch
          %494 = sbr.rel (%p492) target = $region24
        $region23: #{graph_transformer_forward.5} parent=11 // pred_region
          %s496 = ssub.s32 1024, 1024
          %497 = vsyncadd [#allocation9], %s496
          %s498 = sshll.u32 [#allocation10], 4
          %s499 = int_to_ptr.vmem [resolvable:$true] %s498
          %504 = dma.hbm_to_vmem [thread:$0]  %s4, 1024, %s499, [#allocation9], 256, 256, 16
        $region24: #{graph_transformer_forward.5} parent=11 // pred_fallthru
          _
        // Predicated region
        $region25: #{graph_transformer_forward.5} parent=11 // pred_check
          %p505 = pneg %p177
        $region26: #{graph_transformer_forward.5} parent=11 // pred_check_branch
          %507 = sbr.rel (%p505) target = $region28
        $region27: #{graph_transformer_forward.5} parent=11 // pred_region
          %s509 = ssub.s32 16, 16
          %510 = vsyncadd [#allocation12], %s509
          %s512 = sshll.u32 [#allocation11], 4
          %s513 = int_to_ptr.vmem [resolvable:$true] %s512
          %515 = dma.hbm_to_vmem [thread:$0]  %s5, 16, %s513, [#allocation12]
        $region28: #{graph_transformer_forward.5} parent=11 // pred_fallthru
          _
        // Predicated region
        $region29: #{graph_transformer_forward.5} parent=11 // pred_check
          %p516 = pneg %p198
        $region30: #{graph_transformer_forward.5} parent=11 // pred_check_branch
          %518 = sbr.rel (%p516) target = $region32
        $region31: #{graph_transformer_forward.5} parent=11 // pred_region
          %s520 = ssub.s32 1024, 1024
          %521 = vsyncadd [#allocation12], %s520
          %s522 = sshll.u32 [#allocation13], 4
          %s523 = int_to_ptr.vmem [resolvable:$true] %s522
          %528 = dma.hbm_to_vmem [thread:$0]  %s6, 1024, %s523, [#allocation12], 64, 64, 4
        $region32: #{graph_transformer_forward.5} parent=11 // pred_fallthru
          _
        // Predicated region
        $region33: #{graph_transformer_forward.5} parent=11 // pred_check
          %p529 = pneg %p219
        $region34: #{graph_transformer_forward.5} parent=11 // pred_check_branch
          %531 = sbr.rel (%p529) target = $region36
        $region35: #{graph_transformer_forward.5} parent=11 // pred_region
          %s533 = ssub.s32 16, 16
          %534 = vsyncadd [#allocation15], %s533
          %s536 = sshll.u32 [#allocation14], 4
          %s537 = int_to_ptr.vmem [resolvable:$true] %s536
          %539 = dma.hbm_to_vmem [thread:$0]  %s7, 16, %s537, [#allocation15]
        $region36: #{graph_transformer_forward.5} parent=11 // pred_fallthru
          _
        // Predicated region
        $region37: #{graph_transformer_forward.5} parent=11 // pred_check
          %p540 = pneg %p240
        $region38: #{graph_transformer_forward.5} parent=11 // pred_check_branch
          %542 = sbr.rel (%p540) target = $region40
        $region39: #{graph_transformer_forward.5} parent=11 // pred_region
          %s544 = ssub.s32 16, 16
          %545 = vsyncadd [#allocation15], %s544
          %s547 = sshll.u32 [#allocation16], 4
          %s548 = int_to_ptr.vmem [resolvable:$true] %s547
          %550 = dma.hbm_to_vmem [thread:$0]  %s8, 16, %s548, [#allocation15]
        $region40: #{graph_transformer_forward.5} parent=11 // pred_fallthru
          _
        // Predicated region
        $region41: #{graph_transformer_forward.5} parent=11 // pred_check
          %p551 = pneg %p261
        $region42: #{graph_transformer_forward.5} parent=11 // pred_check_branch
          %553 = sbr.rel (%p551) target = $region44
        $region43: #{graph_transformer_forward.5} parent=11 // pred_region
          %s555 = ssub.s32 16, 16
          %556 = vsyncadd [#allocation18], %s555
          %s558 = sshll.u32 [#allocation17], 4
          %s559 = int_to_ptr.vmem [resolvable:$true] %s558
          %561 = dma.hbm_to_vmem [thread:$0]  %s9, 16, %s559, [#allocation18]
        $region44: #{graph_transformer_forward.5} parent=11 // pred_fallthru
          _
        // Predicated region
        $region45: #{graph_transformer_forward.5} parent=11 // pred_check
          %p562 = pneg %p282
        $region46: #{graph_transformer_forward.5} parent=11 // pred_check_branch
          %564 = sbr.rel (%p562) target = $region48
        $region47: #{graph_transformer_forward.5} parent=11 // pred_region
          %s566 = ssub.s32 256, 256
          %567 = vsyncadd [#allocation18], %s566
          %s568 = sshll.u32 [#allocation19], 4
          %s569 = int_to_ptr.vmem [resolvable:$true] %s568
          %574 = dma.hbm_to_vmem [thread:$0]  %s10, 256, %s569, [#allocation18], 64, 64, 4
        $region48: #{graph_transformer_forward.5} parent=11 // pred_fallthru
          _
        // Predicated region
        $region49: #{graph_transformer_forward.5} parent=11 // pred_check
          %p575 = pneg %p303
        $region50: #{graph_transformer_forward.5} parent=11 // pred_check_branch
          %577 = sbr.rel (%p575) target = $region52
        $region51: #{graph_transformer_forward.5} parent=11 // pred_region
          %s579 = ssub.s32 16, 16
          %580 = vsyncadd [#allocation21], %s579
          %s582 = sshll.u32 [#allocation20], 4
          %s583 = int_to_ptr.vmem [resolvable:$true] %s582
          %585 = dma.hbm_to_vmem [thread:$0]  %s11, 16, %s583, [#allocation21]
        $region52: #{graph_transformer_forward.5} parent=11 // pred_fallthru
          _
        // Predicated region
        $region53: #{graph_transformer_forward.5} parent=11 // pred_check
          %p586 = pneg %p324
        $region54: #{graph_transformer_forward.5} parent=11 // pred_check_branch
          %588 = sbr.rel (%p586) target = $region56
        $region55: #{graph_transformer_forward.5} parent=11 // pred_region
          %s590 = ssub.s32 512, 512
          %591 = vsyncadd [#allocation21], %s590
          %s592 = sshll.u32 [#allocation22], 4
          %s593 = int_to_ptr.vmem [resolvable:$true] %s592
          %598 = dma.hbm_to_vmem [thread:$0]  %s12, 512, %s593, [#allocation21], 64, 64, 4
        $region56: #{graph_transformer_forward.5} parent=11 // pred_fallthru
          _
        // Predicated region
        $region57: #{graph_transformer_forward.5} parent=11 // pred_check
          %p599 = pneg %p345
        $region58: #{graph_transformer_forward.5} parent=11 // pred_check_branch
          %601 = sbr.rel (%p599) target = $region60
        $region59: #{graph_transformer_forward.5} parent=11 // pred_region
          %s603 = ssub.s32 16, 16
          %604 = vsyncadd [#allocation24], %s603
          %s606 = sshll.u32 [#allocation23], 4
          %s607 = int_to_ptr.vmem [resolvable:$true] %s606
          %609 = dma.hbm_to_vmem [thread:$0]  %s13, 16, %s607, [#allocation24]
        $region60: #{graph_transformer_forward.5} parent=11 // pred_fallthru
          _
        // Predicated region
        $region61: #{graph_transformer_forward.5} parent=11 // pred_check
          %p610 = pneg %p366
        $region62: #{graph_transformer_forward.5} parent=11 // pred_check_branch
          %612 = sbr.rel (%p610) target = $region64
        $region63: #{graph_transformer_forward.5} parent=11 // pred_region
          %s614 = ssub.s32 256, 256
          %615 = vsyncadd [#allocation24], %s614
          %s616 = sshll.u32 [#allocation25], 4
          %s617 = int_to_ptr.vmem [resolvable:$true] %s616
          %622 = dma.hbm_to_vmem [thread:$0]  %s14, 256, %s617, [#allocation24], 64, 64, 4
        $region64: #{graph_transformer_forward.5} parent=11 // pred_fallthru
          _
        // Predicated region
        $region65: #{graph_transformer_forward.5} parent=11 // pred_check
          %p623 = pneg %p387
        $region66: #{graph_transformer_forward.5} parent=11 // pred_check_branch
          %625 = sbr.rel (%p623) target = $region68
        $region67: #{graph_transformer_forward.5} parent=11 // pred_region
          %s627 = ssub.s32 16, 16
          %628 = vsyncadd [#allocation27], %s627
          %s630 = sshll.u32 [#allocation26], 4
          %s631 = int_to_ptr.vmem [resolvable:$true] %s630
          %633 = dma.hbm_to_vmem [thread:$0]  %s15, 16, %s631, [#allocation27]
        $region68: #{graph_transformer_forward.5} parent=11 // pred_fallthru
          _
        // Predicated region
        $region69: #{graph_transformer_forward.5} parent=11 // pred_check
          %p634 = pneg %p408
        $region70: #{graph_transformer_forward.5} parent=11 // pred_check_branch
          %636 = sbr.rel (%p634) target = $region72
        $region71: #{graph_transformer_forward.5} parent=11 // pred_region
          %s638 = ssub.s32 512, 512
          %639 = vsyncadd [#allocation27], %s638
          %s640 = sshll.u32 [#allocation28], 4
          %s641 = int_to_ptr.vmem [resolvable:$true] %s640
          %646 = dma.hbm_to_vmem [thread:$0]  %s16, 512, %s641, [#allocation27], 64, 64, 4
        $region72: #{graph_transformer_forward.5} parent=11 // pred_fallthru
          _
        // Predicated region
        $region73: #{graph_transformer_forward.5} parent=11 // pred_check
          %p647 = pneg %p429
        $region74: #{graph_transformer_forward.5} parent=11 // pred_check_branch
          %649 = sbr.rel (%p647) target = $region76
        $region75: #{graph_transformer_forward.5} parent=11 // pred_region
          %s651 = ssub.s32 16, 16
          %652 = vsyncadd [#allocation30], %s651
          %s654 = sshll.u32 [#allocation29], 4
          %s655 = int_to_ptr.vmem [resolvable:$true] %s654
          %657 = dma.hbm_to_vmem [thread:$0]  %s17, 16, %s655, [#allocation30]
        $region76: #{graph_transformer_forward.5} parent=11 // pred_fallthru
          _
      $region12: #{graph_transformer_forward.5} parent=5 // pred_fallthru
        _
      %p658 = scmp.lt.s32.totalorder %s41, 2
      // Predicated region
      $region77: #{graph_transformer_forward.5} parent=5 // pred_check
        %p659 = pneg %p658
      $region78: #{graph_transformer_forward.5} parent=5 // pred_check_branch
        %661 = sbr.rel (%p659) target = $region80
      $region79: #{graph_transformer_forward.5} parent=5 // pred_region
        // Predicated region
        $region81: #{graph_transformer_forward.5} parent=79 // pred_check
          %p662 = pneg %p61
        $region82: #{graph_transformer_forward.5} parent=79 // pred_check_branch
          %664 = sbr.rel (%p662) target = $region84
        $region83: #{graph_transformer_forward.5} parent=79 // pred_region
          %s665 = sand.u32 %s51, 1
          %s666 = scalar_lea.sflag [#allocation3], %s665
          %s667 = sand.u32 %s51, 1
          %s668 = smul.addr %s667, 16
          %s669 = scalar_lea.vmem [#allocation2], %s668
          %s671 = ssub.s32 256, 256
          %672 = vsyncadd %s666, %s671
          %s673 = smul.addr %s41, 2
          %s674 = smul.addr %s673, 128
          %s675 = scalar_lea.hbm %s0, %s674
          %s676 = sshll.u32 %s669, 4
          %s677 = int_to_ptr.vmem [resolvable:$true] %s676
          %682 = dma.hbm_to_vmem [thread:$0]  %s675, 256, %s677, %s666, 128, 128, 8
        $region84: #{graph_transformer_forward.5} parent=79 // pred_fallthru
          _
        // Predicated region
        $region85: #{graph_transformer_forward.5} parent=79 // pred_check
          %p683 = pneg %p87
        $region86: #{graph_transformer_forward.5} parent=79 // pred_check_branch
          %685 = sbr.rel (%p683) target = $region88
        $region87: #{graph_transformer_forward.5} parent=79 // pred_region
          %s686 = sand.u32 %s41, 1
          %s687 = scalar_lea.sflag [#allocation6], %s686
          %s688 = sand.u32 %s77, 1
          %s689 = smul.addr %s688, 8
          %s690 = scalar_lea.vmem [#allocation5], %s689
          %s692 = ssub.s32 128, 128
          %693 = vsyncadd %s687, %s692
          %s694 = smul.addr %s41, 2
          %s695 = smul.addr %s694, 64
          %s696 = scalar_lea.hbm %s1, %s695
          %s697 = sshll.u32 %s690, 4
          %s698 = int_to_ptr.vmem [resolvable:$true] %s697
          %703 = dma.hbm_to_vmem [thread:$0]  %s696, 128, %s698, %s687, 64, 64, 4
        $region88: #{graph_transformer_forward.5} parent=79 // pred_fallthru
          _
      $region80: #{graph_transformer_forward.5} parent=5 // pred_fallthru
        _
      %p704 = scmp.le.s32.totalorder 1, %s41
      %p705 = scmp.lt.s32.totalorder %s41, 3
      %p706 = pnand %p704, %p705
      %p707 = pneg %p706
      // Predicated region
      $region89: #{graph_transformer_forward.5} parent=5 // pred_check
        _
      $region90: #{graph_transformer_forward.5} parent=5 // pred_check_branch
        %709 = sbr.rel (%p706) target = $region92
      $region91: #{graph_transformer_forward.5} parent=5 // pred_region
        %s710 = ssub.s32 %s41, 1
        %s711 = sand.u32 %s54, 1
        %s712 = scalar_lea.sflag [#allocation3], %s711
        %s713 = sand.u32 %s54, 1
        %s714 = smul.addr %s713, 16
        %s715 = scalar_lea.vmem [#allocation2], %s714
        // Predicated region
        $region93: #{graph_transformer_forward.5} parent=91 // pred_check
          %p716 = pneg %p67
        $region94: #{graph_transformer_forward.5} parent=91 // pred_check_branch
          %718 = sbr.rel (%p716) target = $region96
        $region95: #{graph_transformer_forward.5} parent=91 // pred_region
          %719 = dma.done %s712, 256
        $region96: #{graph_transformer_forward.5} parent=91 // pred_fallthru
          _
        %s720 = sand.u32 %s46, 1
        %s721 = scalar_lea.sflag [#allocation6], %s720
        %s722 = sand.u32 %s80, 1
        %s723 = smul.addr %s722, 8
        %s724 = scalar_lea.vmem [#allocation5], %s723
        // Predicated region
        $region97: #{graph_transformer_forward.5} parent=91 // pred_check
          %p725 = pneg %p93
        $region98: #{graph_transformer_forward.5} parent=91 // pred_check_branch
          %727 = sbr.rel (%p725) target = $region100
        $region99: #{graph_transformer_forward.5} parent=91 // pred_region
          %728 = dma.done %s721, 128
        $region100: #{graph_transformer_forward.5} parent=91 // pred_fallthru
          _
        // Predicated region
        $region101: #{graph_transformer_forward.5} parent=91 // pred_check
          %p729 = pneg %p114
        $region102: #{graph_transformer_forward.5} parent=91 // pred_check_branch
          %731 = sbr.rel (%p729) target = $region104
        $region103: #{graph_transformer_forward.5} parent=91 // pred_region
          %732 = dma.done [#allocation6], 16
        $region104: #{graph_transformer_forward.5} parent=91 // pred_fallthru
          _
        // Predicated region
        $region105: #{graph_transformer_forward.5} parent=91 // pred_check
          %p733 = pneg %p135
        $region106: #{graph_transformer_forward.5} parent=91 // pred_check_branch
          %735 = sbr.rel (%p733) target = $region108
        $region107: #{graph_transformer_forward.5} parent=91 // pred_region
          %736 = dma.done [#allocation9], 16
        $region108: #{graph_transformer_forward.5} parent=91 // pred_fallthru
          _
        // Predicated region
        $region109: #{graph_transformer_forward.5} parent=91 // pred_check
          %p737 = pneg %p156
        $region110: #{graph_transformer_forward.5} parent=91 // pred_check_branch
          %739 = sbr.rel (%p737) target = $region112
        $region111: #{graph_transformer_forward.5} parent=91 // pred_region
          %740 = dma.done [#allocation9], 1024
        $region112: #{graph_transformer_forward.5} parent=91 // pred_fallthru
          _
        // Predicated region
        $region113: #{graph_transformer_forward.5} parent=91 // pred_check
          %p741 = pneg %p177
        $region114: #{graph_transformer_forward.5} parent=91 // pred_check_branch
          %743 = sbr.rel (%p741) target = $region116
        $region115: #{graph_transformer_forward.5} parent=91 // pred_region
          %744 = dma.done [#allocation12], 16
        $region116: #{graph_transformer_forward.5} parent=91 // pred_fallthru
          _
        // Predicated region
        $region117: #{graph_transformer_forward.5} parent=91 // pred_check
          %p745 = pneg %p198
        $region118: #{graph_transformer_forward.5} parent=91 // pred_check_branch
          %747 = sbr.rel (%p745) target = $region120
        $region119: #{graph_transformer_forward.5} parent=91 // pred_region
          %748 = dma.done [#allocation12], 1024
        $region120: #{graph_transformer_forward.5} parent=91 // pred_fallthru
          _
        // Predicated region
        $region121: #{graph_transformer_forward.5} parent=91 // pred_check
          %p749 = pneg %p219
        $region122: #{graph_transformer_forward.5} parent=91 // pred_check_branch
          %751 = sbr.rel (%p749) target = $region124
        $region123: #{graph_transformer_forward.5} parent=91 // pred_region
          %752 = dma.done [#allocation15], 16
        $region124: #{graph_transformer_forward.5} parent=91 // pred_fallthru
          _
        // Predicated region
        $region125: #{graph_transformer_forward.5} parent=91 // pred_check
          %p753 = pneg %p240
        $region126: #{graph_transformer_forward.5} parent=91 // pred_check_branch
          %755 = sbr.rel (%p753) target = $region128
        $region127: #{graph_transformer_forward.5} parent=91 // pred_region
          %756 = dma.done [#allocation15], 16
        $region128: #{graph_transformer_forward.5} parent=91 // pred_fallthru
          _
        // Predicated region
        $region129: #{graph_transformer_forward.5} parent=91 // pred_check
          %p757 = pneg %p261
        $region130: #{graph_transformer_forward.5} parent=91 // pred_check_branch
          %759 = sbr.rel (%p757) target = $region132
        $region131: #{graph_transformer_forward.5} parent=91 // pred_region
          %760 = dma.done [#allocation18], 16
        $region132: #{graph_transformer_forward.5} parent=91 // pred_fallthru
          _
        // Predicated region
        $region133: #{graph_transformer_forward.5} parent=91 // pred_check
          %p761 = pneg %p282
        $region134: #{graph_transformer_forward.5} parent=91 // pred_check_branch
          %763 = sbr.rel (%p761) target = $region136
        $region135: #{graph_transformer_forward.5} parent=91 // pred_region
          %764 = dma.done [#allocation18], 256
        $region136: #{graph_transformer_forward.5} parent=91 // pred_fallthru
          _
        // Predicated region
        $region137: #{graph_transformer_forward.5} parent=91 // pred_check
          %p765 = pneg %p303
        $region138: #{graph_transformer_forward.5} parent=91 // pred_check_branch
          %767 = sbr.rel (%p765) target = $region140
        $region139: #{graph_transformer_forward.5} parent=91 // pred_region
          %768 = dma.done [#allocation21], 16
        $region140: #{graph_transformer_forward.5} parent=91 // pred_fallthru
          _
        // Predicated region
        $region141: #{graph_transformer_forward.5} parent=91 // pred_check
          %p769 = pneg %p324
        $region142: #{graph_transformer_forward.5} parent=91 // pred_check_branch
          %771 = sbr.rel (%p769) target = $region144
        $region143: #{graph_transformer_forward.5} parent=91 // pred_region
          %772 = dma.done [#allocation21], 512
        $region144: #{graph_transformer_forward.5} parent=91 // pred_fallthru
          _
        // Predicated region
        $region145: #{graph_transformer_forward.5} parent=91 // pred_check
          %p773 = pneg %p345
        $region146: #{graph_transformer_forward.5} parent=91 // pred_check_branch
          %775 = sbr.rel (%p773) target = $region148
        $region147: #{graph_transformer_forward.5} parent=91 // pred_region
          %776 = dma.done [#allocation24], 16
        $region148: #{graph_transformer_forward.5} parent=91 // pred_fallthru
          _
        // Predicated region
        $region149: #{graph_transformer_forward.5} parent=91 // pred_check
          %p777 = pneg %p366
        $region150: #{graph_transformer_forward.5} parent=91 // pred_check_branch
          %779 = sbr.rel (%p777) target = $region152
        $region151: #{graph_transformer_forward.5} parent=91 // pred_region
          %780 = dma.done [#allocation24], 256
        $region152: #{graph_transformer_forward.5} parent=91 // pred_fallthru
          _
        // Predicated region
        $region153: #{graph_transformer_forward.5} parent=91 // pred_check
          %p781 = pneg %p387
        $region154: #{graph_transformer_forward.5} parent=91 // pred_check_branch
          %783 = sbr.rel (%p781) target = $region156
        $region155: #{graph_transformer_forward.5} parent=91 // pred_region
          %784 = dma.done [#allocation27], 16
        $region156: #{graph_transformer_forward.5} parent=91 // pred_fallthru
          _
        // Predicated region
        $region157: #{graph_transformer_forward.5} parent=91 // pred_check
          %p785 = pneg %p408
        $region158: #{graph_transformer_forward.5} parent=91 // pred_check_branch
          %787 = sbr.rel (%p785) target = $region160
        $region159: #{graph_transformer_forward.5} parent=91 // pred_region
          %788 = dma.done [#allocation27], 512
        $region160: #{graph_transformer_forward.5} parent=91 // pred_fallthru
          _
        // Predicated region
        $region161: #{graph_transformer_forward.5} parent=91 // pred_check
          %p789 = pneg %p429
        $region162: #{graph_transformer_forward.5} parent=91 // pred_check_branch
          %791 = sbr.rel (%p789) target = $region164
        $region163: #{graph_transformer_forward.5} parent=91 // pred_region
          %792 = dma.done [#allocation30], 16
        $region164: #{graph_transformer_forward.5} parent=91 // pred_fallthru
          _
        %s793 = sand.u32 %s54, 1
        %s794 = scalar_lea.sflag [#allocation3], %s793
        %s795 = sand.u32 %s54, 1
        %s796 = smul.addr %s795, 16
        %s797 = scalar_lea.vmem [#allocation2], %s796
        %p798 = pneg %p67
        %p799 = pneg %p64
        %s800 = sand.u32 %s46, 1
        %s801 = scalar_lea.sflag [#allocation6], %s800
        %s802 = sand.u32 %s80, 1
        %s803 = smul.addr %s802, 8
        %s804 = scalar_lea.vmem [#allocation5], %s803
        %p805 = pneg %p93
        %p806 = pneg %p90
        %p807 = pneg %p114
        %p808 = pneg %p111
        %p809 = pneg %p135
        %p810 = pneg %p132
        %p811 = pneg %p156
        %p812 = pneg %p153
        %p813 = pneg %p177
        %p814 = pneg %p174
        %p815 = pneg %p198
        %p816 = pneg %p195
        %p817 = pneg %p219
        %p818 = pneg %p216
        %p819 = pneg %p240
        %p820 = pneg %p237
        %p821 = pneg %p261
        %p822 = pneg %p258
        %p823 = pneg %p282
        %p824 = pneg %p279
        %p825 = pneg %p303
        %p826 = pneg %p300
        %p827 = pneg %p324
        %p828 = pneg %p321
        %p829 = pneg %p345
        %p830 = pneg %p342
        %p831 = pneg %p366
        %p832 = pneg %p363
        %p833 = pneg %p387
        %p834 = pneg %p384
        %p835 = pneg %p408
        %p836 = pneg %p405
        %p837 = pneg %p429
        %p838 = pneg %p426
        %p839 = pneg %p455
        %p840 = pneg %p452
        %s841 = sand.u32 %s442, 1
        %s842 = scalar_lea.sflag [#allocation4], %s841
        %s843 = sand.u32 %s442, 1
        %s844 = smul.addr %s843, 16
        %s845 = scalar_lea.vmem [#allocation31], %s844
        %v847 = vld [vmem:[%s715] sm:$0xff]
        %v848 = vld [vmem:[%s715 + $0x8] sm:$0x1]
        %v849 = vld [vmem:[%s724] sm:$0xf]
        %v850 = vld [vmem:[%s724 + $0x4] sm:$0x1]
        %v851 = vld [vmem:[#allocation7] sm:$0x1]
        %v852 = vld [vmem:[#allocation8] sm:$0x1]
        %vm853 = vcmask 261120
        %v854 = vsel %vm853, %v847, 0.0
        %855 = vadd.xlane.f32.xlu0 %v854
        %v856 = vpop.xlane.xlu0 %855
        %vm857 = vcmask 253952
        %v858 = vsel %vm857, %v848, 0.0
        %859 = vadd.xlane.f32.xlu0 %v858
        %v860 = vpop.xlane.xlu0 %859
        %v861 = vrcp.pop 32.0
        %v862 = vmul.f32 %v856, %v861
        %v863 = vmul.f32 %v860, %v861
        %v864 = vsub.f32 %v847, %v862
        %v865 = vsub.f32 %v848, %v863
        %v866 = vmul.f32 %v864, %v864
        %v867 = vmul.f32 %v865, %v865
        %v868 = vsel %vm853, %v866, 0.0
        %869 = vadd.xlane.f32.xlu0 %v868
        %v870 = vpop.xlane.xlu0 %869
        %v871 = vsel %vm857, %v867, 0.0
        %872 = vadd.xlane.f32.xlu0 %v871
        %v873 = vpop.xlane.xlu0 %872
        %v874 = vmul.f32 %v870, %v861
        %v875 = vmul.f32 %v873, %v861
        %v876 = vadd.f32 %v874, 1e-05
        %v877 = vadd.f32 %v875, 1e-05
        %v878 = vrsqrt.pop %v876
        %v879 = vrsqrt.pop %v877
        %v880 = vmul.f32 %v864, %v878
        %v881 = vmul.f32 %v865, %v879
        %v883 = vlaneseq
        %v884 = vshrl.u32 %v883, 7
        %v885 = vsub.s32 0, %v884
        %v886 = vrot.slane %v851, %v885
        %v888 = vmul.f32 %v880, %v886
        %v889 = vmul.f32 %v881, %v886
        %v891 = vlaneseq
        %v892 = vshrl.u32 %v891, 7
        %v893 = vsub.s32 0, %v892
        %v894 = vrot.slane %v852, %v893
        %v896 = vadd.f32 %v888, %v894
        %v897 = vadd.f32 %v889, %v894
        %v898 = vpack.c.bf16 %v897, %v896
        %v899 = vld [vmem:[#allocation10] sm:$0xff]
        %v900 = vld [vmem:[#allocation10 + $0x8] sm:$0xff]
        %v901 = vld [vmem:[#allocation10 + $0x10] sm:$0xff]
        %v902 = vld [vmem:[#allocation10 + $0x18] sm:$0xff]
        %v903 = vld [vmem:[#allocation10 + $0x20] sm:$0xff]
        %v904 = vld [vmem:[#allocation10 + $0x28] sm:$0xff]
        %v905 = vld [vmem:[#allocation10 + $0x30] sm:$0xff]
        %v906 = vld [vmem:[#allocation10 + $0x38] sm:$0xff]
        %v915 = vunpack.c.l.b16 %v899
        %v916 = vunpack.c.h.b16 %v899
        %v917 = vunpack.c.l.b16 %v900
        %v918 = vunpack.c.h.b16 %v900
        %v919 = vunpack.c.l.b16 %v901
        %v920 = vunpack.c.h.b16 %v901
        %v921 = vunpack.c.l.b16 %v902
        %v922 = vunpack.c.h.b16 %v902
        %v923 = vunpack.c.l.b16 %v903
        %v924 = vunpack.c.h.b16 %v903
        %v925 = vunpack.c.l.b16 %v904
        %v926 = vunpack.c.h.b16 %v904
        %v927 = vunpack.c.l.b16 %v905
        %v928 = vunpack.c.h.b16 %v905
        %v929 = vunpack.c.l.b16 %v906
        %v930 = vunpack.c.h.b16 %v906
        %v931 = vpack.c.b16 %v919, %v915
        %v932 = vpack.c.b16 %v920, %v916
        %v933 = vpack.c.b16 %v921, %v917
        %v934 = vpack.c.b16 %v922, %v918
        %v935 = vpack.c.b16 %v927, %v923
        %v936 = vpack.c.b16 %v928, %v924
        %v937 = vpack.c.b16 %v929, %v925
        %v938 = vpack.c.b16 %v930, %v926
        %v948 = vsel %vm853, %v898, 0
        %950 = vmatprep.subr.bf16.mxu0 %v932
        %951 = vmatpush1.bf16.msra.mxu0 %v931
        %952 = vmatprep.subr.bf16.mxu0 %v936
        %953 = vmatpush1.bf16.msra.mxu0 %v935
        %954 = vmatprep.subr.bf16.mxu0 0
        %955 = vmatpush1.bf16.msra.mxu0 0
        %956 = vmatprep.subr.bf16.mxu0 0
        %957 = vmatpush1.bf16.msra.mxu0 0
        %958 = vmatprep.subr.bf16.mxu0 0
        %959 = vmatpush1.bf16.msra.mxu0 0
        %960 = vmatprep.subr.bf16.mxu0 0
        %961 = vmatpush1.bf16.msra.mxu0 0
        %962 = vmatprep.subr.bf16.mxu0 0
        %963 = vmatpush1.bf16.msra.mxu0 0
        %964 = vmatprep.subr.bf16.mxu0 0
        %965 = vmatpush1.bf16.msra.mxu0 0
        %966 = vmatprep.subr.bf16.mxu0 0
        %967 = vmatpush1.bf16.msra.mxu0 0
        %968 = vmatprep.subr.bf16.mxu0 0
        %969 = vmatpush1.bf16.msra.mxu0 0
        %970 = vmatprep.subr.bf16.mxu0 0
        %971 = vmatpush1.bf16.msra.mxu0 0
        %972 = vmatprep.subr.bf16.mxu0 0
        %973 = vmatpush1.bf16.msra.mxu0 0
        %974 = vmatprep.subr.bf16.mxu0 0
        %975 = vmatpush1.bf16.msra.mxu0 0
        %976 = vmatprep.subr.bf16.mxu0 0
        %977 = vmatpush1.bf16.msra.mxu0 0
        %978 = vmatprep.subr.bf16.mxu0 0
        %979 = vmatpush1.bf16.msra.mxu0 0
        %980 = vmatprep.subr.bf16.mxu0 0
        %981 = vmatpush1.bf16.msra.mxu0 0
        %982 = vmatprep.mubr.bf16.mxu0 0
        %983 = vmatmul.mubr.bf16.gmra.mrb[0].mxu0 %v948
        %v984 = vpop.f32.mrb[0].mxu0
        %v985 = vadd.f32 0.0, %v984
        %v986 = vpop.f32.mrb[0].mxu0
        %v987 = vadd.f32 0.0, %v986
        %v988 = vpop.f32.mrb[0].mxu0
        %v989 = vadd.f32 0.0, %v988
        %v990 = vpop.f32.mrb[0].mxu0
        %v991 = vadd.f32 0.0, %v990
        %992 = vdwg.mxu0
        %993 = vmatprep.subr.bf16.mxu0 %v934
        %994 = vmatpush1.bf16.msra.mxu0 %v933
        %995 = vmatprep.subr.bf16.mxu0 %v938
        %996 = vmatpush1.bf16.msra.mxu0 %v937
        %997 = vmatprep.subr.bf16.mxu0 0
        %998 = vmatpush1.bf16.msra.mxu0 0
        %999 = vmatprep.subr.bf16.mxu0 0
        %1000 = vmatpush1.bf16.msra.mxu0 0
        %1001 = vmatprep.subr.bf16.mxu0 0
        %1002 = vmatpush1.bf16.msra.mxu0 0
        %1003 = vmatprep.subr.bf16.mxu0 0
        %1004 = vmatpush1.bf16.msra.mxu0 0
        %1005 = vmatprep.subr.bf16.mxu0 0
        %1006 = vmatpush1.bf16.msra.mxu0 0
        %1007 = vmatprep.subr.bf16.mxu0 0
        %1008 = vmatpush1.bf16.msra.mxu0 0
        %1009 = vmatprep.subr.bf16.mxu0 0
        %1010 = vmatpush1.bf16.msra.mxu0 0
        %1011 = vmatprep.subr.bf16.mxu0 0
        %1012 = vmatpush1.bf16.msra.mxu0 0
        %1013 = vmatprep.subr.bf16.mxu0 0
        %1014 = vmatpush1.bf16.msra.mxu0 0
        %1015 = vmatprep.subr.bf16.mxu0 0
        %1016 = vmatpush1.bf16.msra.mxu0 0
        %1017 = vmatprep.subr.bf16.mxu0 0
        %1018 = vmatpush1.bf16.msra.mxu0 0
        %1019 = vmatprep.subr.bf16.mxu0 0
        %1020 = vmatpush1.bf16.msra.mxu0 0
        %1021 = vmatprep.subr.bf16.mxu0 0
        %1022 = vmatpush1.bf16.msra.mxu0 0
        %1023 = vmatprep.subr.bf16.mxu0 0
        %1024 = vmatpush1.bf16.msra.mxu0 0
        %1025 = vmatprep.mubr.bf16.mxu0 0
        %1026 = vmatmul.mubr.bf16.gmra.mrb[0].mxu0 %v948
        %v1027 = vpop.f32.mrb[0].mxu0
        %v1028 = vadd.f32 0.0, %v1027
        %v1029 = vpop.f32.mrb[0].mxu0
        %v1030 = vadd.f32 0.0, %v1029
        %v1031 = vpop.f32.mrb[0].mxu0
        %v1032 = vadd.f32 0.0, %v1031
        %v1033 = vpop.f32.mrb[0].mxu0
        %v1034 = vadd.f32 0.0, %v1033
        %1035 = vdwg.mxu0
        %v1036 = vld [vmem:[#allocation11] sm:$0x1]
        %v1038 = vlaneseq
        %v1039 = vshrl.u32 %v1038, 7
        %v1040 = vsub.s32 0, %v1039
        %v1041 = vrot.slane %v1036, %v1040
        %v1043 = vadd.f32 %v1030, %v1041
        %v1044 = vadd.f32 %v1034, %v1041
        %v1045 = vmul.f32 %v1043, 1.442695
        %v1046 = vpow.pop %v1045
        %v1047 = vmul.f32 %v1044, 1.442695
        %v1048 = vpow.pop %v1047
        %v1049 = vunpack.c.l.bf16 %v849
        %v1050 = vunpack.c.l.bf16 %v850
        %1052 = vset.pattern.permute.xlu0 1
        %1053 = vperm.xlu0 %1052, %v1046
        %v1054 = vpop.permute.xlu0 %1053
        %1057 = vset.pattern.permute.xlu0 1
        %1058 = vperm.xlu0 %1057, %v1048
        %v1059 = vpop.permute.xlu0 %1058
        %v1061 = vmul.f32 %v1054, %v1049
        %v1062 = vmul.f32 %v1059, %v1050
        %v1063 = vpack.c.bf16 %v989, %v985
        %v1064 = vpack.c.bf16 %v991, %v987
        %v1065 = vpack.c.bf16 %v1032, %v1028
        %v1067 = vsel %vm853, %v1063, 0
        %v1070 = vsel %vm853, %v1064, 0
        %1072 = vmatprep.subr.bf16.mxu0 0
        %1073 = vmatpush1.bf16.xpose.msra.mxu0 %v1070
        %1074 = vmatprep.subr.bf16.mxu0 0
        %1075 = vmatpush1.bf16.xpose.msra.mxu0 0
        %1076 = vmatprep.subr.bf16.mxu0 0
        %1077 = vmatpush1.bf16.xpose.msra.mxu0 0
        %1078 = vmatprep.subr.bf16.mxu0 0
        %1079 = vmatpush1.bf16.xpose.msra.mxu0 0
        %1080 = vmatprep.subr.bf16.mxu0 0
        %1081 = vmatpush1.bf16.xpose.msra.mxu0 0
        %1082 = vmatprep.subr.bf16.mxu0 0
        %1083 = vmatpush1.bf16.xpose.msra.mxu0 0
        %1084 = vmatprep.subr.bf16.mxu0 0
        %1085 = vmatpush1.bf16.xpose.msra.mxu0 0
        %1086 = vmatprep.subr.bf16.mxu0 0
        %1087 = vmatpush1.bf16.xpose.msra.mxu0 0
        %1088 = vmatprep.subr.bf16.mxu0 0
        %1089 = vmatpush1.bf16.xpose.msra.mxu0 0
        %1090 = vmatprep.subr.bf16.mxu0 0
        %1091 = vmatpush1.bf16.xpose.msra.mxu0 0
        %1092 = vmatprep.subr.bf16.mxu0 0
        %1093 = vmatpush1.bf16.xpose.msra.mxu0 0
        %1094 = vmatprep.subr.bf16.mxu0 0
        %1095 = vmatpush1.bf16.xpose.msra.mxu0 0
        %1096 = vmatprep.subr.bf16.mxu0 0
        %1097 = vmatpush1.bf16.xpose.msra.mxu0 0
        %1098 = vmatprep.subr.bf16.mxu0 0
        %1099 = vmatpush1.bf16.xpose.msra.mxu0 0
        %1100 = vmatprep.subr.bf16.mxu0 0
        %1101 = vmatpush1.bf16.xpose.msra.mxu0 0
        %1102 = vmatprep.subr.bf16.mxu0 0
        %1103 = vmatpush1.bf16.xpose.msra.mxu0 0
        %1104 = vmatprep.mubr.bf16.mxu0 0
        %1105 = vmatmul.mubr.bf16.gmra.mrb[0].mxu0 %v1067
        %v1106 = vpop.f32.mrb[0].mxu0
        %v1107 = vadd.f32 0.0, %v1106
        %v1108 = vpop.f32.mrb[0].mxu0
        %v1109 = vpop.f32.mrb[0].mxu0
        %v1110 = vadd.f32 0.0, %v1109
        %v1111 = vpop.f32.mrb[0].mxu0
        %1112 = vdwg.mxu0
        %1113 = vset.pattern.permute.xlu0 0
        %1114 = vperm.xlu0 %1113, %v1046
        %v1115 = vpop.permute.xlu0 %1114
        %1117 = vset.pattern.permute.xlu0 0
        %1118 = vperm.xlu0 %1117, %v1048
        %v1119 = vpop.permute.xlu0 %1118
        %v1121 = vmul.f32 %v1115, %v1107
        %v1122 = vmul.f32 %v1119, %v1110
        %v1123 = vadd.f32 %v1121, %v1061
        %v1124 = vadd.f32 %v1122, %v1062
        %vm1125 = vcmask 72704
        %v1126 = vsel %vm1125, %v1123, -inf
        %1127 = vmax.xlane.f32.xlu0 %v1126
        %v1128 = vpop.xlane.xlu0 %1127
        %vm1129 = vcmask 65536
        %v1130 = vsel %vm1129, %v1124, -inf
        %1131 = vmax.xlane.f32.xlu0 %v1130
        %v1132 = vpop.xlane.xlu0 %1131
        %v1133 = vsub.f32 %v1123, %v1128
        %v1134 = vsub.f32 %v1124, %v1132
        %v1135 = vmul.f32 %v1133, 1.442695
        %v1136 = vpow.pop %v1135
        %v1137 = vmul.f32 %v1134, 1.442695
        %v1138 = vpow.pop %v1137
        %v1139 = vsel %vm1125, %v1136, 0.0
        %1140 = vadd.xlane.f32.xlu0 %v1139
        %v1141 = vpop.xlane.xlu0 %1140
        %v1142 = vsel %vm1129, %v1138, 0.0
        %1143 = vadd.xlane.f32.xlu0 %v1142
        %v1144 = vpop.xlane.xlu0 %1143
        %v1145 = vrcp.pop %v1141
        %v1146 = vrcp.pop %v1144
        %v1147 = vmul.f32 %v1136, %v1145
        %v1148 = vmul.f32 %v1138, %v1146
        %v1149 = vpack.c.bf16 %v1148, %v1147
        %v1151 = vsel %vm1125, %v1149, 0
        %vm1153 = vcmask 1043456
        %vm1154 = vcmask 1044480
        %v1155 = vsel %vm1153, 4294967295, 65535
        %v1156 = vsel %vm1154, %v1155, 0
        %v1158 = vand.u32 %v1065, %v1156
        %1160 = vmatprep.subr.bf16.mxu0 0
        %1161 = vmatpush1.bf16.msra.mxu0 %v1158
        %1162 = vmatprep.subr.bf16.mxu0 0
        %1163 = vmatpush1.bf16.msra.mxu0 0
        %1164 = vmatprep.subr.bf16.mxu0 0
        %1165 = vmatpush1.bf16.msra.mxu0 0
        %1166 = vmatprep.subr.bf16.mxu0 0
        %1167 = vmatpush1.bf16.msra.mxu0 0
        %1168 = vmatprep.subr.bf16.mxu0 0
        %1169 = vmatpush1.bf16.msra.mxu0 0
        %1170 = vmatprep.subr.bf16.mxu0 0
        %1171 = vmatpush1.bf16.msra.mxu0 0
        %1172 = vmatprep.subr.bf16.mxu0 0
        %1173 = vmatpush1.bf16.msra.mxu0 0
        %1174 = vmatprep.subr.bf16.mxu0 0
        %1175 = vmatpush1.bf16.msra.mxu0 0
        %1176 = vmatprep.subr.bf16.mxu0 0
        %1177 = vmatpush1.bf16.msra.mxu0 0
        %1178 = vmatprep.subr.bf16.mxu0 0
        %1179 = vmatpush1.bf16.msra.mxu0 0
        %1180 = vmatprep.subr.bf16.mxu0 0
        %1181 = vmatpush1.bf16.msra.mxu0 0
        %1182 = vmatprep.subr.bf16.mxu0 0
        %1183 = vmatpush1.bf16.msra.mxu0 0
        %1184 = vmatprep.subr.bf16.mxu0 0
        %1185 = vmatpush1.bf16.msra.mxu0 0
        %1186 = vmatprep.subr.bf16.mxu0 0
        %1187 = vmatpush1.bf16.msra.mxu0 0
        %1188 = vmatprep.subr.bf16.mxu0 0
        %1189 = vmatpush1.bf16.msra.mxu0 0
        %1190 = vmatprep.subr.bf16.mxu0 0
        %1191 = vmatpush1.bf16.msra.mxu0 0
        %1192 = vmatprep.mubr.bf16.mxu0 0
        %1193 = vmatmul.mubr.bf16.gmra.mrb[0].mxu0 %v1151
        %v1194 = vpop.f32.mrb[0].mxu0
        %v1195 = vadd.f32 0.0, %v1194
        %v1196 = vpop.f32.mrb[0].mxu0
        %v1197 = vpop.f32.mrb[0].mxu0
        %v1198 = vadd.f32 0.0, %v1197
        %v1199 = vpop.f32.mrb[0].mxu0
        %1200 = vdwg.mxu0
        %v1201 = vpack.c.bf16 %v1198, %v1195
        %1203 = vrot.lane.b32.xlu0 %v1063, 96
        %v1204 = vpop.permute.xlu0 %1203
        %1206 = vrot.lane.b32.xlu0 %v1064, 96
        %v1207 = vpop.permute.xlu0 %1206
        %v1209 = vsel %vm853, %v1204, 0
        %v1212 = vsel %vm853, %v1207, 0
        %1214 = vmatprep.subr.bf16.mxu0 0
        %1215 = vmatpush1.bf16.xpose.msra.mxu0 %v1212
        %1216 = vmatprep.subr.bf16.mxu0 0
        %1217 = vmatpush1.bf16.xpose.msra.mxu0 0
        %1218 = vmatprep.subr.bf16.mxu0 0
        %1219 = vmatpush1.bf16.xpose.msra.mxu0 0
        %1220 = vmatprep.subr.bf16.mxu0 0
        %1221 = vmatpush1.bf16.xpose.msra.mxu0 0
        %1222 = vmatprep.subr.bf16.mxu0 0
        %1223 = vmatpush1.bf16.xpose.msra.mxu0 0
        %1224 = vmatprep.subr.bf16.mxu0 0
        %1225 = vmatpush1.bf16.xpose.msra.mxu0 0
        %1226 = vmatprep.subr.bf16.mxu0 0
        %1227 = vmatpush1.bf16.xpose.msra.mxu0 0
        %1228 = vmatprep.subr.bf16.mxu0 0
        %1229 = vmatpush1.bf16.xpose.msra.mxu0 0
        %1230 = vmatprep.subr.bf16.mxu0 0
        %1231 = vmatpush1.bf16.xpose.msra.mxu0 0
        %1232 = vmatprep.subr.bf16.mxu0 0
        %1233 = vmatpush1.bf16.xpose.msra.mxu0 0
        %1234 = vmatprep.subr.bf16.mxu0 0
        %1235 = vmatpush1.bf16.xpose.msra.mxu0 0
        %1236 = vmatprep.subr.bf16.mxu0 0
        %1237 = vmatpush1.bf16.xpose.msra.mxu0 0
        %1238 = vmatprep.subr.bf16.mxu0 0
        %1239 = vmatpush1.bf16.xpose.msra.mxu0 0
        %1240 = vmatprep.subr.bf16.mxu0 0
        %1241 = vmatpush1.bf16.xpose.msra.mxu0 0
        %1242 = vmatprep.subr.bf16.mxu0 0
        %1243 = vmatpush1.bf16.xpose.msra.mxu0 0
        %1244 = vmatprep.subr.bf16.mxu0 0
        %1245 = vmatpush1.bf16.xpose.msra.mxu0 0
        %1246 = vmatprep.mubr.bf16.mxu0 0
        %1247 = vmatmul.mubr.bf16.gmra.mrb[0].mxu0 %v1209
        %v1248 = vpop.f32.mrb[0].mxu0
        %v1249 = vadd.f32 0.0, %v1248
        %v1250 = vpop.f32.mrb[0].mxu0
        %v1251 = vpop.f32.mrb[0].mxu0
        %v1252 = vadd.f32 0.0, %v1251
        %v1253 = vpop.f32.mrb[0].mxu0
        %1254 = vdwg.mxu0
        %v1255 = vmul.f32 %v1115, %v1249
        %v1256 = vmul.f32 %v1119, %v1252
        %v1257 = vadd.f32 %v1255, %v1061
        %v1258 = vadd.f32 %v1256, %v1062
        %v1259 = vsel %vm1125, %v1257, -inf
        %1260 = vmax.xlane.f32.xlu0 %v1259
        %v1261 = vpop.xlane.xlu0 %1260
        %v1262 = vsel %vm1129, %v1258, -inf
        %1263 = vmax.xlane.f32.xlu0 %v1262
        %v1264 = vpop.xlane.xlu0 %1263
        %v1265 = vsub.f32 %v1257, %v1261
        %v1266 = vsub.f32 %v1258, %v1264
        %v1267 = vmul.f32 %v1265, 1.442695
        %v1268 = vpow.pop %v1267
        %v1269 = vmul.f32 %v1266, 1.442695
        %v1270 = vpow.pop %v1269
        %v1271 = vsel %vm1125, %v1268, 0.0
        %1272 = vadd.xlane.f32.xlu0 %v1271
        %v1273 = vpop.xlane.xlu0 %1272
        %v1274 = vsel %vm1129, %v1270, 0.0
        %1275 = vadd.xlane.f32.xlu0 %v1274
        %v1276 = vpop.xlane.xlu0 %1275
        %v1277 = vrcp.pop %v1273
        %v1278 = vrcp.pop %v1276
        %v1279 = vmul.f32 %v1268, %v1277
        %v1280 = vmul.f32 %v1270, %v1278
        %v1281 = vpack.c.bf16 %v1280, %v1279
        %1283 = vrot.lane.b32.xlu0 %v1065, 96
        %v1284 = vpop.permute.xlu0 %1283
        %v1286 = vsel %vm1125, %v1281, 0
        %v1289 = vand.u32 %v1284, %v1156
        %1291 = vmatprep.subr.bf16.mxu0 0
        %1292 = vmatpush1.bf16.msra.mxu0 %v1289
        %1293 = vmatprep.subr.bf16.mxu0 0
        %1294 = vmatpush1.bf16.msra.mxu0 0
        %1295 = vmatprep.subr.bf16.mxu0 0
        %1296 = vmatpush1.bf16.msra.mxu0 0
        %1297 = vmatprep.subr.bf16.mxu0 0
        %1298 = vmatpush1.bf16.msra.mxu0 0
        %1299 = vmatprep.subr.bf16.mxu0 0
        %1300 = vmatpush1.bf16.msra.mxu0 0
        %1301 = vmatprep.subr.bf16.mxu0 0
        %1302 = vmatpush1.bf16.msra.mxu0 0
        %1303 = vmatprep.subr.bf16.mxu0 0
        %1304 = vmatpush1.bf16.msra.mxu0 0
        %1305 = vmatprep.subr.bf16.mxu0 0
        %1306 = vmatpush1.bf16.msra.mxu0 0
        %1307 = vmatprep.subr.bf16.mxu0 0
        %1308 = vmatpush1.bf16.msra.mxu0 0
        %1309 = vmatprep.subr.bf16.mxu0 0
        %1310 = vmatpush1.bf16.msra.mxu0 0
        %1311 = vmatprep.subr.bf16.mxu0 0
        %1312 = vmatpush1.bf16.msra.mxu0 0
        %1313 = vmatprep.subr.bf16.mxu0 0
        %1314 = vmatpush1.bf16.msra.mxu0 0
        %1315 = vmatprep.subr.bf16.mxu0 0
        %1316 = vmatpush1.bf16.msra.mxu0 0
        %1317 = vmatprep.subr.bf16.mxu0 0
        %1318 = vmatpush1.bf16.msra.mxu0 0
        %1319 = vmatprep.subr.bf16.mxu0 0
        %1320 = vmatpush1.bf16.msra.mxu0 0
        %1321 = vmatprep.subr.bf16.mxu0 0
        %1322 = vmatpush1.bf16.msra.mxu0 0
        %1323 = vmatprep.mubr.bf16.mxu0 0
        %1324 = vmatmul.mubr.bf16.gmra.mrb[0].mxu0 %v1286
        %v1325 = vpop.f32.mrb[0].mxu0
        %v1326 = vadd.f32 0.0, %v1325
        %v1327 = vpop.f32.mrb[0].mxu0
        %v1328 = vpop.f32.mrb[0].mxu0
        %v1329 = vadd.f32 0.0, %v1328
        %v1330 = vpop.f32.mrb[0].mxu0
        %1331 = vdwg.mxu0
        %v1332 = vpack.c.bf16 %v1329, %v1326
        %1333 = vrot.lane.b32.xlu0 %v1063, 64
        %v1334 = vpop.permute.xlu0 %1333
        %1335 = vrot.lane.b32.xlu0 %v1064, 64
        %v1336 = vpop.permute.xlu0 %1335
        %v1338 = vsel %vm853, %v1334, 0
        %v1341 = vsel %vm853, %v1336, 0
        %1343 = vmatprep.subr.bf16.mxu0 0
        %1344 = vmatpush1.bf16.xpose.msra.mxu0 %v1341
        %1345 = vmatprep.subr.bf16.mxu0 0
        %1346 = vmatpush1.bf16.xpose.msra.mxu0 0
        %1347 = vmatprep.subr.bf16.mxu0 0
        %1348 = vmatpush1.bf16.xpose.msra.mxu0 0
        %1349 = vmatprep.subr.bf16.mxu0 0
        %1350 = vmatpush1.bf16.xpose.msra.mxu0 0
        %1351 = vmatprep.subr.bf16.mxu0 0
        %1352 = vmatpush1.bf16.xpose.msra.mxu0 0
        %1353 = vmatprep.subr.bf16.mxu0 0
        %1354 = vmatpush1.bf16.xpose.msra.mxu0 0
        %1355 = vmatprep.subr.bf16.mxu0 0
        %1356 = vmatpush1.bf16.xpose.msra.mxu0 0
        %1357 = vmatprep.subr.bf16.mxu0 0
        %1358 = vmatpush1.bf16.xpose.msra.mxu0 0
        %1359 = vmatprep.subr.bf16.mxu0 0
        %1360 = vmatpush1.bf16.xpose.msra.mxu0 0
        %1361 = vmatprep.subr.bf16.mxu0 0
        %1362 = vmatpush1.bf16.xpose.msra.mxu0 0
        %1363 = vmatprep.subr.bf16.mxu0 0
        %1364 = vmatpush1.bf16.xpose.msra.mxu0 0
        %1365 = vmatprep.subr.bf16.mxu0 0
        %1366 = vmatpush1.bf16.xpose.msra.mxu0 0
        %1367 = vmatprep.subr.bf16.mxu0 0
        %1368 = vmatpush1.bf16.xpose.msra.mxu0 0
        %1369 = vmatprep.subr.bf16.mxu0 0
        %1370 = vmatpush1.bf16.xpose.msra.mxu0 0
        %1371 = vmatprep.subr.bf16.mxu0 0
        %1372 = vmatpush1.bf16.xpose.msra.mxu0 0
        %1373 = vmatprep.subr.bf16.mxu0 0
        %1374 = vmatpush1.bf16.xpose.msra.mxu0 0
        %1375 = vmatprep.mubr.bf16.mxu0 0
        %1376 = vmatmul.mubr.bf16.gmra.mrb[0].mxu0 %v1338
        %v1377 = vpop.f32.mrb[0].mxu0
        %v1378 = vadd.f32 0.0, %v1377
        %v1379 = vpop.f32.mrb[0].mxu0
        %v1380 = vpop.f32.mrb[0].mxu0
        %v1381 = vadd.f32 0.0, %v1380
        %v1382 = vpop.f32.mrb[0].mxu0
        %1383 = vdwg.mxu0
        %v1384 = vmul.f32 %v1115, %v1378
        %v1385 = vmul.f32 %v1119, %v1381
        %v1386 = vadd.f32 %v1384, %v1061
        %v1387 = vadd.f32 %v1385, %v1062
        %v1388 = vsel %vm1125, %v1386, -inf
        %1389 = vmax.xlane.f32.xlu0 %v1388
        %v1390 = vpop.xlane.xlu0 %1389
        %v1391 = vsel %vm1129, %v1387, -inf
        %1392 = vmax.xlane.f32.xlu0 %v1391
        %v1393 = vpop.xlane.xlu0 %1392
        %v1394 = vsub.f32 %v1386, %v1390
        %v1395 = vsub.f32 %v1387, %v1393
        %v1396 = vmul.f32 %v1394, 1.442695
        %v1397 = vpow.pop %v1396
        %v1398 = vmul.f32 %v1395, 1.442695
        %v1399 = vpow.pop %v1398
        %v1400 = vsel %vm1125, %v1397, 0.0
        %1401 = vadd.xlane.f32.xlu0 %v1400
        %v1402 = vpop.xlane.xlu0 %1401
        %v1403 = vsel %vm1129, %v1399, 0.0
        %1404 = vadd.xlane.f32.xlu0 %v1403
        %v1405 = vpop.xlane.xlu0 %1404
        %v1406 = vrcp.pop %v1402
        %v1407 = vrcp.pop %v1405
        %v1408 = vmul.f32 %v1397, %v1406
        %v1409 = vmul.f32 %v1399, %v1407
        %v1410 = vpack.c.bf16 %v1409, %v1408
        %1411 = vrot.lane.b32.xlu0 %v1065, 64
        %v1412 = vpop.permute.xlu0 %1411
        %v1414 = vsel %vm1125, %v1410, 0
        %v1417 = vand.u32 %v1412, %v1156
        %1419 = vmatprep.subr.bf16.mxu0 0
        %1420 = vmatpush1.bf16.msra.mxu0 %v1417
        %1421 = vmatprep.subr.bf16.mxu0 0
        %1422 = vmatpush1.bf16.msra.mxu0 0
        %1423 = vmatprep.subr.bf16.mxu0 0
        %1424 = vmatpush1.bf16.msra.mxu0 0
        %1425 = vmatprep.subr.bf16.mxu0 0
        %1426 = vmatpush1.bf16.msra.mxu0 0
        %1427 = vmatprep.subr.bf16.mxu0 0
        %1428 = vmatpush1.bf16.msra.mxu0 0
        %1429 = vmatprep.subr.bf16.mxu0 0
        %1430 = vmatpush1.bf16.msra.mxu0 0
        %1431 = vmatprep.subr.bf16.mxu0 0
        %1432 = vmatpush1.bf16.msra.mxu0 0
        %1433 = vmatprep.subr.bf16.mxu0 0
        %1434 = vmatpush1.bf16.msra.mxu0 0
        %1435 = vmatprep.subr.bf16.mxu0 0
        %1436 = vmatpush1.bf16.msra.mxu0 0
        %1437 = vmatprep.subr.bf16.mxu0 0
        %1438 = vmatpush1.bf16.msra.mxu0 0
        %1439 = vmatprep.subr.bf16.mxu0 0
        %1440 = vmatpush1.bf16.msra.mxu0 0
        %1441 = vmatprep.subr.bf16.mxu0 0
        %1442 = vmatpush1.bf16.msra.mxu0 0
        %1443 = vmatprep.subr.bf16.mxu0 0
        %1444 = vmatpush1.bf16.msra.mxu0 0
        %1445 = vmatprep.subr.bf16.mxu0 0
        %1446 = vmatpush1.bf16.msra.mxu0 0
        %1447 = vmatprep.subr.bf16.mxu0 0
        %1448 = vmatpush1.bf16.msra.mxu0 0
        %1449 = vmatprep.subr.bf16.mxu0 0
        %1450 = vmatpush1.bf16.msra.mxu0 0
        %1451 = vmatprep.mubr.bf16.mxu0 0
        %1452 = vmatmul.mubr.bf16.gmra.mrb[0].mxu0 %v1414
        %v1453 = vpop.f32.mrb[0].mxu0
        %v1454 = vadd.f32 0.0, %v1453
        %v1455 = vpop.f32.mrb[0].mxu0
        %v1456 = vpop.f32.mrb[0].mxu0
        %v1457 = vadd.f32 0.0, %v1456
        %v1458 = vpop.f32.mrb[0].mxu0
        %1459 = vdwg.mxu0
        %v1460 = vpack.c.bf16 %v1457, %v1454
        %1461 = vrot.lane.b32.xlu0 %v1063, 32
        %v1462 = vpop.permute.xlu0 %1461
        %1463 = vrot.lane.b32.xlu0 %v1064, 32
        %v1464 = vpop.permute.xlu0 %1463
        %v1466 = vsel %vm853, %v1462, 0
        %v1469 = vsel %vm853, %v1464, 0
        %1471 = vmatprep.subr.bf16.mxu0 0
        %1472 = vmatpush1.bf16.xpose.msra.mxu0 %v1469
        %1473 = vmatprep.subr.bf16.mxu0 0
        %1474 = vmatpush1.bf16.xpose.msra.mxu0 0
        %1475 = vmatprep.subr.bf16.mxu0 0
        %1476 = vmatpush1.bf16.xpose.msra.mxu0 0
        %1477 = vmatprep.subr.bf16.mxu0 0
        %1478 = vmatpush1.bf16.xpose.msra.mxu0 0
        %1479 = vmatprep.subr.bf16.mxu0 0
        %1480 = vmatpush1.bf16.xpose.msra.mxu0 0
        %1481 = vmatprep.subr.bf16.mxu0 0
        %1482 = vmatpush1.bf16.xpose.msra.mxu0 0
        %1483 = vmatprep.subr.bf16.mxu0 0
        %1484 = vmatpush1.bf16.xpose.msra.mxu0 0
        %1485 = vmatprep.subr.bf16.mxu0 0
        %1486 = vmatpush1.bf16.xpose.msra.mxu0 0
        %1487 = vmatprep.subr.bf16.mxu0 0
        %1488 = vmatpush1.bf16.xpose.msra.mxu0 0
        %1489 = vmatprep.subr.bf16.mxu0 0
        %1490 = vmatpush1.bf16.xpose.msra.mxu0 0
        %1491 = vmatprep.subr.bf16.mxu0 0
        %1492 = vmatpush1.bf16.xpose.msra.mxu0 0
        %1493 = vmatprep.subr.bf16.mxu0 0
        %1494 = vmatpush1.bf16.xpose.msra.mxu0 0
        %1495 = vmatprep.subr.bf16.mxu0 0
        %1496 = vmatpush1.bf16.xpose.msra.mxu0 0
        %1497 = vmatprep.subr.bf16.mxu0 0
        %1498 = vmatpush1.bf16.xpose.msra.mxu0 0
        %1499 = vmatprep.subr.bf16.mxu0 0
        %1500 = vmatpush1.bf16.xpose.msra.mxu0 0
        %1501 = vmatprep.subr.bf16.mxu0 0
        %1502 = vmatpush1.bf16.xpose.msra.mxu0 0
        %1503 = vmatprep.mubr.bf16.mxu0 0
        %1504 = vmatmul.mubr.bf16.gmra.mrb[0].mxu0 %v1466
        %v1505 = vpop.f32.mrb[0].mxu0
        %v1506 = vadd.f32 0.0, %v1505
        %v1507 = vpop.f32.mrb[0].mxu0
        %v1508 = vpop.f32.mrb[0].mxu0
        %v1509 = vadd.f32 0.0, %v1508
        %v1510 = vpop.f32.mrb[0].mxu0
        %1511 = vdwg.mxu0
        %v1512 = vmul.f32 %v1115, %v1506
        %v1513 = vmul.f32 %v1119, %v1509
        %v1514 = vadd.f32 %v1512, %v1061
        %v1515 = vadd.f32 %v1513, %v1062
        %v1516 = vsel %vm1125, %v1514, -inf
        %1517 = vmax.xlane.f32.xlu0 %v1516
        %v1518 = vpop.xlane.xlu0 %1517
        %v1519 = vsel %vm1129, %v1515, -inf
        %1520 = vmax.xlane.f32.xlu0 %v1519
        %v1521 = vpop.xlane.xlu0 %1520
        %v1522 = vsub.f32 %v1514, %v1518
        %v1523 = vsub.f32 %v1515, %v1521
        %v1524 = vmul.f32 %v1522, 1.442695
        %v1525 = vpow.pop %v1524
        %v1526 = vmul.f32 %v1523, 1.442695
        %v1527 = vpow.pop %v1526
        %v1528 = vsel %vm1125, %v1525, 0.0
        %1529 = vadd.xlane.f32.xlu0 %v1528
        %v1530 = vpop.xlane.xlu0 %1529
        %v1531 = vsel %vm1129, %v1527, 0.0
        %1532 = vadd.xlane.f32.xlu0 %v1531
        %v1533 = vpop.xlane.xlu0 %1532
        %v1534 = vrcp.pop %v1530
        %v1535 = vrcp.pop %v1533
        %v1536 = vmul.f32 %v1525, %v1534
        %v1537 = vmul.f32 %v1527, %v1535
        %v1538 = vpack.c.bf16 %v1537, %v1536
        %1539 = vrot.lane.b32.xlu0 %v1065, 32
        %v1540 = vpop.permute.xlu0 %1539
        %v1542 = vsel %vm1125, %v1538, 0
        %v1545 = vand.u32 %v1540, %v1156
        %1547 = vmatprep.subr.bf16.mxu0 0
        %1548 = vmatpush1.bf16.msra.mxu0 %v1545
        %1549 = vmatprep.subr.bf16.mxu0 0
        %1550 = vmatpush1.bf16.msra.mxu0 0
        %1551 = vmatprep.subr.bf16.mxu0 0
        %1552 = vmatpush1.bf16.msra.mxu0 0
        %1553 = vmatprep.subr.bf16.mxu0 0
        %1554 = vmatpush1.bf16.msra.mxu0 0
        %1555 = vmatprep.subr.bf16.mxu0 0
        %1556 = vmatpush1.bf16.msra.mxu0 0
        %1557 = vmatprep.subr.bf16.mxu0 0
        %1558 = vmatpush1.bf16.msra.mxu0 0
        %1559 = vmatprep.subr.bf16.mxu0 0
        %1560 = vmatpush1.bf16.msra.mxu0 0
        %1561 = vmatprep.subr.bf16.mxu0 0
        %1562 = vmatpush1.bf16.msra.mxu0 0
        %1563 = vmatprep.subr.bf16.mxu0 0
        %1564 = vmatpush1.bf16.msra.mxu0 0
        %1565 = vmatprep.subr.bf16.mxu0 0
        %1566 = vmatpush1.bf16.msra.mxu0 0
        %1567 = vmatprep.subr.bf16.mxu0 0
        %1568 = vmatpush1.bf16.msra.mxu0 0
        %1569 = vmatprep.subr.bf16.mxu0 0
        %1570 = vmatpush1.bf16.msra.mxu0 0
        %1571 = vmatprep.subr.bf16.mxu0 0
        %1572 = vmatpush1.bf16.msra.mxu0 0
        %1573 = vmatprep.subr.bf16.mxu0 0
        %1574 = vmatpush1.bf16.msra.mxu0 0
        %1575 = vmatprep.subr.bf16.mxu0 0
        %1576 = vmatpush1.bf16.msra.mxu0 0
        %1577 = vmatprep.subr.bf16.mxu0 0
        %1578 = vmatpush1.bf16.msra.mxu0 0
        %1579 = vmatprep.mubr.bf16.mxu0 0
        %1580 = vmatmul.mubr.bf16.gmra.mrb[0].mxu0 %v1542
        %v1581 = vpop.f32.mrb[0].mxu0
        %v1582 = vadd.f32 0.0, %v1581
        %v1583 = vpop.f32.mrb[0].mxu0
        %v1584 = vpop.f32.mrb[0].mxu0
        %v1585 = vadd.f32 0.0, %v1584
        %v1586 = vpop.f32.mrb[0].mxu0
        %1587 = vdwg.mxu0
        %v1588 = vpack.c.bf16 %v1585, %v1582
        %1590 = vrot.lane.b32.xlu0 %v1332, 32
        %v1591 = vpop.permute.xlu0 %1590
        %1593 = vrot.lane.b32.xlu0 %v1460, 64
        %v1594 = vpop.permute.xlu0 %1593
        %1596 = vrot.lane.b32.xlu0 %v1588, 96
        %v1597 = vpop.permute.xlu0 %1596
        %v1600 = vsel %vm853, %v1201, %v1591
        %vm1601 = vcmask 523264
        %v1603 = vsel %vm1601, %v1600, %v1594
        %vm1604 = vcmask 785408
        %v1606 = vsel %vm1604, %v1603, %v1597
        %v1608 = vld [vmem:[#allocation13] sm:$0xf]
        %v1609 = vld [vmem:[#allocation13 + $0x4] sm:$0xf]
        %v1610 = vld [vmem:[#allocation13 + $0x8] sm:$0xf]
        %v1611 = vld [vmem:[#allocation13 + $0xc] sm:$0xf]
        %v1612 = vld [vmem:[#allocation13 + $0x10] sm:$0xf]
        %v1613 = vld [vmem:[#allocation13 + $0x14] sm:$0xf]
        %v1614 = vld [vmem:[#allocation13 + $0x18] sm:$0xf]
        %v1615 = vld [vmem:[#allocation13 + $0x1c] sm:$0xf]
        %v1616 = vld [vmem:[#allocation13 + $0x20] sm:$0xf]
        %v1617 = vld [vmem:[#allocation13 + $0x24] sm:$0xf]
        %v1618 = vld [vmem:[#allocation13 + $0x28] sm:$0xf]
        %v1619 = vld [vmem:[#allocation13 + $0x2c] sm:$0xf]
        %v1620 = vld [vmem:[#allocation13 + $0x30] sm:$0xf]
        %v1621 = vld [vmem:[#allocation13 + $0x34] sm:$0xf]
        %v1622 = vld [vmem:[#allocation13 + $0x38] sm:$0xf]
        %v1623 = vld [vmem:[#allocation13 + $0x3c] sm:$0xf]
        %v1624 = vld [vmem:[#allocation14] sm:$0x1]
        %v1626 = vlaneseq
        %v1627 = vshrl.u32 %v1626, 7
        %v1628 = vsub.s32 0, %v1627
        %v1629 = vrot.slane %v1624, %v1628
        %v1647 = vunpack.c.l.b16 %v1608
        %v1648 = vunpack.c.l.b16 %v1609
        %v1649 = vunpack.c.l.b16 %v1610
        %v1650 = vunpack.c.l.b16 %v1611
        %v1651 = vunpack.c.l.b16 %v1612
        %v1652 = vunpack.c.l.b16 %v1613
        %v1653 = vunpack.c.l.b16 %v1614
        %v1654 = vunpack.c.l.b16 %v1615
        %v1655 = vunpack.c.l.b16 %v1616
        %v1656 = vunpack.c.l.b16 %v1617
        %v1657 = vunpack.c.l.b16 %v1618
        %v1658 = vunpack.c.l.b16 %v1619
        %v1659 = vunpack.c.l.b16 %v1620
        %v1660 = vunpack.c.l.b16 %v1621
        %v1661 = vunpack.c.l.b16 %v1622
        %v1662 = vunpack.c.l.b16 %v1623
        %v1663 = vpack.c.b16 %v1648, %v1647
        %v1664 = vpack.c.b16 %v1650, %v1649
        %v1665 = vpack.c.b16 %v1652, %v1651
        %v1666 = vpack.c.b16 %v1654, %v1653
        %v1667 = vpack.c.b16 %v1656, %v1655
        %v1668 = vpack.c.b16 %v1658, %v1657
        %v1669 = vpack.c.b16 %v1660, %v1659
        %v1670 = vpack.c.b16 %v1662, %v1661
        %1679 = vmatprep.subr.bf16.mxu0 0
        %1680 = vmatpush1.bf16.msra.mxu0 %v1663
        %1681 = vmatprep.subr.bf16.mxu0 0
        %1682 = vmatpush1.bf16.msra.mxu0 %v1664
        %1683 = vmatprep.subr.bf16.mxu0 0
        %1684 = vmatpush1.bf16.msra.mxu0 %v1665
        %1685 = vmatprep.subr.bf16.mxu0 0
        %1686 = vmatpush1.bf16.msra.mxu0 %v1666
        %1687 = vmatprep.subr.bf16.mxu0 0
        %1688 = vmatpush1.bf16.msra.mxu0 %v1667
        %1689 = vmatprep.subr.bf16.mxu0 0
        %1690 = vmatpush1.bf16.msra.mxu0 %v1668
        %1691 = vmatprep.subr.bf16.mxu0 0
        %1692 = vmatpush1.bf16.msra.mxu0 %v1669
        %1693 = vmatprep.subr.bf16.mxu0 0
        %1694 = vmatpush1.bf16.msra.mxu0 %v1670
        %1695 = vmatprep.subr.bf16.mxu0 0
        %1696 = vmatpush1.bf16.msra.mxu0 0
        %1697 = vmatprep.subr.bf16.mxu0 0
        %1698 = vmatpush1.bf16.msra.mxu0 0
        %1699 = vmatprep.subr.bf16.mxu0 0
        %1700 = vmatpush1.bf16.msra.mxu0 0
        %1701 = vmatprep.subr.bf16.mxu0 0
        %1702 = vmatpush1.bf16.msra.mxu0 0
        %1703 = vmatprep.subr.bf16.mxu0 0
        %1704 = vmatpush1.bf16.msra.mxu0 0
        %1705 = vmatprep.subr.bf16.mxu0 0
        %1706 = vmatpush1.bf16.msra.mxu0 0
        %1707 = vmatprep.subr.bf16.mxu0 0
        %1708 = vmatpush1.bf16.msra.mxu0 0
        %1709 = vmatprep.subr.bf16.mxu0 0
        %1710 = vmatpush1.bf16.msra.mxu0 0
        %1711 = vmatprep.mubr.bf16.mxu0 0
        %1712 = vmatmul.mubr.bf16.gmra.mrb[0].mxu0 %v1606
        %v1713 = vpop.f32.mrb[0].mxu0
        %v1714 = vadd.f32 %v1629, %v1713
        %v1715 = vpop.f32.mrb[0].mxu0
        %v1716 = vpop.f32.mrb[0].mxu0
        %v1717 = vadd.f32 %v1629, %v1716
        %v1718 = vpop.f32.mrb[0].mxu0
        %1719 = vdwg.mxu0
        %v1720 = vadd.f32 %v1714, %v896
        %v1721 = vadd.f32 %v1717, %v897
        %v1722 = vld [vmem:[#allocation16] sm:$0x1]
        %v1723 = vld [vmem:[#allocation17] sm:$0x1]
        %v1724 = vsel %vm853, %v1720, 0.0
        %1725 = vadd.xlane.f32.xlu0 %v1724
        %v1726 = vpop.xlane.xlu0 %1725
        %v1727 = vsel %vm857, %v1721, 0.0
        %1728 = vadd.xlane.f32.xlu0 %v1727
        %v1729 = vpop.xlane.xlu0 %1728
        %v1730 = vmul.f32 %v1726, %v861
        %v1731 = vmul.f32 %v1729, %v861
        %v1732 = vsub.f32 %v1720, %v1730
        %v1733 = vsub.f32 %v1721, %v1731
        %v1734 = vmul.f32 %v1732, %v1732
        %v1735 = vmul.f32 %v1733, %v1733
        %v1736 = vsel %vm853, %v1734, 0.0
        %1737 = vadd.xlane.f32.xlu0 %v1736
        %v1738 = vpop.xlane.xlu0 %1737
        %v1739 = vsel %vm857, %v1735, 0.0
        %1740 = vadd.xlane.f32.xlu0 %v1739
        %v1741 = vpop.xlane.xlu0 %1740
        %v1742 = vmul.f32 %v1738, %v861
        %v1743 = vmul.f32 %v1741, %v861
        %v1744 = vadd.f32 %v1742, 1e-05
        %v1745 = vadd.f32 %v1743, 1e-05
        %v1746 = vrsqrt.pop %v1744
        %v1747 = vrsqrt.pop %v1745
        %v1748 = vmul.f32 %v1732, %v1746
        %v1749 = vmul.f32 %v1733, %v1747
        %v1751 = vlaneseq
        %v1752 = vshrl.u32 %v1751, 7
        %v1753 = vsub.s32 0, %v1752
        %v1754 = vrot.slane %v1722, %v1753
        %v1756 = vmul.f32 %v1748, %v1754
        %v1757 = vmul.f32 %v1749, %v1754
        %v1759 = vlaneseq
        %v1760 = vshrl.u32 %v1759, 7
        %v1761 = vsub.s32 0, %v1760
        %v1762 = vrot.slane %v1723, %v1761
        %v1764 = vadd.f32 %v1756, %v1762
        %v1765 = vadd.f32 %v1757, %v1762
        %v1766 = vpack.c.bf16 %v1765, %v1764
        %v1767 = vld [vmem:[#allocation19] sm:$0xf]
        %v1768 = vld [vmem:[#allocation19 + $0x4] sm:$0xf]
        %v1769 = vld [vmem:[#allocation19 + $0x8] sm:$0xf]
        %v1770 = vld [vmem:[#allocation19 + $0xc] sm:$0xf]
        %v1771 = vld [vmem:[#allocation20] sm:$0x1]
        %v1773 = vlaneseq
        %v1774 = vshrl.u32 %v1773, 7
        %v1775 = vsub.s32 0, %v1774
        %v1776 = vrot.slane %v1771, %v1775
        %v1782 = vunpack.c.l.b16 %v1767
        %v1783 = vunpack.c.l.b16 %v1768
        %v1784 = vunpack.c.l.b16 %v1769
        %v1785 = vunpack.c.l.b16 %v1770
        %v1786 = vpack.c.b16 %v1783, %v1782
        %v1787 = vpack.c.b16 %v1785, %v1784
        %v1791 = vsel %vm853, %v1766, 0
        %1793 = vmatprep.subr.bf16.mxu0 0
        %1794 = vmatpush1.bf16.msra.mxu0 %v1786
        %1795 = vmatprep.subr.bf16.mxu0 0
        %1796 = vmatpush1.bf16.msra.mxu0 %v1787
        %1797 = vmatprep.subr.bf16.mxu0 0
        %1798 = vmatpush1.bf16.msra.mxu0 0
        %1799 = vmatprep.subr.bf16.mxu0 0
        %1800 = vmatpush1.bf16.msra.mxu0 0
        %1801 = vmatprep.subr.bf16.mxu0 0
        %1802 = vmatpush1.bf16.msra.mxu0 0
        %1803 = vmatprep.subr.bf16.mxu0 0
        %1804 = vmatpush1.bf16.msra.mxu0 0
        %1805 = vmatprep.subr.bf16.mxu0 0
        %1806 = vmatpush1.bf16.msra.mxu0 0
        %1807 = vmatprep.subr.bf16.mxu0 0
        %1808 = vmatpush1.bf16.msra.mxu0 0
        %1809 = vmatprep.subr.bf16.mxu0 0
        %1810 = vmatpush1.bf16.msra.mxu0 0
        %1811 = vmatprep.subr.bf16.mxu0 0
        %1812 = vmatpush1.bf16.msra.mxu0 0
        %1813 = vmatprep.subr.bf16.mxu0 0
        %1814 = vmatpush1.bf16.msra.mxu0 0
        %1815 = vmatprep.subr.bf16.mxu0 0
        %1816 = vmatpush1.bf16.msra.mxu0 0
        %1817 = vmatprep.subr.bf16.mxu0 0
        %1818 = vmatpush1.bf16.msra.mxu0 0
        %1819 = vmatprep.subr.bf16.mxu0 0
        %1820 = vmatpush1.bf16.msra.mxu0 0
        %1821 = vmatprep.subr.bf16.mxu0 0
        %1822 = vmatpush1.bf16.msra.mxu0 0
        %1823 = vmatprep.subr.bf16.mxu0 0
        %1824 = vmatpush1.bf16.msra.mxu0 0
        %1825 = vmatprep.mubr.bf16.mxu0 0
        %1826 = vmatmul.mubr.bf16.gmra.mrb[0].mxu0 %v1791
        %v1827 = vpop.f32.mrb[0].mxu0
        %v1828 = vadd.f32 %v1776, %v1827
        %v1829 = vpop.f32.mrb[0].mxu0
        %v1830 = vpop.f32.mrb[0].mxu0
        %v1831 = vadd.f32 %v1776, %v1830
        %v1832 = vpop.f32.mrb[0].mxu0
        %1833 = vdwg.mxu0
        %v1834 = vmul.f32 %v1828, 0.5
        %v1835 = vmul.f32 %v1831, 0.5
        %v1836 = vmul.f32 %v1828, 0.70710677
        %v1837 = vmul.f32 %v1831, 0.70710677
        %v1838 = verf.f32.pop %v1836
        %v1839 = verf.f32.pop %v1837
        %v1840 = vadd.f32 %v1838, 1.0
        %v1841 = vadd.f32 %v1839, 1.0
        %v1842 = vmul.f32 %v1834, %v1840
        %v1843 = vmul.f32 %v1835, %v1841
        %v1844 = vpack.c.bf16 %v1843, %v1842
        %v1845 = vld [vmem:[#allocation22] sm:$0xf]
        %v1846 = vld [vmem:[#allocation22 + $0x4] sm:$0xf]
        %v1847 = vld [vmem:[#allocation22 + $0x8] sm:$0xf]
        %v1848 = vld [vmem:[#allocation22 + $0xc] sm:$0xf]
        %v1849 = vld [vmem:[#allocation22 + $0x10] sm:$0xf]
        %v1850 = vld [vmem:[#allocation22 + $0x14] sm:$0xf]
        %v1851 = vld [vmem:[#allocation22 + $0x18] sm:$0xf]
        %v1852 = vld [vmem:[#allocation22 + $0x1c] sm:$0xf]
        %v1853 = vld [vmem:[#allocation23] sm:$0x1]
        %v1855 = vlaneseq
        %v1856 = vshrl.u32 %v1855, 7
        %v1857 = vsub.s32 0, %v1856
        %v1858 = vrot.slane %v1853, %v1857
        %v1868 = vunpack.c.l.b16 %v1845
        %v1869 = vunpack.c.l.b16 %v1846
        %v1870 = vunpack.c.l.b16 %v1847
        %v1871 = vunpack.c.l.b16 %v1848
        %v1872 = vunpack.c.l.b16 %v1849
        %v1873 = vunpack.c.l.b16 %v1850
        %v1874 = vunpack.c.l.b16 %v1851
        %v1875 = vunpack.c.l.b16 %v1852
        %v1876 = vpack.c.b16 %v1869, %v1868
        %v1877 = vpack.c.b16 %v1871, %v1870
        %v1878 = vpack.c.b16 %v1873, %v1872
        %v1879 = vpack.c.b16 %v1875, %v1874
        %v1885 = vsel %vm1601, %v1844, 0
        %1887 = vmatprep.subr.bf16.mxu0 0
        %1888 = vmatpush1.bf16.msra.mxu0 %v1876
        %1889 = vmatprep.subr.bf16.mxu0 0
        %1890 = vmatpush1.bf16.msra.mxu0 %v1877
        %1891 = vmatprep.subr.bf16.mxu0 0
        %1892 = vmatpush1.bf16.msra.mxu0 %v1878
        %1893 = vmatprep.subr.bf16.mxu0 0
        %1894 = vmatpush1.bf16.msra.mxu0 %v1879
        %1895 = vmatprep.subr.bf16.mxu0 0
        %1896 = vmatpush1.bf16.msra.mxu0 0
        %1897 = vmatprep.subr.bf16.mxu0 0
        %1898 = vmatpush1.bf16.msra.mxu0 0
        %1899 = vmatprep.subr.bf16.mxu0 0
        %1900 = vmatpush1.bf16.msra.mxu0 0
        %1901 = vmatprep.subr.bf16.mxu0 0
        %1902 = vmatpush1.bf16.msra.mxu0 0
        %1903 = vmatprep.subr.bf16.mxu0 0
        %1904 = vmatpush1.bf16.msra.mxu0 0
        %1905 = vmatprep.subr.bf16.mxu0 0
        %1906 = vmatpush1.bf16.msra.mxu0 0
        %1907 = vmatprep.subr.bf16.mxu0 0
        %1908 = vmatpush1.bf16.msra.mxu0 0
        %1909 = vmatprep.subr.bf16.mxu0 0
        %1910 = vmatpush1.bf16.msra.mxu0 0
        %1911 = vmatprep.subr.bf16.mxu0 0
        %1912 = vmatpush1.bf16.msra.mxu0 0
        %1913 = vmatprep.subr.bf16.mxu0 0
        %1914 = vmatpush1.bf16.msra.mxu0 0
        %1915 = vmatprep.subr.bf16.mxu0 0
        %1916 = vmatpush1.bf16.msra.mxu0 0
        %1917 = vmatprep.subr.bf16.mxu0 0
        %1918 = vmatpush1.bf16.msra.mxu0 0
        %1919 = vmatprep.mubr.bf16.mxu0 0
        %1920 = vmatmul.mubr.bf16.gmra.mrb[0].mxu0 %v1885
        %v1921 = vpop.f32.mrb[0].mxu0
        %v1922 = vadd.f32 %v1858, %v1921
        %v1923 = vpop.f32.mrb[0].mxu0
        %v1924 = vpop.f32.mrb[0].mxu0
        %v1925 = vadd.f32 %v1858, %v1924
        %v1926 = vpop.f32.mrb[0].mxu0
        %1927 = vdwg.mxu0
        %v1928 = vadd.f32 %v1922, %v1764
        %v1929 = vadd.f32 %v1925, %v1765
        %v1930 = vpack.c.bf16 %v848, %v847
        %v1931 = vld [vmem:[#allocation25] sm:$0xf]
        %v1932 = vld [vmem:[#allocation25 + $0x4] sm:$0xf]
        %v1933 = vld [vmem:[#allocation25 + $0x8] sm:$0xf]
        %v1934 = vld [vmem:[#allocation25 + $0xc] sm:$0xf]
        %v1935 = vld [vmem:[#allocation26] sm:$0x1]
        %v1937 = vlaneseq
        %v1938 = vshrl.u32 %v1937, 7
        %v1939 = vsub.s32 0, %v1938
        %v1940 = vrot.slane %v1935, %v1939
        %v1946 = vunpack.c.l.b16 %v1931
        %v1947 = vunpack.c.l.b16 %v1932
        %v1948 = vunpack.c.l.b16 %v1933
        %v1949 = vunpack.c.l.b16 %v1934
        %v1950 = vpack.c.b16 %v1947, %v1946
        %v1951 = vpack.c.b16 %v1949, %v1948
        %v1955 = vsel %vm853, %v1930, 0
        %1957 = vmatprep.subr.bf16.mxu0 0
        %1958 = vmatpush1.bf16.msra.mxu0 %v1950
        %1959 = vmatprep.subr.bf16.mxu0 0
        %1960 = vmatpush1.bf16.msra.mxu0 %v1951
        %1961 = vmatprep.subr.bf16.mxu0 0
        %1962 = vmatpush1.bf16.msra.mxu0 0
        %1963 = vmatprep.subr.bf16.mxu0 0
        %1964 = vmatpush1.bf16.msra.mxu0 0
        %1965 = vmatprep.subr.bf16.mxu0 0
        %1966 = vmatpush1.bf16.msra.mxu0 0
        %1967 = vmatprep.subr.bf16.mxu0 0
        %1968 = vmatpush1.bf16.msra.mxu0 0
        %1969 = vmatprep.subr.bf16.mxu0 0
        %1970 = vmatpush1.bf16.msra.mxu0 0
        %1971 = vmatprep.subr.bf16.mxu0 0
        %1972 = vmatpush1.bf16.msra.mxu0 0
        %1973 = vmatprep.subr.bf16.mxu0 0
        %1974 = vmatpush1.bf16.msra.mxu0 0
        %1975 = vmatprep.subr.bf16.mxu0 0
        %1976 = vmatpush1.bf16.msra.mxu0 0
        %1977 = vmatprep.subr.bf16.mxu0 0
        %1978 = vmatpush1.bf16.msra.mxu0 0
        %1979 = vmatprep.subr.bf16.mxu0 0
        %1980 = vmatpush1.bf16.msra.mxu0 0
        %1981 = vmatprep.subr.bf16.mxu0 0
        %1982 = vmatpush1.bf16.msra.mxu0 0
        %1983 = vmatprep.subr.bf16.mxu0 0
        %1984 = vmatpush1.bf16.msra.mxu0 0
        %1985 = vmatprep.subr.bf16.mxu0 0
        %1986 = vmatpush1.bf16.msra.mxu0 0
        %1987 = vmatprep.subr.bf16.mxu0 0
        %1988 = vmatpush1.bf16.msra.mxu0 0
        %1989 = vmatprep.mubr.bf16.mxu0 0
        %1990 = vmatmul.mubr.bf16.gmra.mrb[0].mxu0 %v1955
        %v1991 = vpop.f32.mrb[0].mxu0
        %v1992 = vadd.f32 %v1940, %v1991
        %v1993 = vpop.f32.mrb[0].mxu0
        %v1994 = vpop.f32.mrb[0].mxu0
        %v1995 = vadd.f32 %v1940, %v1994
        %v1996 = vpop.f32.mrb[0].mxu0
        %1997 = vdwg.mxu0
        %v1998 = vmax.f32 %v1992, 0.0
        %v1999 = vmax.f32 %v1995, 0.0
        %v2000 = vpack.c.bf16 %v1999, %v1998
        %v2001 = vld [vmem:[#allocation28] sm:$0xf]
        %v2002 = vld [vmem:[#allocation28 + $0x4] sm:$0xf]
        %v2003 = vld [vmem:[#allocation28 + $0x8] sm:$0xf]
        %v2004 = vld [vmem:[#allocation28 + $0xc] sm:$0xf]
        %v2005 = vld [vmem:[#allocation28 + $0x10] sm:$0xf]
        %v2006 = vld [vmem:[#allocation28 + $0x14] sm:$0xf]
        %v2007 = vld [vmem:[#allocation28 + $0x18] sm:$0xf]
        %v2008 = vld [vmem:[#allocation28 + $0x1c] sm:$0xf]
        %v2009 = vld [vmem:[#allocation29] sm:$0x1]
        %v2011 = vlaneseq
        %v2012 = vshrl.u32 %v2011, 7
        %v2013 = vsub.s32 0, %v2012
        %v2014 = vrot.slane %v2009, %v2013
        %v2024 = vunpack.c.l.b16 %v2001
        %v2025 = vunpack.c.l.b16 %v2002
        %v2026 = vunpack.c.l.b16 %v2003
        %v2027 = vunpack.c.l.b16 %v2004
        %v2028 = vunpack.c.l.b16 %v2005
        %v2029 = vunpack.c.l.b16 %v2006
        %v2030 = vunpack.c.l.b16 %v2007
        %v2031 = vunpack.c.l.b16 %v2008
        %v2032 = vpack.c.b16 %v2025, %v2024
        %v2033 = vpack.c.b16 %v2027, %v2026
        %v2034 = vpack.c.b16 %v2029, %v2028
        %v2035 = vpack.c.b16 %v2031, %v2030
        %v2041 = vsel %vm1601, %v2000, 0
        %2043 = vmatprep.subr.bf16.mxu0 0
        %2044 = vmatpush1.bf16.msra.mxu0 %v2032
        %2045 = vmatprep.subr.bf16.mxu0 0
        %2046 = vmatpush1.bf16.msra.mxu0 %v2033
        %2047 = vmatprep.subr.bf16.mxu0 0
        %2048 = vmatpush1.bf16.msra.mxu0 %v2034
        %2049 = vmatprep.subr.bf16.mxu0 0
        %2050 = vmatpush1.bf16.msra.mxu0 %v2035
        %2051 = vmatprep.subr.bf16.mxu0 0
        %2052 = vmatpush1.bf16.msra.mxu0 0
        %2053 = vmatprep.subr.bf16.mxu0 0
        %2054 = vmatpush1.bf16.msra.mxu0 0
        %2055 = vmatprep.subr.bf16.mxu0 0
        %2056 = vmatpush1.bf16.msra.mxu0 0
        %2057 = vmatprep.subr.bf16.mxu0 0
        %2058 = vmatpush1.bf16.msra.mxu0 0
        %2059 = vmatprep.subr.bf16.mxu0 0
        %2060 = vmatpush1.bf16.msra.mxu0 0
        %2061 = vmatprep.subr.bf16.mxu0 0
        %2062 = vmatpush1.bf16.msra.mxu0 0
        %2063 = vmatprep.subr.bf16.mxu0 0
        %2064 = vmatpush1.bf16.msra.mxu0 0
        %2065 = vmatprep.subr.bf16.mxu0 0
        %2066 = vmatpush1.bf16.msra.mxu0 0
        %2067 = vmatprep.subr.bf16.mxu0 0
        %2068 = vmatpush1.bf16.msra.mxu0 0
        %2069 = vmatprep.subr.bf16.mxu0 0
        %2070 = vmatpush1.bf16.msra.mxu0 0
        %2071 = vmatprep.subr.bf16.mxu0 0
        %2072 = vmatpush1.bf16.msra.mxu0 0
        %2073 = vmatprep.subr.bf16.mxu0 0
        %2074 = vmatpush1.bf16.msra.mxu0 0
        %2075 = vmatprep.mubr.bf16.mxu0 0
        %2076 = vmatmul.mubr.bf16.gmra.mrb[0].mxu0 %v2041
        %v2077 = vpop.f32.mrb[0].mxu0
        %v2078 = vadd.f32 %v2014, %v2077
        %v2079 = vpop.f32.mrb[0].mxu0
        %v2080 = vpop.f32.mrb[0].mxu0
        %v2081 = vadd.f32 %v2014, %v2080
        %v2082 = vpop.f32.mrb[0].mxu0
        %2083 = vdwg.mxu0
        %v2084 = vadd.f32 %v1928, %v2078
        %v2085 = vadd.f32 %v1929, %v2081
        %2086 = vst.msk [vmem:[%s845] sm:$0xff] %vm853, %v2084
        %2087 = vst.msk [vmem:[%s845 + $0x8] sm:$0x1] %vm857, %v2085
        %s2088 = sand.u32 %s442, 1
        %s2089 = scalar_lea.sflag [#allocation4], %s2088
        %s2090 = sand.u32 %s442, 1
        %s2091 = smul.addr %s2090, 16
        %s2092 = scalar_lea.vmem [#allocation31], %s2091
        // Predicated region
        $region165: #{graph_transformer_forward.5} parent=91 // pred_check
          %p2093 = pneg %p452
        $region166: #{graph_transformer_forward.5} parent=91 // pred_check_branch
          %2095 = sbr.rel (%p2093) target = $region168
        $region167: #{graph_transformer_forward.5} parent=91 // pred_region
          %s2097 = ssub.s32 256, 256
          %2098 = vsyncadd %s2089, %s2097
          %s2099 = smul.addr %s46, 2
          %s2100 = smul.addr %s2099, 128
          %s2101 = scalar_lea.hbm %s18, %s2100
          %s2102 = sshll.u32 %s2092, 4
          %s2103 = int_to_ptr.vmem [resolvable:$true] %s2102
          %2108 = dma.vmem_to_hbm [thread:$0]  %s2103, 256, %s2101, %s2089, 128, 128, 8
        $region168: #{graph_transformer_forward.5} parent=91 // pred_fallthru
          _
      $region92: #{graph_transformer_forward.5} parent=5 // pred_fallthru
        _
      %p2109 = scmp.le.s32.totalorder 2, %s41
      // Predicated region
      $region169: #{graph_transformer_forward.5} parent=5 // pred_check
        %p2110 = pneg %p2109
      $region170: #{graph_transformer_forward.5} parent=5 // pred_check_branch
        %2112 = sbr.rel (%p2110) target = $region172
      $region171: #{graph_transformer_forward.5} parent=5 // pred_region
        %s2113 = ssub.s32 %s41, 2
        // Predicated region
        $region173: #{graph_transformer_forward.5} parent=171 // pred_check
          %p2114 = pneg %p458
        $region174: #{graph_transformer_forward.5} parent=171 // pred_check_branch
          %2116 = sbr.rel (%p2114) target = $region176
        $region175: #{graph_transformer_forward.5} parent=171 // pred_region
          %s2117 = sand.u32 %s443, 1
          %s2118 = scalar_lea.sflag [#allocation4], %s2117
          %s2119 = sand.u32 %s443, 1
          %s2120 = smul.addr %s2119, 16
          %s2121 = scalar_lea.vmem [#allocation31], %s2120
          %2122 = dma.done %s2118, 256
        $region176: #{graph_transformer_forward.5} parent=171 // pred_fallthru
          _
      $region172: #{graph_transformer_forward.5} parent=5 // pred_fallthru
        _
    $region6: #{graph_transformer_forward.5} parent=1 // loop_footer
      %s45 = sadd.s32 1, %s41
    $region7: #{graph_transformer_forward.5} parent=1 // loop_footer_branch
      %40 = sbr.rel target = $region3
    $region8: #{graph_transformer_forward.5} parent=1 // loop_exit
      _
    %2123 = vsyncpa [#allocation3], 1
    %s2124 = scalar_lea.sflag [#allocation3], 1
    %2125 = vsyncpa %s2124, 1
    %2126 = vsyncpa [#allocation6], 1
    %s2127 = scalar_lea.sflag [#allocation6], 1
    %2128 = vsyncpa %s2127, 1
    %2129 = vsyncpa [#allocation9], 1
    %2130 = vsyncpa [#allocation12], 1
    %2131 = vsyncpa [#allocation15], 1
    %2132 = vsyncpa [#allocation18], 1
    %2133 = vsyncpa [#allocation21], 1
    %2134 = vsyncpa [#allocation24], 1
    %2135 = vsyncpa [#allocation27], 1
    %2136 = vsyncpa [#allocation30], 1
    %2137 = vsyncpa [#allocation4], 1
    %s2138 = scalar_lea.sflag [#allocation4], 1
    %2139 = vsyncpa %s2138, 1

// kernel: graph_transformer_forward.7
$region0: #{graph_transformer_forward.7}
  #allocation0 [shape = 'u32[]', space=smem, size = 0x4, offset = 0x4, fixed_abs, tag = 'smem constant byte address 0x4 - core index']
  #allocation1 [shape = 'u32[144,128]{1,0:T(1,128)}', space=vmem, size = 0x12000, scoped, tag = 'internal scratch']
  %s0 = inlined_call_operand.vmem [shape: f32[2,32], index: 0, kind: input, shape index: {}]
  %s1 = inlined_call_operand.vmem [shape: f32[1,32], index: 1, kind: input, shape index: {}]
  %s2 = inlined_call_operand.vmem [shape: f32[1,32], index: 2, kind: input, shape index: {}]
  %s3 = inlined_call_operand.vmem [shape: bf16[32,32], index: 3, kind: input, shape index: {}]
  %s4 = inlined_call_operand.vmem [shape: f32[1,32], index: 4, kind: input, shape index: {}]
  %s5 = inlined_call_operand.vmem [shape: bf16[32,128], index: 5, kind: input, shape index: {}]
  %s6 = inlined_call_operand.vmem [shape: f32[1,128], index: 6, kind: input, shape index: {}]
  %s7 = inlined_call_operand.vmem [shape: bf16[128,128], index: 7, kind: input, shape index: {}]
  %s8 = inlined_call_operand.vmem [shape: f32[1,128], index: 8, kind: input, shape index: {}]
  %s9 = inlined_call_operand.vmem [shape: bf16[128,128], index: 9, kind: input, shape index: {}]
  %s10 = inlined_call_operand.vmem [shape: f32[1,128], index: 10, kind: input, shape index: {}]
  %s11 = inlined_call_operand.vmem [shape: f32[1,128], index: 11, kind: input, shape index: {}]
  %s12 = inlined_call_operand.vmem [shape: f32[1,128], index: 12, kind: input, shape index: {}]
  %s13 = inlined_call_operand.vmem [shape: bf16[128,16], index: 13, kind: input, shape index: {}]
  %s14 = inlined_call_operand.vmem [shape: f32[1,16], index: 14, kind: input, shape index: {}]
  %s15 = inlined_call_operand.hbm [shape: f32[2,32], index: 15, kind: output, shape index: {0}]
  %s16 = inlined_call_operand.hbm [shape: f32[2,16], index: 16, kind: output, shape index: {1}]
  %17 = xla_tuple %s15, %s16
  %s18 = sld [smem:[#allocation0]]
  $region78: #{graph_transformer_forward.7} parent=0
    _
  %s20 = ssub.s32 1, %s18
  %s21 = scalar_select 0, %s20, %s18
  $region1: #{graph_transformer_forward.7} parent=0
    #allocation2 [shape = 'u8[1024]{0}', space=vmem, size = 0x400, scoped, tag = 'output window, operand 0, single buffered']
    #allocation3 [shape = 's32[1]{0}', space=sflag, size = 0x4, scoped, tag = 'scoped memory for graph_transformer_forward.7']
    #allocation4 [shape = 'u8[1024]{0}', space=vmem, size = 0x400, scoped, tag = 'output window, operand 1, single buffered']
    #allocation5 [shape = 's32[1]{0}', space=sflag, size = 0x4, scoped, tag = 'scoped memory for graph_transformer_forward.7']
    %22 = vsyncpa [#allocation3], 0
    %23 = vsyncpa [#allocation5], 0
    // Predicated region
    $region2: #{graph_transformer_forward.7} parent=1 // pred_check
      _
    $region3: #{graph_transformer_forward.7} parent=1 // pred_check_branch
      %25 = sbr.rel (0) target = $region5
    $region4: #{graph_transformer_forward.7} parent=1 // pred_region
      _
    $region5: #{graph_transformer_forward.7} parent=1 // pred_fallthru
      _
    // Predicated region
    $region6: #{graph_transformer_forward.7} parent=1 // pred_check
      _
    $region7: #{graph_transformer_forward.7} parent=1 // pred_check_branch
      %27 = sbr.rel (0) target = $region9
    $region8: #{graph_transformer_forward.7} parent=1 // pred_region
      _
    $region9: #{graph_transformer_forward.7} parent=1 // pred_fallthru
      _
    // Predicated region
    $region10: #{graph_transformer_forward.7} parent=1 // pred_check
      _
    $region11: #{graph_transformer_forward.7} parent=1 // pred_check_branch
      %29 = sbr.rel (0) target = $region13
    $region12: #{graph_transformer_forward.7} parent=1 // pred_region
      _
    $region13: #{graph_transformer_forward.7} parent=1 // pred_fallthru
      _
    // Predicated region
    $region14: #{graph_transformer_forward.7} parent=1 // pred_check
      _
    $region15: #{graph_transformer_forward.7} parent=1 // pred_check_branch
      %31 = sbr.rel (0) target = $region17
    $region16: #{graph_transformer_forward.7} parent=1 // pred_region
      _
    $region17: #{graph_transformer_forward.7} parent=1 // pred_fallthru
      _
    // Predicated region
    $region18: #{graph_transformer_forward.7} parent=1 // pred_check
      _
    $region19: #{graph_transformer_forward.7} parent=1 // pred_check_branch
      %33 = sbr.rel (0) target = $region21
    $region20: #{graph_transformer_forward.7} parent=1 // pred_region
      _
    $region21: #{graph_transformer_forward.7} parent=1 // pred_fallthru
      _
    // Predicated region
    $region22: #{graph_transformer_forward.7} parent=1 // pred_check
      _
    $region23: #{graph_transformer_forward.7} parent=1 // pred_check_branch
      %35 = sbr.rel (0) target = $region25
    $region24: #{graph_transformer_forward.7} parent=1 // pred_region
      _
    $region25: #{graph_transformer_forward.7} parent=1 // pred_fallthru
      _
    // Predicated region
    $region26: #{graph_transformer_forward.7} parent=1 // pred_check
      _
    $region27: #{graph_transformer_forward.7} parent=1 // pred_check_branch
      %37 = sbr.rel (0) target = $region29
    $region28: #{graph_transformer_forward.7} parent=1 // pred_region
      _
    $region29: #{graph_transformer_forward.7} parent=1 // pred_fallthru
      _
    // Predicated region
    $region30: #{graph_transformer_forward.7} parent=1 // pred_check
      _
    $region31: #{graph_transformer_forward.7} parent=1 // pred_check_branch
      %39 = sbr.rel (0) target = $region33
    $region32: #{graph_transformer_forward.7} parent=1 // pred_region
      _
    $region33: #{graph_transformer_forward.7} parent=1 // pred_fallthru
      _
    // Predicated region
    $region34: #{graph_transformer_forward.7} parent=1 // pred_check
      _
    $region35: #{graph_transformer_forward.7} parent=1 // pred_check_branch
      %41 = sbr.rel (0) target = $region37
    $region36: #{graph_transformer_forward.7} parent=1 // pred_region
      _
    $region37: #{graph_transformer_forward.7} parent=1 // pred_fallthru
      _
    // Predicated region
    $region38: #{graph_transformer_forward.7} parent=1 // pred_check
      _
    $region39: #{graph_transformer_forward.7} parent=1 // pred_check_branch
      %43 = sbr.rel (0) target = $region41
    $region40: #{graph_transformer_forward.7} parent=1 // pred_region
      _
    $region41: #{graph_transformer_forward.7} parent=1 // pred_fallthru
      _
    // Predicated region
    $region42: #{graph_transformer_forward.7} parent=1 // pred_check
      _
    $region43: #{graph_transformer_forward.7} parent=1 // pred_check_branch
      %45 = sbr.rel (0) target = $region45
    $region44: #{graph_transformer_forward.7} parent=1 // pred_region
      _
    $region45: #{graph_transformer_forward.7} parent=1 // pred_fallthru
      _
    // Predicated region
    $region46: #{graph_transformer_forward.7} parent=1 // pred_check
      _
    $region47: #{graph_transformer_forward.7} parent=1 // pred_check_branch
      %47 = sbr.rel (0) target = $region49
    $region48: #{graph_transformer_forward.7} parent=1 // pred_region
      _
    $region49: #{graph_transformer_forward.7} parent=1 // pred_fallthru
      _
    // Predicated region
    $region50: #{graph_transformer_forward.7} parent=1 // pred_check
      _
    $region51: #{graph_transformer_forward.7} parent=1 // pred_check_branch
      %49 = sbr.rel (0) target = $region53
    $region52: #{graph_transformer_forward.7} parent=1 // pred_region
      _
    $region53: #{graph_transformer_forward.7} parent=1 // pred_fallthru
      _
    // Predicated region
    $region54: #{graph_transformer_forward.7} parent=1 // pred_check
      _
    $region55: #{graph_transformer_forward.7} parent=1 // pred_check_branch
      %51 = sbr.rel (0) target = $region57
    $region56: #{graph_transformer_forward.7} parent=1 // pred_region
      _
    $region57: #{graph_transformer_forward.7} parent=1 // pred_fallthru
      _
    // Predicated region
    $region58: #{graph_transformer_forward.7} parent=1 // pred_check
      _
    $region59: #{graph_transformer_forward.7} parent=1 // pred_check_branch
      %53 = sbr.rel (0) target = $region61
    $region60: #{graph_transformer_forward.7} parent=1 // pred_region
      _
    $region61: #{graph_transformer_forward.7} parent=1 // pred_fallthru
      _
    %v55 = vld [vmem:[%s0] sm:$0x3]
    %v56 = vld [vmem:[%s1] sm:$0x1]
    %v57 = vld [vmem:[%s2] sm:$0x1]
    %vm58 = vcmask 254976
    %v59 = vsel %vm58, %v55, 0.0
    %60 = vadd.xlane.f32.xlu0 %v59
    %v61 = vpop.xlane.xlu0 %60
    %v62 = vrcp.pop 32.0
    %v63 = vmul.f32 %v61, %v62
    %v64 = vsub.f32 %v55, %v63
    %v65 = vmul.f32 %v64, %v64
    %v66 = vsel %vm58, %v65, 0.0
    %67 = vadd.xlane.f32.xlu0 %v66
    %v68 = vpop.xlane.xlu0 %67
    %v69 = vmul.f32 %v68, %v62
    %v70 = vadd.f32 %v69, 1e-05
    %v71 = vrsqrt.pop %v70
    %v72 = vmul.f32 %v64, %v71
    %v74 = vlaneseq
    %v75 = vshrl.u32 %v74, 7
    %v76 = vsub.s32 0, %v75
    %v77 = vrot.slane %v56, %v76
    %v79 = vmul.f32 %v72, %v77
    %v81 = vlaneseq
    %v82 = vshrl.u32 %v81, 7
    %v83 = vsub.s32 0, %v82
    %v84 = vrot.slane %v57, %v83
    %v86 = vadd.f32 %v79, %v84
    %v87 = vpack.c.bf16 %v86, %v86
    %v88 = vld [vmem:[%s3] sm:$0xf]
    %v89 = vld [vmem:[%s3 + $0x4] sm:$0xf]
    %v90 = vld [vmem:[%s3 + $0x8] sm:$0xf]
    %v91 = vld [vmem:[%s3 + $0xc] sm:$0xf]
    %v92 = vld [vmem:[%s4] sm:$0x1]
    %v94 = vlaneseq
    %v95 = vshrl.u32 %v94, 7
    %v96 = vsub.s32 0, %v95
    %v97 = vrot.slane %v92, %v96
    %v103 = vunpack.c.l.b16 %v88
    %v104 = vunpack.c.l.b16 %v89
    %v105 = vunpack.c.l.b16 %v90
    %v106 = vunpack.c.l.b16 %v91
    %v107 = vpack.c.b16 %v104, %v103
    %v108 = vpack.c.b16 %v106, %v105
    %vm111 = vcmask 261120
    %v113 = vsel %vm111, %v87, 0
    %115 = vmatprep.subr.bf16.mxu0 0
    %116 = vmatpush1.bf16.msra.mxu0 %v107
    %117 = vmatprep.subr.bf16.mxu0 0
    %118 = vmatpush1.bf16.msra.mxu0 %v108
    %119 = vmatprep.subr.bf16.mxu0 0
    %120 = vmatpush1.bf16.msra.mxu0 0
    %121 = vmatprep.subr.bf16.mxu0 0
    %122 = vmatpush1.bf16.msra.mxu0 0
    %123 = vmatprep.subr.bf16.mxu0 0
    %124 = vmatpush1.bf16.msra.mxu0 0
    %125 = vmatprep.subr.bf16.mxu0 0
    %126 = vmatpush1.bf16.msra.mxu0 0
    %127 = vmatprep.subr.bf16.mxu0 0
    %128 = vmatpush1.bf16.msra.mxu0 0
    %129 = vmatprep.subr.bf16.mxu0 0
    %130 = vmatpush1.bf16.msra.mxu0 0
    %131 = vmatprep.subr.bf16.mxu0 0
    %132 = vmatpush1.bf16.msra.mxu0 0
    %133 = vmatprep.subr.bf16.mxu0 0
    %134 = vmatpush1.bf16.msra.mxu0 0
    %135 = vmatprep.subr.bf16.mxu0 0
    %136 = vmatpush1.bf16.msra.mxu0 0
    %137 = vmatprep.subr.bf16.mxu0 0
    %138 = vmatpush1.bf16.msra.mxu0 0
    %139 = vmatprep.subr.bf16.mxu0 0
    %140 = vmatpush1.bf16.msra.mxu0 0
    %141 = vmatprep.subr.bf16.mxu0 0
    %142 = vmatpush1.bf16.msra.mxu0 0
    %143 = vmatprep.subr.bf16.mxu0 0
    %144 = vmatpush1.bf16.msra.mxu0 0
    %145 = vmatprep.subr.bf16.mxu0 0
    %146 = vmatpush1.bf16.msra.mxu0 0
    %147 = vmatprep.mubr.bf16.mxu0 0
    %148 = vmatmul.mubr.bf16.gmra.mrb[0].mxu0 %v113
    %v149 = vpop.f32.mrb[0].mxu0
    %v150 = vadd.f32 %v97, %v149
    %v151 = vpop.f32.mrb[0].mxu0
    %v152 = vpop.f32.mrb[0].mxu0
    %v153 = vpop.f32.mrb[0].mxu0
    %154 = vdwg.mxu0
    %155 = vst.msk [vmem:[#allocation2] sm:$0x3] %vm58, %v150
    %v156 = vpack.c.bf16 %v150, %v150
    %v157 = vld [vmem:[%s5] sm:$0xf]
    %v158 = vld [vmem:[%s5 + $0x4] sm:$0xf]
    %v159 = vld [vmem:[%s5 + $0x8] sm:$0xf]
    %v160 = vld [vmem:[%s5 + $0xc] sm:$0xf]
    %v161 = vld [vmem:[%s6] sm:$0x1]
    %v163 = vlaneseq
    %v164 = vshrl.u32 %v163, 7
    %v165 = vsub.s32 0, %v164
    %v166 = vrot.slane %v161, %v165
    %v172 = vunpack.c.l.b16 %v157
    %v173 = vunpack.c.l.b16 %v158
    %v174 = vunpack.c.l.b16 %v159
    %v175 = vunpack.c.l.b16 %v160
    %v176 = vpack.c.b16 %v173, %v172
    %v177 = vpack.c.b16 %v175, %v174
    %v181 = vsel %vm111, %v156, 0
    %183 = vmatprep.subr.bf16.mxu0 0
    %184 = vmatpush1.bf16.msra.mxu0 %v176
    %185 = vmatprep.subr.bf16.mxu0 0
    %186 = vmatpush1.bf16.msra.mxu0 %v177
    %187 = vmatprep.subr.bf16.mxu0 0
    %188 = vmatpush1.bf16.msra.mxu0 0
    %189 = vmatprep.subr.bf16.mxu0 0
    %190 = vmatpush1.bf16.msra.mxu0 0
    %191 = vmatprep.subr.bf16.mxu0 0
    %192 = vmatpush1.bf16.msra.mxu0 0
    %193 = vmatprep.subr.bf16.mxu0 0
    %194 = vmatpush1.bf16.msra.mxu0 0
    %195 = vmatprep.subr.bf16.mxu0 0
    %196 = vmatpush1.bf16.msra.mxu0 0
    %197 = vmatprep.subr.bf16.mxu0 0
    %198 = vmatpush1.bf16.msra.mxu0 0
    %199 = vmatprep.subr.bf16.mxu0 0
    %200 = vmatpush1.bf16.msra.mxu0 0
    %201 = vmatprep.subr.bf16.mxu0 0
    %202 = vmatpush1.bf16.msra.mxu0 0
    %203 = vmatprep.subr.bf16.mxu0 0
    %204 = vmatpush1.bf16.msra.mxu0 0
    %205 = vmatprep.subr.bf16.mxu0 0
    %206 = vmatpush1.bf16.msra.mxu0 0
    %207 = vmatprep.subr.bf16.mxu0 0
    %208 = vmatpush1.bf16.msra.mxu0 0
    %209 = vmatprep.subr.bf16.mxu0 0
    %210 = vmatpush1.bf16.msra.mxu0 0
    %211 = vmatprep.subr.bf16.mxu0 0
    %212 = vmatpush1.bf16.msra.mxu0 0
    %213 = vmatprep.subr.bf16.mxu0 0
    %214 = vmatpush1.bf16.msra.mxu0 0
    %215 = vmatprep.mubr.bf16.mxu0 0
    %216 = vmatmul.mubr.bf16.gmra.mrb[0].mxu0 %v181
    %v217 = vpop.f32.mrb[0].mxu0
    %v218 = vadd.f32 %v166, %v217
    %v219 = vpop.f32.mrb[0].mxu0
    %v220 = vpop.f32.mrb[0].mxu0
    %v221 = vpop.f32.mrb[0].mxu0
    %222 = vdwg.mxu0
    %v223 = vmul.f32 %v218, 0.5
    %v224 = vmul.f32 %v218, 0.70710677
    %v225 = verf.f32.pop %v224
    %v226 = vadd.f32 %v225, 1.0
    %v227 = vmul.f32 %v223, %v226
    %v228 = vpack.c.bf16 %v227, %v227
    %v229 = vld [vmem:[%s7] sm:$0xf]
    %v230 = vld [vmem:[%s7 + $0x4] sm:$0xf]
    %v231 = vld [vmem:[%s7 + $0x8] sm:$0xf]
    %v232 = vld [vmem:[%s7 + $0xc] sm:$0xf]
    %v233 = vld [vmem:[%s7 + $0x10] sm:$0xf]
    %v234 = vld [vmem:[%s7 + $0x14] sm:$0xf]
    %v235 = vld [vmem:[%s7 + $0x18] sm:$0xf]
    %v236 = vld [vmem:[%s7 + $0x1c] sm:$0xf]
    %v237 = vld [vmem:[%s7 + $0x20] sm:$0xf]
    %v238 = vld [vmem:[%s7 + $0x24] sm:$0xf]
    %v239 = vld [vmem:[%s7 + $0x28] sm:$0xf]
    %v240 = vld [vmem:[%s7 + $0x2c] sm:$0xf]
    %v241 = vld [vmem:[%s7 + $0x30] sm:$0xf]
    %v242 = vld [vmem:[%s7 + $0x34] sm:$0xf]
    %v243 = vld [vmem:[%s7 + $0x38] sm:$0xf]
    %v244 = vld [vmem:[%s7 + $0x3c] sm:$0xf]
    %v245 = vld [vmem:[%s8] sm:$0x1]
    %v247 = vlaneseq
    %v248 = vshrl.u32 %v247, 7
    %v249 = vsub.s32 0, %v248
    %v250 = vrot.slane %v245, %v249
    %v268 = vunpack.c.l.b16 %v229
    %v269 = vunpack.c.l.b16 %v230
    %v270 = vunpack.c.l.b16 %v231
    %v271 = vunpack.c.l.b16 %v232
    %v272 = vunpack.c.l.b16 %v233
    %v273 = vunpack.c.l.b16 %v234
    %v274 = vunpack.c.l.b16 %v235
    %v275 = vunpack.c.l.b16 %v236
    %v276 = vunpack.c.l.b16 %v237
    %v277 = vunpack.c.l.b16 %v238
    %v278 = vunpack.c.l.b16 %v239
    %v279 = vunpack.c.l.b16 %v240
    %v280 = vunpack.c.l.b16 %v241
    %v281 = vunpack.c.l.b16 %v242
    %v282 = vunpack.c.l.b16 %v243
    %v283 = vunpack.c.l.b16 %v244
    %v284 = vpack.c.b16 %v269, %v268
    %v285 = vpack.c.b16 %v271, %v270
    %v286 = vpack.c.b16 %v273, %v272
    %v287 = vpack.c.b16 %v275, %v274
    %v288 = vpack.c.b16 %v277, %v276
    %v289 = vpack.c.b16 %v279, %v278
    %v290 = vpack.c.b16 %v281, %v280
    %v291 = vpack.c.b16 %v283, %v282
    %300 = vmatprep.subr.bf16.mxu0 0
    %301 = vmatpush1.bf16.msra.mxu0 %v284
    %302 = vmatprep.subr.bf16.mxu0 0
    %303 = vmatpush1.bf16.msra.mxu0 %v285
    %304 = vmatprep.subr.bf16.mxu0 0
    %305 = vmatpush1.bf16.msra.mxu0 %v286
    %306 = vmatprep.subr.bf16.mxu0 0
    %307 = vmatpush1.bf16.msra.mxu0 %v287
    %308 = vmatprep.subr.bf16.mxu0 0
    %309 = vmatpush1.bf16.msra.mxu0 %v288
    %310 = vmatprep.subr.bf16.mxu0 0
    %311 = vmatpush1.bf16.msra.mxu0 %v289
    %312 = vmatprep.subr.bf16.mxu0 0
    %313 = vmatpush1.bf16.msra.mxu0 %v290
    %314 = vmatprep.subr.bf16.mxu0 0
    %315 = vmatpush1.bf16.msra.mxu0 %v291
    %316 = vmatprep.subr.bf16.mxu0 0
    %317 = vmatpush1.bf16.msra.mxu0 0
    %318 = vmatprep.subr.bf16.mxu0 0
    %319 = vmatpush1.bf16.msra.mxu0 0
    %320 = vmatprep.subr.bf16.mxu0 0
    %321 = vmatpush1.bf16.msra.mxu0 0
    %322 = vmatprep.subr.bf16.mxu0 0
    %323 = vmatpush1.bf16.msra.mxu0 0
    %324 = vmatprep.subr.bf16.mxu0 0
    %325 = vmatpush1.bf16.msra.mxu0 0
    %326 = vmatprep.subr.bf16.mxu0 0
    %327 = vmatpush1.bf16.msra.mxu0 0
    %328 = vmatprep.subr.bf16.mxu0 0
    %329 = vmatpush1.bf16.msra.mxu0 0
    %330 = vmatprep.subr.bf16.mxu0 0
    %331 = vmatpush1.bf16.msra.mxu0 0
    %332 = vmatprep.mubr.bf16.mxu0 0
    %333 = vmatmul.mubr.bf16.gmra.mrb[0].mxu0 %v228
    %v334 = vpop.f32.mrb[0].mxu0
    %v335 = vadd.f32 %v250, %v334
    %v336 = vpop.f32.mrb[0].mxu0
    %v337 = vpop.f32.mrb[0].mxu0
    %v338 = vpop.f32.mrb[0].mxu0
    %339 = vdwg.mxu0
    %v340 = vmul.f32 %v335, 0.5
    %v341 = vmul.f32 %v335, 0.70710677
    %v342 = verf.f32.pop %v341
    %v343 = vadd.f32 %v342, 1.0
    %v344 = vmul.f32 %v340, %v343
    %v345 = vpack.c.bf16 %v344, %v344
    %v346 = vld [vmem:[%s9] sm:$0xf]
    %v347 = vld [vmem:[%s9 + $0x4] sm:$0xf]
    %v348 = vld [vmem:[%s9 + $0x8] sm:$0xf]
    %v349 = vld [vmem:[%s9 + $0xc] sm:$0xf]
    %v350 = vld [vmem:[%s9 + $0x10] sm:$0xf]
    %v351 = vld [vmem:[%s9 + $0x14] sm:$0xf]
    %v352 = vld [vmem:[%s9 + $0x18] sm:$0xf]
    %v353 = vld [vmem:[%s9 + $0x1c] sm:$0xf]
    %v354 = vld [vmem:[%s9 + $0x20] sm:$0xf]
    %v355 = vld [vmem:[%s9 + $0x24] sm:$0xf]
    %v356 = vld [vmem:[%s9 + $0x28] sm:$0xf]
    %v357 = vld [vmem:[%s9 + $0x2c] sm:$0xf]
    %v358 = vld [vmem:[%s9 + $0x30] sm:$0xf]
    %v359 = vld [vmem:[%s9 + $0x34] sm:$0xf]
    %v360 = vld [vmem:[%s9 + $0x38] sm:$0xf]
    %v361 = vld [vmem:[%s9 + $0x3c] sm:$0xf]
    %v362 = vld [vmem:[%s10] sm:$0x1]
    %v364 = vlaneseq
    %v365 = vshrl.u32 %v364, 7
    %v366 = vsub.s32 0, %v365
    %v367 = vrot.slane %v362, %v366
    %v385 = vunpack.c.l.b16 %v346
    %v386 = vunpack.c.l.b16 %v347
    %v387 = vunpack.c.l.b16 %v348
    %v388 = vunpack.c.l.b16 %v349
    %v389 = vunpack.c.l.b16 %v350
    %v390 = vunpack.c.l.b16 %v351
    %v391 = vunpack.c.l.b16 %v352
    %v392 = vunpack.c.l.b16 %v353
    %v393 = vunpack.c.l.b16 %v354
    %v394 = vunpack.c.l.b16 %v355
    %v395 = vunpack.c.l.b16 %v356
    %v396 = vunpack.c.l.b16 %v357
    %v397 = vunpack.c.l.b16 %v358
    %v398 = vunpack.c.l.b16 %v359
    %v399 = vunpack.c.l.b16 %v360
    %v400 = vunpack.c.l.b16 %v361
    %v401 = vpack.c.b16 %v386, %v385
    %v402 = vpack.c.b16 %v388, %v387
    %v403 = vpack.c.b16 %v390, %v389
    %v404 = vpack.c.b16 %v392, %v391
    %v405 = vpack.c.b16 %v394, %v393
    %v406 = vpack.c.b16 %v396, %v395
    %v407 = vpack.c.b16 %v398, %v397
    %v408 = vpack.c.b16 %v400, %v399
    %417 = vmatprep.subr.bf16.mxu0 0
    %418 = vmatpush1.bf16.msra.mxu0 %v401
    %419 = vmatprep.subr.bf16.mxu0 0
    %420 = vmatpush1.bf16.msra.mxu0 %v402
    %421 = vmatprep.subr.bf16.mxu0 0
    %422 = vmatpush1.bf16.msra.mxu0 %v403
    %423 = vmatprep.subr.bf16.mxu0 0
    %424 = vmatpush1.bf16.msra.mxu0 %v404
    %425 = vmatprep.subr.bf16.mxu0 0
    %426 = vmatpush1.bf16.msra.mxu0 %v405
    %427 = vmatprep.subr.bf16.mxu0 0
    %428 = vmatpush1.bf16.msra.mxu0 %v406
    %429 = vmatprep.subr.bf16.mxu0 0
    %430 = vmatpush1.bf16.msra.mxu0 %v407
    %431 = vmatprep.subr.bf16.mxu0 0
    %432 = vmatpush1.bf16.msra.mxu0 %v408
    %433 = vmatprep.subr.bf16.mxu0 0
    %434 = vmatpush1.bf16.msra.mxu0 0
    %435 = vmatprep.subr.bf16.mxu0 0
    %436 = vmatpush1.bf16.msra.mxu0 0
    %437 = vmatprep.subr.bf16.mxu0 0
    %438 = vmatpush1.bf16.msra.mxu0 0
    %439 = vmatprep.subr.bf16.mxu0 0
    %440 = vmatpush1.bf16.msra.mxu0 0
    %441 = vmatprep.subr.bf16.mxu0 0
    %442 = vmatpush1.bf16.msra.mxu0 0
    %443 = vmatprep.subr.bf16.mxu0 0
    %444 = vmatpush1.bf16.msra.mxu0 0
    %445 = vmatprep.subr.bf16.mxu0 0
    %446 = vmatpush1.bf16.msra.mxu0 0
    %447 = vmatprep.subr.bf16.mxu0 0
    %448 = vmatpush1.bf16.msra.mxu0 0
    %449 = vmatprep.mubr.bf16.mxu0 0
    %450 = vmatmul.mubr.bf16.gmra.mrb[0].mxu0 %v345
    %v451 = vpop.f32.mrb[0].mxu0
    %v452 = vadd.f32 %v367, %v451
    %v453 = vpop.f32.mrb[0].mxu0
    %v454 = vpop.f32.mrb[0].mxu0
    %v455 = vpop.f32.mrb[0].mxu0
    %456 = vdwg.mxu0
    %v457 = vmul.f32 %v452, 0.5
    %v458 = vmul.f32 %v452, 0.70710677
    %v459 = verf.f32.pop %v458
    %v460 = vadd.f32 %v459, 1.0
    %v461 = vmul.f32 %v457, %v460
    %v462 = vld [vmem:[%s11] sm:$0x1]
    %v463 = vld [vmem:[%s12] sm:$0x1]
    %vm464 = vcmask 1041408
    %v465 = vsel %vm464, %v461, 0.0
    %466 = vadd.xlane.f32.xlu0 %v465
    %v467 = vpop.xlane.xlu0 %466
    %v468 = vrcp.pop 128.0
    %v469 = vmul.f32 %v467, %v468
    %v470 = vsub.f32 %v461, %v469
    %v471 = vmul.f32 %v470, %v470
    %v472 = vsel %vm464, %v471, 0.0
    %473 = vadd.xlane.f32.xlu0 %v472
    %v474 = vpop.xlane.xlu0 %473
    %v475 = vmul.f32 %v474, %v468
    %v476 = vadd.f32 %v475, 1e-05
    %v477 = vrsqrt.pop %v476
    %v478 = vmul.f32 %v470, %v477
    %v480 = vlaneseq
    %v481 = vshrl.u32 %v480, 7
    %v482 = vsub.s32 0, %v481
    %v483 = vrot.slane %v462, %v482
    %v485 = vmul.f32 %v478, %v483
    %v487 = vlaneseq
    %v488 = vshrl.u32 %v487, 7
    %v489 = vsub.s32 0, %v488
    %v490 = vrot.slane %v463, %v489
    %v492 = vadd.f32 %v485, %v490
    %v493 = vpack.c.bf16 %v492, %v492
    %v494 = vld [vmem:[%s13] sm:$0xf]
    %v495 = vld [vmem:[%s13 + $0x4] sm:$0xf]
    %v496 = vld [vmem:[%s13 + $0x8] sm:$0xf]
    %v497 = vld [vmem:[%s13 + $0xc] sm:$0xf]
    %v498 = vld [vmem:[%s13 + $0x10] sm:$0xf]
    %v499 = vld [vmem:[%s13 + $0x14] sm:$0xf]
    %v500 = vld [vmem:[%s13 + $0x18] sm:$0xf]
    %v501 = vld [vmem:[%s13 + $0x1c] sm:$0xf]
    %v502 = vld [vmem:[%s13 + $0x20] sm:$0xf]
    %v503 = vld [vmem:[%s13 + $0x24] sm:$0xf]
    %v504 = vld [vmem:[%s13 + $0x28] sm:$0xf]
    %v505 = vld [vmem:[%s13 + $0x2c] sm:$0xf]
    %v506 = vld [vmem:[%s13 + $0x30] sm:$0xf]
    %v507 = vld [vmem:[%s13 + $0x34] sm:$0xf]
    %v508 = vld [vmem:[%s13 + $0x38] sm:$0xf]
    %v509 = vld [vmem:[%s13 + $0x3c] sm:$0xf]
    %v510 = vld [vmem:[%s14] sm:$0x1]
    %v512 = vlaneseq
    %v513 = vshrl.u32 %v512, 7
    %v514 = vsub.s32 0, %v513
    %v515 = vrot.slane %v510, %v514
    %v533 = vunpack.c.l.b16 %v494
    %v534 = vunpack.c.l.b16 %v495
    %v535 = vunpack.c.l.b16 %v496
    %v536 = vunpack.c.l.b16 %v497
    %v537 = vunpack.c.l.b16 %v498
    %v538 = vunpack.c.l.b16 %v499
    %v539 = vunpack.c.l.b16 %v500
    %v540 = vunpack.c.l.b16 %v501
    %v541 = vunpack.c.l.b16 %v502
    %v542 = vunpack.c.l.b16 %v503
    %v543 = vunpack.c.l.b16 %v504
    %v544 = vunpack.c.l.b16 %v505
    %v545 = vunpack.c.l.b16 %v506
    %v546 = vunpack.c.l.b16 %v507
    %v547 = vunpack.c.l.b16 %v508
    %v548 = vunpack.c.l.b16 %v509
    %v549 = vpack.c.b16 %v534, %v533
    %v550 = vpack.c.b16 %v536, %v535
    %v551 = vpack.c.b16 %v538, %v537
    %v552 = vpack.c.b16 %v540, %v539
    %v553 = vpack.c.b16 %v542, %v541
    %v554 = vpack.c.b16 %v544, %v543
    %v555 = vpack.c.b16 %v546, %v545
    %v556 = vpack.c.b16 %v548, %v547
    %565 = vmatprep.subr.bf16.mxu0 0
    %566 = vmatpush1.bf16.msra.mxu0 %v549
    %567 = vmatprep.subr.bf16.mxu0 0
    %568 = vmatpush1.bf16.msra.mxu0 %v550
    %569 = vmatprep.subr.bf16.mxu0 0
    %570 = vmatpush1.bf16.msra.mxu0 %v551
    %571 = vmatprep.subr.bf16.mxu0 0
    %572 = vmatpush1.bf16.msra.mxu0 %v552
    %573 = vmatprep.subr.bf16.mxu0 0
    %574 = vmatpush1.bf16.msra.mxu0 %v553
    %575 = vmatprep.subr.bf16.mxu0 0
    %576 = vmatpush1.bf16.msra.mxu0 %v554
    %577 = vmatprep.subr.bf16.mxu0 0
    %578 = vmatpush1.bf16.msra.mxu0 %v555
    %579 = vmatprep.subr.bf16.mxu0 0
    %580 = vmatpush1.bf16.msra.mxu0 %v556
    %581 = vmatprep.subr.bf16.mxu0 0
    %582 = vmatpush1.bf16.msra.mxu0 0
    %583 = vmatprep.subr.bf16.mxu0 0
    %584 = vmatpush1.bf16.msra.mxu0 0
    %585 = vmatprep.subr.bf16.mxu0 0
    %586 = vmatpush1.bf16.msra.mxu0 0
    %587 = vmatprep.subr.bf16.mxu0 0
    %588 = vmatpush1.bf16.msra.mxu0 0
    %589 = vmatprep.subr.bf16.mxu0 0
    %590 = vmatpush1.bf16.msra.mxu0 0
    %591 = vmatprep.subr.bf16.mxu0 0
    %592 = vmatpush1.bf16.msra.mxu0 0
    %593 = vmatprep.subr.bf16.mxu0 0
    %594 = vmatpush1.bf16.msra.mxu0 0
    %595 = vmatprep.subr.bf16.mxu0 0
    %596 = vmatpush1.bf16.msra.mxu0 0
    %597 = vmatprep.mubr.bf16.mxu0 0
    %598 = vmatmul.mubr.bf16.gmra.mrb[0].mxu0 %v493
    %v599 = vpop.f32.mrb[0].mxu0
    %v600 = vadd.f32 %v515, %v599
    %v601 = vpop.f32.mrb[0].mxu0
    %v602 = vpop.f32.mrb[0].mxu0
    %v603 = vpop.f32.mrb[0].mxu0
    %604 = vdwg.mxu0
    %vm605 = vcmask 123904
    %606 = vst.msk [vmem:[#allocation4] sm:$0x3] %vm605, %v600
    // Predicated region
    $region62: #{graph_transformer_forward.7} parent=1 // pred_check
      _
    $region63: #{graph_transformer_forward.7} parent=1 // pred_check_branch
      %608 = sbr.rel (0) target = $region65
    $region64: #{graph_transformer_forward.7} parent=1 // pred_region
      %s610 = ssub.s32 32, 32
      %611 = vsyncadd [#allocation3], %s610
      %s613 = sshll.u32 [#allocation2], 4
      %s614 = int_to_ptr.vmem [resolvable:$true] %s613
      %616 = dma.vmem_to_hbm [thread:$0]  %s614, 32, %s15, [#allocation3]
    $region65: #{graph_transformer_forward.7} parent=1 // pred_fallthru
      _
    // Predicated region
    $region66: #{graph_transformer_forward.7} parent=1 // pred_check
      _
    $region67: #{graph_transformer_forward.7} parent=1 // pred_check_branch
      %618 = sbr.rel (0) target = $region69
    $region68: #{graph_transformer_forward.7} parent=1 // pred_region
      %s620 = ssub.s32 32, 32
      %621 = vsyncadd [#allocation5], %s620
      %s623 = sshll.u32 [#allocation4], 4
      %s624 = int_to_ptr.vmem [resolvable:$true] %s623
      %626 = dma.vmem_to_hbm [thread:$0]  %s624, 32, %s16, [#allocation5]
    $region69: #{graph_transformer_forward.7} parent=1 // pred_fallthru
      _
    // Predicated region
    $region70: #{graph_transformer_forward.7} parent=1 // pred_check
      _
    $region71: #{graph_transformer_forward.7} parent=1 // pred_check_branch
      %628 = sbr.rel (0) target = $region73
    $region72: #{graph_transformer_forward.7} parent=1 // pred_region
      %629 = dma.done [#allocation3], 32
    $region73: #{graph_transformer_forward.7} parent=1 // pred_fallthru
      _
    // Predicated region
    $region74: #{graph_transformer_forward.7} parent=1 // pred_check
      _
    $region75: #{graph_transformer_forward.7} parent=1 // pred_check_branch
      %631 = sbr.rel (0) target = $region77
    $region76: #{graph_transformer_forward.7} parent=1 // pred_region
      %632 = dma.done [#allocation5], 32
    $region77: #{graph_transformer_forward.7} parent=1 // pred_fallthru
      _
    %633 = vsyncpa [#allocation3], 1
    %634 = vsyncpa [#allocation5], 1

</llo_original>
